<compile_context>
chip_gen: v7x
topology: tpu7x:2x2x1
jax: 0.10.0
libtpu: 0.0.40
codegen_flags: <defaults>
</compile_context>

<pallas_src>
import jax
import jax.numpy as jnp
from jax.experimental import pallas as pl
from jax.experimental.pallas import tpu as pltpu

EPS = 1e-3
K = 5     # kernel size
S = 2     # stride
P = 2     # padding
LANE = 128


def dwconv_stats_kernel(xs_ref, w_ref, y_ref, stats_ref):
    """Depthwise 5x5 stride-2 conv for one block of output rows + partial BN stats.

    xs_ref:    (2, 2, Hp2, Wp2, CP)  phase-split padded input (channels-last), resident
    w_ref:     (32, CP)              rows 0..24 = taps (row t = kh*K + kw), rest zero
    y_ref:     (OHT, OW, CP)         raw conv output for this row block
    stats_ref: (1, 2, CP)            row 0 = sum, row 1 = sum of squares (this block)
    """
    OHT, OW, CP = y_ref.shape
    i = pl.program_id(0)
    row0 = i * OHT

    # Zero-cost Ref views of the 4 space-to-depth phases (no data loaded here).
    views = [[xs_ref.at[ph, pw] for pw in range(2)] for ph in range(2)]

    acc = jnp.zeros((OHT, OW, CP), jnp.float32)
    for kh in range(K):
        ph, hd = kh % 2, kh // 2
        for kw in range(K):
            pw, wd = kw % 2, kw // 2
            # Per-tap window loaded straight from VMEM (contiguous slice).
            tap = views[ph][pw][pl.ds(row0 + hd, OHT), pl.ds(wd, OW), :]
            t = kh * K + kw
            acc = acc + tap * w_ref[t:t + 1, :]          # (1, CP) broadcast

    # Raw conv result straight to the output block; BN stats for this block only.
    y_ref[...] = acc
    stats_ref[:, 0:1, :] = jnp.sum(acc, axis=(0, 1), keepdims=True)
    stats_ref[:, 1:2, :] = jnp.sum(acc * acc, axis=(0, 1), keepdims=True)


def bn_relu_kernel(y_ref, sb_ref, o_ref):
    """In-place normalize + ReLU:  o = max(y * scale + bias, 0)."""
    scale = sb_ref[0:1, :]                               # (1, CP)
    bias = sb_ref[1:2, :]                                # (1, CP)
    o_ref[...] = jnp.maximum(y_ref[...] * scale + bias, 0.0)


@jax.jit
def forward(x_nchw, w_oihw, gamma, beta):
    """x_nchw: (1, C, H, W) f32, w_oihw: (C, 1, K, K). Returns (1, C, OH, OW)."""
    N, C, H, W = x_nchw.shape
    assert N == 1, "BatchNorm batch-stat reduction implemented for N=1 (matches module input)"
    OH = (H + 2 * P - K) // S + 1
    OW = (W + 2 * P - K) // S + 1
    CP = pl.cdiv(C, LANE) * LANE                         # 72 -> 128 (lane-dense)

    # Output-row tiling.
    if OH % 8 == 0:
        OHT = 8
    elif OH % 7 == 0:
        OHT = 7                                          # 56x56 input -> OH=28 -> 4 tiles of 7
    else:
        OHT = 8                                          # pad OH up to a multiple of 8
    NT = pl.cdiv(OH, OHT)
    OHp = NT * OHT

    # Padded phase-slab sizes.  Rows/cols up to (OHp+1)/(OW+1) must exist (zero padded),
    # so padded output rows read zeros and contribute nothing to the BN sums.
    Hp2 = max(pl.cdiv(H + 2 * P, 2), OHp + 2)
    Wp2 = max(pl.cdiv(W + 2 * P, 2), OW + 2)
    Hp, Wp = 2 * Hp2, 2 * Wp2

    # Single pad fuses spatial + channel padding; reshape is free; one transpose
    # produces the space-to-depth phase split with channels last.
    xp = jnp.pad(x_nchw[0], ((0, CP - C), (P, Hp - H - P), (P, Wp - W - P)))   # (CP, Hp, Wp)
    xs = xp.reshape(CP, Hp2, 2, Wp2, 2).transpose(2, 4, 1, 3, 0)               # (2,2,Hp2,Wp2,CP)

    # Weights: (C,1,K,K) -> single (32, CP) tile; row t = kh*K + kw.
    w_rows = w_oihw[:, 0].reshape(C, K * K).T                                  # (25, C)
    w_packed = jnp.pad(w_rows, ((0, 32 - K * K), (0, CP - C)))                 # (32, CP)

    # ---- pass 1: depthwise conv + per-tile partial BN statistics --------------------
    conv_out, stats = pl.pallas_call(
        dwconv_stats_kernel,
        out_shape=(jax.ShapeDtypeStruct((OHp, OW, CP), jnp.float32),
                   jax.ShapeDtypeStruct((NT, 2, CP), jnp.float32)),
        grid=(NT,),
        in_specs=[
            pl.BlockSpec((2, 2, Hp2, Wp2, CP), lambda i: (0, 0, 0, 0, 0)),     # resident
            pl.BlockSpec((32, CP), lambda i: (0, 0)),
        ],
        out_specs=(
            pl.BlockSpec((OHT, OW, CP), lambda i: (i, 0, 0)),
            pl.BlockSpec((1, 2, CP), lambda i: (i, 0, 0)),
        ),
        compiler_params=pltpu.CompilerParams(
            dimension_semantics=("parallel",),
            vmem_limit_bytes=32 * 1024 * 1024),
    )(xs, w_packed)

    # ---- tiny cross-tile reduction + BN fold (plain JAX on (NT, 2, CP)) -------------
    cnt = jnp.float32(OH * OW)                           # padded rows contributed zeros
    s1 = jnp.sum(stats[:, 0, :], axis=0)                 # (CP,)
    s2 = jnp.sum(stats[:, 1, :], axis=0)                 # (CP,)
    mean = s1 / cnt
    var = jnp.maximum(s2 / cnt - mean * mean, 0.0)       # biased var (PyTorch train-mode)
    gamma_p = jnp.pad(gamma, (0, CP - C))
    beta_p = jnp.pad(beta, (0, CP - C))
    scale = gamma_p * jax.lax.rsqrt(var + EPS)
    bias = beta_p - mean * scale
    sb = jnp.pad(jnp.stack([scale, bias]), ((0, 6), (0, 0)))                   # (8, CP)

    # ---- pass 2: in-place normalize + ReLU ------------------------------------------
    out_hwc = pl.pallas_call(
        bn_relu_kernel,
        out_shape=jax.ShapeDtypeStruct((OHp, OW, CP), jnp.float32),
        grid=(NT,),
        in_specs=[
            pl.BlockSpec((OHT, OW, CP), lambda i: (i, 0, 0)),
            pl.BlockSpec((8, CP), lambda i: (0, 0)),
        ],
        out_specs=pl.BlockSpec((OHT, OW, CP), lambda i: (i, 0, 0)),
        input_output_aliases={0: 0},
        compiler_params=pltpu.CompilerParams(
            dimension_semantics=("parallel",),
            vmem_limit_bytes=32 * 1024 * 1024),
    )(conv_out, sb)

    # (OHp, OW, CP) -> (1, C, OH, OW)  (drop row/channel padding, back to NCHW)
    return jnp.transpose(out_hwc[:OH, :, :C], (2, 0, 1))[None]


def reference(x_nchw, w_oihw, gamma, beta):
    """Pure-JAX reference matching PyTorch semantics (training-mode BN)."""
    C = x_nchw.shape[1]
    y = jax.lax.conv_general_dilated(
        x_nchw, w_oihw, window_strides=(S, S), padding=((P, P), (P, P)),
        feature_group_count=C, dimension_numbers=("NCHW", "OIHW", "NCHW"))
    mean = jnp.mean(y, axis=(0, 2, 3), keepdims=True)
    var = jnp.mean((y - mean) ** 2, axis=(0, 2, 3), keepdims=True)  # biased
    yn = (y - mean) * jax.lax.rsqrt(var + EPS)
    yn = yn * gamma.reshape(1, C, 1, 1) + beta.reshape(1, C, 1, 1)
    return jnp.maximum(yn, 0.0)


if __name__ == "__main__":
    key = jax.random.PRNGKey(0)
    k1, k2, k3, k4 = jax.random.split(key, 4)

    # The module's actual (still small) shapes: channels must be 72 (depthwise groups).
    C, H, W = 72, 56, 56
    x = jax.random.normal(k1, (1, C, H, W), jnp.float32)
    w_oihw = 0.1 * jax.random.normal(k2, (C, 1, K, K), jnp.float32)   # PyTorch (C,1,5,5)
    gamma = 1.0 + 0.1 * jax.random.normal(k3, (C,), jnp.float32)
    beta = 0.1 * jax.random.normal(k4, (C,), jnp.float32)

    out = jax.block_until_ready(forward(x, w_oihw, gamma, beta))

    OH = (H + 2 * P - K) // S + 1
    OW = (W + 2 * P - K) // S + 1
    assert out.shape == (1, C, OH, OW), out.shape

    ref = reference(x, w_oihw, gamma, beta)
    if not jnp.allclose(out, ref, atol=5e-4, rtol=5e-4):
        err = float(jnp.max(jnp.abs(out - ref)))
        raise AssertionError(f"Pallas kernel output mismatch, max abs err = {err}")

    print("KERNEL_OK")
</pallas_src>

<mosaic_0001>
module attributes {stable_mosaic.version = 11 : i64} {
  func.func @bn_relu_kernel(%arg0: i32, %arg1: memref<7x28x128xf32, #tpu.memory_space<vmem>>, %arg2: memref<8x128xf32, #tpu.memory_space<vmem>>, %arg3: memref<7x28x128xf32, #tpu.memory_space<vmem>>) attributes {dimension_semantics = [#tpu.dimension_semantics<parallel>], iteration_bounds = array<i64: 4>, scalar_prefetch = 0 : i64, scratch_operands = 0 : i64, tpu.core_type = #tpu.core_type<tc>, window_params = [{transform_indices = @transform_0, window_bounds = array<i64: 7, 28, 128>}, {pipeline_mode = #tpu.pipeline_mode<synchronous>, transform_indices = @transform_1, window_bounds = array<i64: 8, 128>}, {transform_indices = @transform_2, window_bounds = array<i64: 7, 28, 128>}]} {
    %c0 = arith.constant 0 : index
    %c0_0 = arith.constant 0 : index
    %0 = vector.load %arg2[%c0, %c0_0] : memref<8x128xf32, #tpu.memory_space<vmem>>, vector<1x128xf32>
    %c1 = arith.constant 1 : index
    %c0_1 = arith.constant 0 : index
    %1 = vector.load %arg2[%c1, %c0_1] : memref<8x128xf32, #tpu.memory_space<vmem>>, vector<1x128xf32>
    %c0_2 = arith.constant 0 : index
    %c0_3 = arith.constant 0 : index
    %c0_4 = arith.constant 0 : index
    %2 = vector.load %arg1[%c0_2, %c0_3, %c0_4] : memref<7x28x128xf32, #tpu.memory_space<vmem>>, vector<7x28x128xf32>
    %3 = vector.shape_cast %0 : vector<1x128xf32> to vector<1x1x128xf32>
    %4 = vector.broadcast %3 : vector<1x1x128xf32> to vector<7x28x128xf32>
    %5 = arith.mulf %2, %4 : vector<7x28x128xf32>
    %6 = vector.shape_cast %1 : vector<1x128xf32> to vector<1x1x128xf32>
    %7 = vector.broadcast %6 : vector<1x1x128xf32> to vector<7x28x128xf32>
    %8 = arith.addf %5, %7 : vector<7x28x128xf32>
    %cst = arith.constant 0.000000e+00 : f32
    %9 = vector.broadcast %cst : f32 to vector<7x28x128xf32>
    %10 = arith.maximumf %8, %9 : vector<7x28x128xf32>
    %c0_5 = arith.constant 0 : index
    %c0_6 = arith.constant 0 : index
    %c0_7 = arith.constant 0 : index
    %11 = vector.load %arg3[%c0_5, %c0_6, %c0_7] : memref<7x28x128xf32, #tpu.memory_space<vmem>>, vector<7x28x128xf32>
    tpu.vector_store %arg3[%c0_5, %c0_6, %c0_7], %10 {strides = array<i32>} : memref<7x28x128xf32, #tpu.memory_space<vmem>>, vector<7x28x128xf32>,
    return
  }
  func.func @transform_0(%arg0: i32) -> (i32, i32, i32) {
    %c0_i32 = arith.constant 0 : i32
    %c0_i32_0 = arith.constant 0 : i32
    %c0_i32_1 = arith.constant 0 : i32
    return %arg0, %c0_i32, %c0_i32_0 : i32, i32, i32
  }
  func.func @transform_1(%arg0: i32) -> (i32, i32) {
    %c0_i32 = arith.constant 0 : i32
    %c0_i32_0 = arith.constant 0 : i32
    %c0_i32_1 = arith.constant 0 : i32
    return %c0_i32, %c0_i32_0 : i32, i32
  }
  func.func @transform_2(%arg0: i32) -> (i32, i32, i32) {
    %c0_i32 = arith.constant 0 : i32
    %c0_i32_0 = arith.constant 0 : i32
    %c0_i32_1 = arith.constant 0 : i32
    return %arg0, %c0_i32, %c0_i32_0 : i32, i32, i32
  }
}

module attributes {stable_mosaic.version = 11 : i64} {
  func.func @dwconv_stats_kernel(%arg0: i32, %arg1: memref<2x2x30x30x128xf32, #tpu.memory_space<vmem>>, %arg2: memref<32x128xf32, #tpu.memory_space<vmem>>, %arg3: memref<7x28x128xf32, #tpu.memory_space<vmem>>, %arg4: memref<1x2x128xf32, #tpu.memory_space<vmem>>) attributes {dimension_semantics = [#tpu.dimension_semantics<parallel>], iteration_bounds = array<i64: 4>, scalar_prefetch = 0 : i64, scratch_operands = 0 : i64, tpu.core_type = #tpu.core_type<tc>, window_params = [{pipeline_mode = #tpu.pipeline_mode<synchronous>, transform_indices = @transform_0, window_bounds = array<i64: 2, 2, 30, 30, 128>}, {pipeline_mode = #tpu.pipeline_mode<synchronous>, transform_indices = @transform_1, window_bounds = array<i64: 32, 128>}, {transform_indices = @transform_2, window_bounds = array<i64: 7, 28, 128>}, {transform_indices = @transform_3, window_bounds = array<i64: 1, 2, 128>}]} {
    %c7_i32 = arith.constant 7 : i32
    %0 = arith.muli %arg0, %c7_i32 : i32
    %cst = arith.constant 0.000000e+00 : f32
    %1 = vector.broadcast %cst : f32 to vector<7x28x128xf32>
    %c0_i32 = arith.constant 0 : i32
    %2 = arith.addi %0, %c0_i32 : i32
    %c0_i32_0 = arith.constant 0 : i32
    %c0_i32_1 = arith.constant 0 : i32
    %c0_i32_2 = arith.constant 0 : i32
    %c0_i32_3 = arith.constant 0 : i32
    %c0_i32_4 = arith.constant 0 : i32
    %3 = tpu.memref_slice %arg1[%c0_i32_0, %c0_i32_1, %c0_i32_2, %c0_i32_3, %c0_i32_4] : memref<2x2x30x30x128xf32, #tpu.memory_space<vmem>> -> memref<1x1x30x30x128xf32, #tpu.memory_space<vmem>>
    %4 = tpu.memref_squeeze %3 : memref<1x1x30x30x128xf32, #tpu.memory_space<vmem>> -> memref<30x30x128xf32, #tpu.memory_space<vmem>>
    %5 = arith.index_cast %2 : i32 to index
    %c0 = arith.constant 0 : index
    %c0_5 = arith.constant 0 : index
    %6 = vector.load %4[%5, %c0, %c0_5] : memref<30x30x128xf32, #tpu.memory_space<vmem>>, vector<7x28x128xf32>
    %c0_6 = arith.constant 0 : index
    %c0_7 = arith.constant 0 : index
    %7 = vector.load %arg2[%c0_6, %c0_7] : memref<32x128xf32, #tpu.memory_space<vmem>>, vector<1x128xf32>
    %8 = vector.shape_cast %7 : vector<1x128xf32> to vector<1x1x128xf32>
    %9 = vector.broadcast %8 : vector<1x1x128xf32> to vector<7x28x128xf32>
    %10 = arith.mulf %6, %9 : vector<7x28x128xf32>
    %11 = arith.addf %1, %10 : vector<7x28x128xf32>
    %c0_i32_8 = arith.constant 0 : i32
    %12 = arith.addi %0, %c0_i32_8 : i32
    %c0_i32_9 = arith.constant 0 : i32
    %c1_i32 = arith.constant 1 : i32
    %c0_i32_10 = arith.constant 0 : i32
    %c0_i32_11 = arith.constant 0 : i32
    %c0_i32_12 = arith.constant 0 : i32
    %13 = tpu.memref_slice %arg1[%c0_i32_9, %c1_i32, %c0_i32_10, %c0_i32_11, %c0_i32_12] : memref<2x2x30x30x128xf32, #tpu.memory_space<vmem>> -> memref<1x1x30x30x128xf32, #tpu.memory_space<vmem>>
    %14 = tpu.memref_squeeze %13 : memref<1x1x30x30x128xf32, #tpu.memory_space<vmem>> -> memref<30x30x128xf32, #tpu.memory_space<vmem>>
    %15 = arith.index_cast %12 : i32 to index
    %c0_13 = arith.constant 0 : index
    %c0_14 = arith.constant 0 : index
    %16 = vector.load %14[%15, %c0_13, %c0_14] : memref<30x30x128xf32, #tpu.memory_space<vmem>>, vector<7x28x128xf32>
    %c1 = arith.constant 1 : index
    %c0_15 = arith.constant 0 : index
    %17 = vector.load %arg2[%c1, %c0_15] : memref<32x128xf32, #tpu.memory_space<vmem>>, vector<1x128xf32>
    %18 = vector.shape_cast %17 : vector<1x128xf32> to vector<1x1x128xf32>
    %19 = vector.broadcast %18 : vector<1x1x128xf32> to vector<7x28x128xf32>
    %20 = arith.mulf %16, %19 : vector<7x28x128xf32>
    %21 = arith.addf %11, %20 : vector<7x28x128xf32>
    %c0_i32_16 = arith.constant 0 : i32
    %22 = arith.addi %0, %c0_i32_16 : i32
    %c0_i32_17 = arith.constant 0 : i32
    %c0_i32_18 = arith.constant 0 : i32
    %c0_i32_19 = arith.constant 0 : i32
    %c0_i32_20 = arith.constant 0 : i32
    %c0_i32_21 = arith.constant 0 : i32
    %23 = tpu.memref_slice %arg1[%c0_i32_17, %c0_i32_18, %c0_i32_19, %c0_i32_20, %c0_i32_21] : memref<2x2x30x30x128xf32, #tpu.memory_space<vmem>> -> memref<1x1x30x30x128xf32, #tpu.memory_space<vmem>>
    %24 = tpu.memref_squeeze %23 : memref<1x1x30x30x128xf32, #tpu.memory_space<vmem>> -> memref<30x30x128xf32, #tpu.memory_space<vmem>>
    %25 = arith.index_cast %22 : i32 to index
    %c1_22 = arith.constant 1 : index
    %c0_23 = arith.constant 0 : index
    %26 = vector.load %24[%25, %c1_22, %c0_23] : memref<30x30x128xf32, #tpu.memory_space<vmem>>, vector<7x28x128xf32>
    %c2 = arith.constant 2 : index
    %c0_24 = arith.constant 0 : index
    %27 = vector.load %arg2[%c2, %c0_24] : memref<32x128xf32, #tpu.memory_space<vmem>>, vector<1x128xf32>
    %28 = vector.shape_cast %27 : vector<1x128xf32> to vector<1x1x128xf32>
    %29 = vector.broadcast %28 : vector<1x1x128xf32> to vector<7x28x128xf32>
    %30 = arith.mulf %26, %29 : vector<7x28x128xf32>
    %31 = arith.addf %21, %30 : vector<7x28x128xf32>
    %c0_i32_25 = arith.constant 0 : i32
    %32 = arith.addi %0, %c0_i32_25 : i32
    %c0_i32_26 = arith.constant 0 : i32
    %c1_i32_27 = arith.constant 1 : i32
    %c0_i32_28 = arith.constant 0 : i32
    %c0_i32_29 = arith.constant 0 : i32
    %c0_i32_30 = arith.constant 0 : i32
    %33 = tpu.memref_slice %arg1[%c0_i32_26, %c1_i32_27, %c0_i32_28, %c0_i32_29, %c0_i32_30] : memref<2x2x30x30x128xf32, #tpu.memory_space<vmem>> -> memref<1x1x30x30x128xf32, #tpu.memory_space<vmem>>
    %34 = tpu.memref_squeeze %33 : memref<1x1x30x30x128xf32, #tpu.memory_space<vmem>> -> memref<30x30x128xf32, #tpu.memory_space<vmem>>
    %35 = arith.index_cast %32 : i32 to index
    %c1_31 = arith.constant 1 : index
    %c0_32 = arith.constant 0 : index
    %36 = vector.load %34[%35, %c1_31, %c0_32] : memref<30x30x128xf32, #tpu.memory_space<vmem>>, vector<7x28x128xf32>
    %c3 = arith.constant 3 : index
    %c0_33 = arith.constant 0 : index
    %37 = vector.load %arg2[%c3, %c0_33] : memref<32x128xf32, #tpu.memory_space<vmem>>, vector<1x128xf32>
    %38 = vector.shape_cast %37 : vector<1x128xf32> to vector<1x1x128xf32>
    %39 = vector.broadcast %38 : vector<1x1x128xf32> to vector<7x28x128xf32>
    %40 = arith.mulf %36, %39 : vector<7x28x128xf32>
    %41 = arith.addf %31, %40 : vector<7x28x128xf32>
    %c0_i32_34 = arith.constant 0 : i32
    %42 = arith.addi %0, %c0_i32_34 : i32
    %c0_i32_35 = arith.constant 0 : i32
    %c0_i32_36 = arith.constant 0 : i32
    %c0_i32_37 = arith.constant 0 : i32
    %c0_i32_38 = arith.constant 0 : i32
    %c0_i32_39 = arith.constant 0 : i32
    %43 = tpu.memref_slice %arg1[%c0_i32_35, %c0_i32_36, %c0_i32_37, %c0_i32_38, %c0_i32_39] : memref<2x2x30x30x128xf32, #tpu.memory_space<vmem>> -> memref<1x1x30x30x128xf32, #tpu.memory_space<vmem>>
    %44 = tpu.memref_squeeze %43 : memref<1x1x30x30x128xf32, #tpu.memory_space<vmem>> -> memref<30x30x128xf32, #tpu.memory_space<vmem>>
    %45 = arith.index_cast %42 : i32 to index
    %c2_40 = arith.constant 2 : index
    %c0_41 = arith.constant 0 : index
    %46 = vector.load %44[%45, %c2_40, %c0_41] : memref<30x30x128xf32, #tpu.memory_space<vmem>>, vector<7x28x128xf32>
    %c4 = arith.constant 4 : index
    %c0_42 = arith.constant 0 : index
    %47 = vector.load %arg2[%c4, %c0_42] : memref<32x128xf32, #tpu.memory_space<vmem>>, vector<1x128xf32>
    %48 = vector.shape_cast %47 : vector<1x128xf32> to vector<1x1x128xf32>
    %49 = vector.broadcast %48 : vector<1x1x128xf32> to vector<7x28x128xf32>
    %50 = arith.mulf %46, %49 : vector<7x28x128xf32>
    %51 = arith.addf %41, %50 : vector<7x28x128xf32>
    %c0_i32_43 = arith.constant 0 : i32
    %52 = arith.addi %0, %c0_i32_43 : i32
    %c1_i32_44 = arith.constant 1 : i32
    %c0_i32_45 = arith.constant 0 : i32
    %c0_i32_46 = arith.constant 0 : i32
    %c0_i32_47 = arith.constant 0 : i32
    %c0_i32_48 = arith.constant 0 : i32
    %53 = tpu.memref_slice %arg1[%c1_i32_44, %c0_i32_45, %c0_i32_46, %c0_i32_47, %c0_i32_48] : memref<2x2x30x30x128xf32, #tpu.memory_space<vmem>> -> memref<1x1x30x30x128xf32, #tpu.memory_space<vmem>>
    %54 = tpu.memref_squeeze %53 : memref<1x1x30x30x128xf32, #tpu.memory_space<vmem>> -> memref<30x30x128xf32, #tpu.memory_space<vmem>>
    %55 = arith.index_cast %52 : i32 to index
    %c0_49 = arith.constant 0 : index
    %c0_50 = arith.constant 0 : index
    %56 = vector.load %54[%55, %c0_49, %c0_50] : memref<30x30x128xf32, #tpu.memory_space<vmem>>, vector<7x28x128xf32>
    %c5 = arith.constant 5 : index
    %c0_51 = arith.constant 0 : index
    %57 = vector.load %arg2[%c5, %c0_51] : memref<32x128xf32, #tpu.memory_space<vmem>>, vector<1x128xf32>
    %58 = vector.shape_cast %57 : vector<1x128xf32> to vector<1x1x128xf32>
    %59 = vector.broadcast %58 : vector<1x1x128xf32> to vector<7x28x128xf32>
    %60 = arith.mulf %56, %59 : vector<7x28x128xf32>
    %61 = arith.addf %51, %60 : vector<7x28x128xf32>
    %c0_i32_52 = arith.constant 0 : i32
    %62 = arith.addi %0, %c0_i32_52 : i32
    %c1_i32_53 = arith.constant 1 : i32
    %c1_i32_54 = arith.constant 1 : i32
    %c0_i32_55 = arith.constant 0 : i32
    %c0_i32_56 = arith.constant 0 : i32
    %c0_i32_57 = arith.constant 0 : i32
    %63 = tpu.memref_slice %arg1[%c1_i32_53, %c1_i32_54, %c0_i32_55, %c0_i32_56, %c0_i32_57] : memref<2x2x30x30x128xf32, #tpu.memory_space<vmem>> -> memref<1x1x30x30x128xf32, #tpu.memory_space<vmem>>
    %64 = tpu.memref_squeeze %63 : memref<1x1x30x30x128xf32, #tpu.memory_space<vmem>> -> memref<30x30x128xf32, #tpu.memory_space<vmem>>
    %65 = arith.index_cast %62 : i32 to index
    %c0_58 = arith.constant 0 : index
    %c0_59 = arith.constant 0 : index
    %66 = vector.load %64[%65, %c0_58, %c0_59] : memref<30x30x128xf32, #tpu.memory_space<vmem>>, vector<7x28x128xf32>
    %c6 = arith.constant 6 : index
    %c0_60 = arith.constant 0 : index
    %67 = vector.load %arg2[%c6, %c0_60] : memref<32x128xf32, #tpu.memory_space<vmem>>, vector<1x128xf32>
    %68 = vector.shape_cast %67 : vector<1x128xf32> to vector<1x1x128xf32>
    %69 = vector.broadcast %68 : vector<1x1x128xf32> to vector<7x28x128xf32>
    %70 = arith.mulf %66, %69 : vector<7x28x128xf32>
    %71 = arith.addf %61, %70 : vector<7x28x128xf32>
    %c0_i32_61 = arith.constant 0 : i32
    %72 = arith.addi %0, %c0_i32_61 : i32
    %c1_i32_62 = arith.constant 1 : i32
    %c0_i32_63 = arith.constant 0 : i32
    %c0_i32_64 = arith.constant 0 : i32
    %c0_i32_65 = arith.constant 0 : i32
    %c0_i32_66 = arith.constant 0 : i32
    %73 = tpu.memref_slice %arg1[%c1_i32_62, %c0_i32_63, %c0_i32_64, %c0_i32_65, %c0_i32_66] : memref<2x2x30x30x128xf32, #tpu.memory_space<vmem>> -> memref<1x1x30x30x128xf32, #tpu.memory_space<vmem>>
    %74 = tpu.memref_squeeze %73 : memref<1x1x30x30x128xf32, #tpu.memory_space<vmem>> -> memref<30x30x128xf32, #tpu.memory_space<vmem>>
    %75 = arith.index_cast %72 : i32 to index
    %c1_67 = arith.constant 1 : index
    %c0_68 = arith.constant 0 : index
    %76 = vector.load %74[%75, %c1_67, %c0_68] : memref<30x30x128xf32, #tpu.memory_space<vmem>>, vector<7x28x128xf32>
    %c7 = arith.constant 7 : index
    %c0_69 = arith.constant 0 : index
    %77 = vector.load %arg2[%c7, %c0_69] : memref<32x128xf32, #tpu.memory_space<vmem>>, vector<1x128xf32>
    %78 = vector.shape_cast %77 : vector<1x128xf32> to vector<1x1x128xf32>
    %79 = vector.broadcast %78 : vector<1x1x128xf32> to vector<7x28x128xf32>
    %80 = arith.mulf %76, %79 : vector<7x28x128xf32>
    %81 = arith.addf %71, %80 : vector<7x28x128xf32>
    %c0_i32_70 = arith.constant 0 : i32
    %82 = arith.addi %0, %c0_i32_70 : i32
    %c1_i32_71 = arith.constant 1 : i32
    %c1_i32_72 = arith.constant 1 : i32
    %c0_i32_73 = arith.constant 0 : i32
    %c0_i32_74 = arith.constant 0 : i32
    %c0_i32_75 = arith.constant 0 : i32
    %83 = tpu.memref_slice %arg1[%c1_i32_71, %c1_i32_72, %c0_i32_73, %c0_i32_74, %c0_i32_75] : memref<2x2x30x30x128xf32, #tpu.memory_space<vmem>> -> memref<1x1x30x30x128xf32, #tpu.memory_space<vmem>>
    %84 = tpu.memref_squeeze %83 : memref<1x1x30x30x128xf32, #tpu.memory_space<vmem>> -> memref<30x30x128xf32, #tpu.memory_space<vmem>>
    %85 = arith.index_cast %82 : i32 to index
    %c1_76 = arith.constant 1 : index
    %c0_77 = arith.constant 0 : index
    %86 = vector.load %84[%85, %c1_76, %c0_77] : memref<30x30x128xf32, #tpu.memory_space<vmem>>, vector<7x28x128xf32>
    %c8 = arith.constant 8 : index
    %c0_78 = arith.constant 0 : index
    %87 = vector.load %arg2[%c8, %c0_78] : memref<32x128xf32, #tpu.memory_space<vmem>>, vector<1x128xf32>
    %88 = vector.shape_cast %87 : vector<1x128xf32> to vector<1x1x128xf32>
    %89 = vector.broadcast %88 : vector<1x1x128xf32> to vector<7x28x128xf32>
    %90 = arith.mulf %86, %89 : vector<7x28x128xf32>
    %91 = arith.addf %81, %90 : vector<7x28x128xf32>
    %c0_i32_79 = arith.constant 0 : i32
    %92 = arith.addi %0, %c0_i32_79 : i32
    %c1_i32_80 = arith.constant 1 : i32
    %c0_i32_81 = arith.constant 0 : i32
    %c0_i32_82 = arith.constant 0 : i32
    %c0_i32_83 = arith.constant 0 : i32
    %c0_i32_84 = arith.constant 0 : i32
    %93 = tpu.memref_slice %arg1[%c1_i32_80, %c0_i32_81, %c0_i32_82, %c0_i32_83, %c0_i32_84] : memref<2x2x30x30x128xf32, #tpu.memory_space<vmem>> -> memref<1x1x30x30x128xf32, #tpu.memory_space<vmem>>
    %94 = tpu.memref_squeeze %93 : memref<1x1x30x30x128xf32, #tpu.memory_space<vmem>> -> memref<30x30x128xf32, #tpu.memory_space<vmem>>
    %95 = arith.index_cast %92 : i32 to index
    %c2_85 = arith.constant 2 : index
    %c0_86 = arith.constant 0 : index
    %96 = vector.load %94[%95, %c2_85, %c0_86] : memref<30x30x128xf32, #tpu.memory_space<vmem>>, vector<7x28x128xf32>
    %c9 = arith.constant 9 : index
    %c0_87 = arith.constant 0 : index
    %97 = vector.load %arg2[%c9, %c0_87] : memref<32x128xf32, #tpu.memory_space<vmem>>, vector<1x128xf32>
    %98 = vector.shape_cast %97 : vector<1x128xf32> to vector<1x1x128xf32>
    %99 = vector.broadcast %98 : vector<1x1x128xf32> to vector<7x28x128xf32>
    %100 = arith.mulf %96, %99 : vector<7x28x128xf32>
    %101 = arith.addf %91, %100 : vector<7x28x128xf32>
    %c1_i32_88 = arith.constant 1 : i32
    %102 = arith.addi %0, %c1_i32_88 : i32
    %c0_i32_89 = arith.constant 0 : i32
    %c0_i32_90 = arith.constant 0 : i32
    %c0_i32_91 = arith.constant 0 : i32
    %c0_i32_92 = arith.constant 0 : i32
    %c0_i32_93 = arith.constant 0 : i32
    %103 = tpu.memref_slice %arg1[%c0_i32_89, %c0_i32_90, %c0_i32_91, %c0_i32_92, %c0_i32_93] : memref<2x2x30x30x128xf32, #tpu.memory_space<vmem>> -> memref<1x1x30x30x128xf32, #tpu.memory_space<vmem>>
    %104 = tpu.memref_squeeze %103 : memref<1x1x30x30x128xf32, #tpu.memory_space<vmem>> -> memref<30x30x128xf32, #tpu.memory_space<vmem>>
    %105 = arith.index_cast %102 : i32 to index
    %c0_94 = arith.constant 0 : index
    %c0_95 = arith.constant 0 : index
    %106 = vector.load %104[%105, %c0_94, %c0_95] : memref<30x30x128xf32, #tpu.memory_space<vmem>>, vector<7x28x128xf32>
    %c10 = arith.constant 10 : index
    %c0_96 = arith.constant 0 : index
    %107 = vector.load %arg2[%c10, %c0_96] : memref<32x128xf32, #tpu.memory_space<vmem>>, vector<1x128xf32>
    %108 = vector.shape_cast %107 : vector<1x128xf32> to vector<1x1x128xf32>
    %109 = vector.broadcast %108 : vector<1x1x128xf32> to vector<7x28x128xf32>
    %110 = arith.mulf %106, %109 : vector<7x28x128xf32>
    %111 = arith.addf %101, %110 : vector<7x28x128xf32>
    %c1_i32_97 = arith.constant 1 : i32
    %112 = arith.addi %0, %c1_i32_97 : i32
    %c0_i32_98 = arith.constant 0 : i32
    %c1_i32_99 = arith.constant 1 : i32
    %c0_i32_100 = arith.constant 0 : i32
    %c0_i32_101 = arith.constant 0 : i32
    %c0_i32_102 = arith.constant 0 : i32
    %113 = tpu.memref_slice %arg1[%c0_i32_98, %c1_i32_99, %c0_i32_100, %c0_i32_101, %c0_i32_102] : memref<2x2x30x30x128xf32, #tpu.memory_space<vmem>> -> memref<1x1x30x30x128xf32, #tpu.memory_space<vmem>>
    %114 = tpu.memref_squeeze %113 : memref<1x1x30x30x128xf32, #tpu.memory_space<vmem>> -> memref<30x30x128xf32, #tpu.memory_space<vmem>>
    %115 = arith.index_cast %112 : i32 to index
    %c0_103 = arith.constant 0 : index
    %c0_104 = arith.constant 0 : index
    %116 = vector.load %114[%115, %c0_103, %c0_104] : memref<30x30x128xf32, #tpu.memory_space<vmem>>, vector<7x28x128xf32>
    %c11 = arith.constant 11 : index
    %c0_105 = arith.constant 0 : index
    %117 = vector.load %arg2[%c11, %c0_105] : memref<32x128xf32, #tpu.memory_space<vmem>>, vector<1x128xf32>
    %118 = vector.shape_cast %117 : vector<1x128xf32> to vector<1x1x128xf32>
    %119 = vector.broadcast %118 : vector<1x1x128xf32> to vector<7x28x128xf32>
    %120 = arith.mulf %116, %119 : vector<7x28x128xf32>
    %121 = arith.addf %111, %120 : vector<7x28x128xf32>
    %c1_i32_106 = arith.constant 1 : i32
    %122 = arith.addi %0, %c1_i32_106 : i32
    %c0_i32_107 = arith.constant 0 : i32
    %c0_i32_108 = arith.constant 0 : i32
    %c0_i32_109 = arith.constant 0 : i32
    %c0_i32_110 = arith.constant 0 : i32
    %c0_i32_111 = arith.constant 0 : i32
    %123 = tpu.memref_slice %arg1[%c0_i32_107, %c0_i32_108, %c0_i32_109, %c0_i32_110, %c0_i32_111] : memref<2x2x30x30x128xf32, #tpu.memory_space<vmem>> -> memref<1x1x30x30x128xf32, #tpu.memory_space<vmem>>
    %124 = tpu.memref_squeeze %123 : memref<1x1x30x30x128xf32, #tpu.memory_space<vmem>> -> memref<30x30x128xf32, #tpu.memory_space<vmem>>
    %125 = arith.index_cast %122 : i32 to index
    %c1_112 = arith.constant 1 : index
    %c0_113 = arith.constant 0 : index
    %126 = vector.load %124[%125, %c1_112, %c0_113] : memref<30x30x128xf32, #tpu.memory_space<vmem>>, vector<7x28x128xf32>
    %c12 = arith.constant 12 : index
    %c0_114 = arith.constant 0 : index
    %127 = vector.load %arg2[%c12, %c0_114] : memref<32x128xf32, #tpu.memory_space<vmem>>, vector<1x128xf32>
    %128 = vector.shape_cast %127 : vector<1x128xf32> to vector<1x1x128xf32>
    %129 = vector.broadcast %128 : vector<1x1x128xf32> to vector<7x28x128xf32>
    %130 = arith.mulf %126, %129 : vector<7x28x128xf32>
    %131 = arith.addf %121, %130 : vector<7x28x128xf32>
    %c1_i32_115 = arith.constant 1 : i32
    %132 = arith.addi %0, %c1_i32_115 : i32
    %c0_i32_116 = arith.constant 0 : i32
    %c1_i32_117 = arith.constant 1 : i32
    %c0_i32_118 = arith.constant 0 : i32
    %c0_i32_119 = arith.constant 0 : i32
    %c0_i32_120 = arith.constant 0 : i32
    %133 = tpu.memref_slice %arg1[%c0_i32_116, %c1_i32_117, %c0_i32_118, %c0_i32_119, %c0_i32_120] : memref<2x2x30x30x128xf32, #tpu.memory_space<vmem>> -> memref<1x1x30x30x128xf32, #tpu.memory_space<vmem>>
    %134 = tpu.memref_squeeze %133 : memref<1x1x30x30x128xf32, #tpu.memory_space<vmem>> -> memref<30x30x128xf32, #tpu.memory_space<vmem>>
    %135 = arith.index_cast %132 : i32 to index
    %c1_121 = arith.constant 1 : index
    %c0_122 = arith.constant 0 : index
    %136 = vector.load %134[%135, %c1_121, %c0_122] : memref<30x30x128xf32, #tpu.memory_space<vmem>>, vector<7x28x128xf32>
    %c13 = arith.constant 13 : index
    %c0_123 = arith.constant 0 : index
    %137 = vector.load %arg2[%c13, %c0_123] : memref<32x128xf32, #tpu.memory_space<vmem>>, vector<1x128xf32>
    %138 = vector.shape_cast %137 : vector<1x128xf32> to vector<1x1x128xf32>
    %139 = vector.broadcast %138 : vector<1x1x128xf32> to vector<7x28x128xf32>
    %140 = arith.mulf %136, %139 : vector<7x28x128xf32>
    %141 = arith.addf %131, %140 : vector<7x28x128xf32>
    %c1_i32_124 = arith.constant 1 : i32
    %142 = arith.addi %0, %c1_i32_124 : i32
    %c0_i32_125 = arith.constant 0 : i32
    %c0_i32_126 = arith.constant 0 : i32
    %c0_i32_127 = arith.constant 0 : i32
    %c0_i32_128 = arith.constant 0 : i32
    %c0_i32_129 = arith.constant 0 : i32
    %143 = tpu.memref_slice %arg1[%c0_i32_125, %c0_i32_126, %c0_i32_127, %c0_i32_128, %c0_i32_129] : memref<2x2x30x30x128xf32, #tpu.memory_space<vmem>> -> memref<1x1x30x30x128xf32, #tpu.memory_space<vmem>>
    %144 = tpu.memref_squeeze %143 : memref<1x1x30x30x128xf32, #tpu.memory_space<vmem>> -> memref<30x30x128xf32, #tpu.memory_space<vmem>>
    %145 = arith.index_cast %142 : i32 to index
    %c2_130 = arith.constant 2 : index
    %c0_131 = arith.constant 0 : index
    %146 = vector.load %144[%145, %c2_130, %c0_131] : memref<30x30x128xf32, #tpu.memory_space<vmem>>, vector<7x28x128xf32>
    %c14 = arith.constant 14 : index
    %c0_132 = arith.constant 0 : index
    %147 = vector.load %arg2[%c14, %c0_132] : memref<32x128xf32, #tpu.memory_space<vmem>>, vector<1x128xf32>
    %148 = vector.shape_cast %147 : vector<1x128xf32> to vector<1x1x128xf32>
    %149 = vector.broadcast %148 : vector<1x1x128xf32> to vector<7x28x128xf32>
    %150 = arith.mulf %146, %149 : vector<7x28x128xf32>
    %151 = arith.addf %141, %150 : vector<7x28x128xf32>
    %c1_i32_133 = arith.constant 1 : i32
    %152 = arith.addi %0, %c1_i32_133 : i32
    %c1_i32_134 = arith.constant 1 : i32
    %c0_i32_135 = arith.constant 0 : i32
    %c0_i32_136 = arith.constant 0 : i32
    %c0_i32_137 = arith.constant 0 : i32
    %c0_i32_138 = arith.constant 0 : i32
    %153 = tpu.memref_slice %arg1[%c1_i32_134, %c0_i32_135, %c0_i32_136, %c0_i32_137, %c0_i32_138] : memref<2x2x30x30x128xf32, #tpu.memory_space<vmem>> -> memref<1x1x30x30x128xf32, #tpu.memory_space<vmem>>
    %154 = tpu.memref_squeeze %153 : memref<1x1x30x30x128xf32, #tpu.memory_space<vmem>> -> memref<30x30x128xf32, #tpu.memory_space<vmem>>
    %155 = arith.index_cast %152 : i32 to index
    %c0_139 = arith.constant 0 : index
    %c0_140 = arith.constant 0 : index
    %156 = vector.load %154[%155, %c0_139, %c0_140] : memref<30x30x128xf32, #tpu.memory_space<vmem>>, vector<7x28x128xf32>
    %c15 = arith.constant 15 : index
    %c0_141 = arith.constant 0 : index
    %157 = vector.load %arg2[%c15, %c0_141] : memref<32x128xf32, #tpu.memory_space<vmem>>, vector<1x128xf32>
    %158 = vector.shape_cast %157 : vector<1x128xf32> to vector<1x1x128xf32>
    %159 = vector.broadcast %158 : vector<1x1x128xf32> to vector<7x28x128xf32>
    %160 = arith.mulf %156, %159 : vector<7x28x128xf32>
    %161 = arith.addf %151, %160 : vector<7x28x128xf32>
    %c1_i32_142 = arith.constant 1 : i32
    %162 = arith.addi %0, %c1_i32_142 : i32
    %c1_i32_143 = arith.constant 1 : i32
    %c1_i32_144 = arith.constant 1 : i32
    %c0_i32_145 = arith.constant 0 : i32
    %c0_i32_146 = arith.constant 0 : i32
    %c0_i32_147 = arith.constant 0 : i32
    %163 = tpu.memref_slice %arg1[%c1_i32_143, %c1_i32_144, %c0_i32_145, %c0_i32_146, %c0_i32_147] : memref<2x2x30x30x128xf32, #tpu.memory_space<vmem>> -> memref<1x1x30x30x128xf32, #tpu.memory_space<vmem>>
    %164 = tpu.memref_squeeze %163 : memref<1x1x30x30x128xf32, #tpu.memory_space<vmem>> -> memref<30x30x128xf32, #tpu.memory_space<vmem>>
    %165 = arith.index_cast %162 : i32 to index
    %c0_148 = arith.constant 0 : index
    %c0_149 = arith.constant 0 : index
    %166 = vector.load %164[%165, %c0_148, %c0_149] : memref<30x30x128xf32, #tpu.memory_space<vmem>>, vector<7x28x128xf32>
    %c16 = arith.constant 16 : index
    %c0_150 = arith.constant 0 : index
    %167 = vector.load %arg2[%c16, %c0_150] : memref<32x128xf32, #tpu.memory_space<vmem>>, vector<1x128xf32>
    %168 = vector.shape_cast %167 : vector<1x128xf32> to vector<1x1x128xf32>
    %169 = vector.broadcast %168 : vector<1x1x128xf32> to vector<7x28x128xf32>
    %170 = arith.mulf %166, %169 : vector<7x28x128xf32>
    %171 = arith.addf %161, %170 : vector<7x28x128xf32>
    %c1_i32_151 = arith.constant 1 : i32
    %172 = arith.addi %0, %c1_i32_151 : i32
    %c1_i32_152 = arith.constant 1 : i32
    %c0_i32_153 = arith.constant 0 : i32
    %c0_i32_154 = arith.constant 0 : i32
    %c0_i32_155 = arith.constant 0 : i32
    %c0_i32_156 = arith.constant 0 : i32
    %173 = tpu.memref_slice %arg1[%c1_i32_152, %c0_i32_153, %c0_i32_154, %c0_i32_155, %c0_i32_156] : memref<2x2x30x30x128xf32, #tpu.memory_space<vmem>> -> memref<1x1x30x30x128xf32, #tpu.memory_space<vmem>>
    %174 = tpu.memref_squeeze %173 : memref<1x1x30x30x128xf32, #tpu.memory_space<vmem>> -> memref<30x30x128xf32, #tpu.memory_space<vmem>>
    %175 = arith.index_cast %172 : i32 to index
    %c1_157 = arith.constant 1 : index
    %c0_158 = arith.constant 0 : index
    %176 = vector.load %174[%175, %c1_157, %c0_158] : memref<30x30x128xf32, #tpu.memory_space<vmem>>, vector<7x28x128xf32>
    %c17 = arith.constant 17 : index
    %c0_159 = arith.constant 0 : index
    %177 = vector.load %arg2[%c17, %c0_159] : memref<32x128xf32, #tpu.memory_space<vmem>>, vector<1x128xf32>
    %178 = vector.shape_cast %177 : vector<1x128xf32> to vector<1x1x128xf32>
    %179 = vector.broadcast %178 : vector<1x1x128xf32> to vector<7x28x128xf32>
    %180 = arith.mulf %176, %179 : vector<7x28x128xf32>
    %181 = arith.addf %171, %180 : vector<7x28x128xf32>
    %c1_i32_160 = arith.constant 1 : i32
    %182 = arith.addi %0, %c1_i32_160 : i32
    %c1_i32_161 = arith.constant 1 : i32
    %c1_i32_162 = arith.constant 1 : i32
    %c0_i32_163 = arith.constant 0 : i32
    %c0_i32_164 = arith.constant 0 : i32
    %c0_i32_165 = arith.constant 0 : i32
    %183 = tpu.memref_slice %arg1[%c1_i32_161, %c1_i32_162, %c0_i32_163, %c0_i32_164, %c0_i32_165] : memref<2x2x30x30x128xf32, #tpu.memory_space<vmem>> -> memref<1x1x30x30x128xf32, #tpu.memory_space<vmem>>
    %184 = tpu.memref_squeeze %183 : memref<1x1x30x30x128xf32, #tpu.memory_space<vmem>> -> memref<30x30x128xf32, #tpu.memory_space<vmem>>
    %185 = arith.index_cast %182 : i32 to index
    %c1_166 = arith.constant 1 : index
    %c0_167 = arith.constant 0 : index
    %186 = vector.load %184[%185, %c1_166, %c0_167] : memref<30x30x128xf32, #tpu.memory_space<vmem>>, vector<7x28x128xf32>
    %c18 = arith.constant 18 : index
    %c0_168 = arith.constant 0 : index
    %187 = vector.load %arg2[%c18, %c0_168] : memref<32x128xf32, #tpu.memory_space<vmem>>, vector<1x128xf32>
    %188 = vector.shape_cast %187 : vector<1x128xf32> to vector<1x1x128xf32>
    %189 = vector.broadcast %188 : vector<1x1x128xf32> to vector<7x28x128xf32>
    %190 = arith.mulf %186, %189 : vector<7x28x128xf32>
    %191 = arith.addf %181, %190 : vector<7x28x128xf32>
    %c1_i32_169 = arith.constant 1 : i32
    %192 = arith.addi %0, %c1_i32_169 : i32
    %c1_i32_170 = arith.constant 1 : i32
    %c0_i32_171 = arith.constant 0 : i32
    %c0_i32_172 = arith.constant 0 : i32
    %c0_i32_173 = arith.constant 0 : i32
    %c0_i32_174 = arith.constant 0 : i32
    %193 = tpu.memref_slice %arg1[%c1_i32_170, %c0_i32_171, %c0_i32_172, %c0_i32_173, %c0_i32_174] : memref<2x2x30x30x128xf32, #tpu.memory_space<vmem>> -> memref<1x1x30x30x128xf32, #tpu.memory_space<vmem>>
    %194 = tpu.memref_squeeze %193 : memref<1x1x30x30x128xf32, #tpu.memory_space<vmem>> -> memref<30x30x128xf32, #tpu.memory_space<vmem>>
    %195 = arith.index_cast %192 : i32 to index
    %c2_175 = arith.constant 2 : index
    %c0_176 = arith.constant 0 : index
    %196 = vector.load %194[%195, %c2_175, %c0_176] : memref<30x30x128xf32, #tpu.memory_space<vmem>>, vector<7x28x128xf32>
    %c19 = arith.constant 19 : index
    %c0_177 = arith.constant 0 : index
    %197 = vector.load %arg2[%c19, %c0_177] : memref<32x128xf32, #tpu.memory_space<vmem>>, vector<1x128xf32>
    %198 = vector.shape_cast %197 : vector<1x128xf32> to vector<1x1x128xf32>
    %199 = vector.broadcast %198 : vector<1x1x128xf32> to vector<7x28x128xf32>
    %200 = arith.mulf %196, %199 : vector<7x28x128xf32>
    %201 = arith.addf %191, %200 : vector<7x28x128xf32>
    %c2_i32 = arith.constant 2 : i32
    %202 = arith.addi %0, %c2_i32 : i32
    %c0_i32_178 = arith.constant 0 : i32
    %c0_i32_179 = arith.constant 0 : i32
    %c0_i32_180 = arith.constant 0 : i32
    %c0_i32_181 = arith.constant 0 : i32
    %c0_i32_182 = arith.constant 0 : i32
    %203 = tpu.memref_slice %arg1[%c0_i32_178, %c0_i32_179, %c0_i32_180, %c0_i32_181, %c0_i32_182] : memref<2x2x30x30x128xf32, #tpu.memory_space<vmem>> -> memref<1x1x30x30x128xf32, #tpu.memory_space<vmem>>
    %204 = tpu.memref_squeeze %203 : memref<1x1x30x30x128xf32, #tpu.memory_space<vmem>> -> memref<30x30x128xf32, #tpu.memory_space<vmem>>
    %205 = arith.index_cast %202 : i32 to index
    %c0_183 = arith.constant 0 : index
    %c0_184 = arith.constant 0 : index
    %206 = vector.load %204[%205, %c0_183, %c0_184] : memref<30x30x128xf32, #tpu.memory_space<vmem>>, vector<7x28x128xf32>
    %c20 = arith.constant 20 : index
    %c0_185 = arith.constant 0 : index
    %207 = vector.load %arg2[%c20, %c0_185] : memref<32x128xf32, #tpu.memory_space<vmem>>, vector<1x128xf32>
    %208 = vector.shape_cast %207 : vector<1x128xf32> to vector<1x1x128xf32>
    %209 = vector.broadcast %208 : vector<1x1x128xf32> to vector<7x28x128xf32>
    %210 = arith.mulf %206, %209 : vector<7x28x128xf32>
    %211 = arith.addf %201, %210 : vector<7x28x128xf32>
    %c2_i32_186 = arith.constant 2 : i32
    %212 = arith.addi %0, %c2_i32_186 : i32
    %c0_i32_187 = arith.constant 0 : i32
    %c1_i32_188 = arith.constant 1 : i32
    %c0_i32_189 = arith.constant 0 : i32
    %c0_i32_190 = arith.constant 0 : i32
    %c0_i32_191 = arith.constant 0 : i32
    %213 = tpu.memref_slice %arg1[%c0_i32_187, %c1_i32_188, %c0_i32_189, %c0_i32_190, %c0_i32_191] : memref<2x2x30x30x128xf32, #tpu.memory_space<vmem>> -> memref<1x1x30x30x128xf32, #tpu.memory_space<vmem>>
    %214 = tpu.memref_squeeze %213 : memref<1x1x30x30x128xf32, #tpu.memory_space<vmem>> -> memref<30x30x128xf32, #tpu.memory_space<vmem>>
    %215 = arith.index_cast %212 : i32 to index
    %c0_192 = arith.constant 0 : index
    %c0_193 = arith.constant 0 : index
    %216 = vector.load %214[%215, %c0_192, %c0_193] : memref<30x30x128xf32, #tpu.memory_space<vmem>>, vector<7x28x128xf32>
    %c21 = arith.constant 21 : index
    %c0_194 = arith.constant 0 : index
    %217 = vector.load %arg2[%c21, %c0_194] : memref<32x128xf32, #tpu.memory_space<vmem>>, vector<1x128xf32>
    %218 = vector.shape_cast %217 : vector<1x128xf32> to vector<1x1x128xf32>
    %219 = vector.broadcast %218 : vector<1x1x128xf32> to vector<7x28x128xf32>
    %220 = arith.mulf %216, %219 : vector<7x28x128xf32>
    %221 = arith.addf %211, %220 : vector<7x28x128xf32>
    %c2_i32_195 = arith.constant 2 : i32
    %222 = arith.addi %0, %c2_i32_195 : i32
    %c0_i32_196 = arith.constant 0 : i32
    %c0_i32_197 = arith.constant 0 : i32
    %c0_i32_198 = arith.constant 0 : i32
    %c0_i32_199 = arith.constant 0 : i32
    %c0_i32_200 = arith.constant 0 : i32
    %223 = tpu.memref_slice %arg1[%c0_i32_196, %c0_i32_197, %c0_i32_198, %c0_i32_199, %c0_i32_200] : memref<2x2x30x30x128xf32, #tpu.memory_space<vmem>> -> memref<1x1x30x30x128xf32, #tpu.memory_space<vmem>>
    %224 = tpu.memref_squeeze %223 : memref<1x1x30x30x128xf32, #tpu.memory_space<vmem>> -> memref<30x30x128xf32, #tpu.memory_space<vmem>>
    %225 = arith.index_cast %222 : i32 to index
    %c1_201 = arith.constant 1 : index
    %c0_202 = arith.constant 0 : index
    %226 = vector.load %224[%225, %c1_201, %c0_202] : memref<30x30x128xf32, #tpu.memory_space<vmem>>, vector<7x28x128xf32>
    %c22 = arith.constant 22 : index
    %c0_203 = arith.constant 0 : index
    %227 = vector.load %arg2[%c22, %c0_203] : memref<32x128xf32, #tpu.memory_space<vmem>>, vector<1x128xf32>
    %228 = vector.shape_cast %227 : vector<1x128xf32> to vector<1x1x128xf32>
    %229 = vector.broadcast %228 : vector<1x1x128xf32> to vector<7x28x128xf32>
    %230 = arith.mulf %226, %229 : vector<7x28x128xf32>
    %231 = arith.addf %221, %230 : vector<7x28x128xf32>
    %c2_i32_204 = arith.constant 2 : i32
    %232 = arith.addi %0, %c2_i32_204 : i32
    %c0_i32_205 = arith.constant 0 : i32
    %c1_i32_206 = arith.constant 1 : i32
    %c0_i32_207 = arith.constant 0 : i32
    %c0_i32_208 = arith.constant 0 : i32
    %c0_i32_209 = arith.constant 0 : i32
    %233 = tpu.memref_slice %arg1[%c0_i32_205, %c1_i32_206, %c0_i32_207, %c0_i32_208, %c0_i32_209] : memref<2x2x30x30x128xf32, #tpu.memory_space<vmem>> -> memref<1x1x30x30x128xf32, #tpu.memory_space<vmem>>
    %234 = tpu.memref_squeeze %233 : memref<1x1x30x30x128xf32, #tpu.memory_space<vmem>> -> memref<30x30x128xf32, #tpu.memory_space<vmem>>
    %235 = arith.index_cast %232 : i32 to index
    %c1_210 = arith.constant 1 : index
    %c0_211 = arith.constant 0 : index
    %236 = vector.load %234[%235, %c1_210, %c0_211] : memref<30x30x128xf32, #tpu.memory_space<vmem>>, vector<7x28x128xf32>
    %c23 = arith.constant 23 : index
    %c0_212 = arith.constant 0 : index
    %237 = vector.load %arg2[%c23, %c0_212] : memref<32x128xf32, #tpu.memory_space<vmem>>, vector<1x128xf32>
    %238 = vector.shape_cast %237 : vector<1x128xf32> to vector<1x1x128xf32>
    %239 = vector.broadcast %238 : vector<1x1x128xf32> to vector<7x28x128xf32>
    %240 = arith.mulf %236, %239 : vector<7x28x128xf32>
    %241 = arith.addf %231, %240 : vector<7x28x128xf32>
    %c2_i32_213 = arith.constant 2 : i32
    %242 = arith.addi %0, %c2_i32_213 : i32
    %c0_i32_214 = arith.constant 0 : i32
    %c0_i32_215 = arith.constant 0 : i32
    %c0_i32_216 = arith.constant 0 : i32
    %c0_i32_217 = arith.constant 0 : i32
    %c0_i32_218 = arith.constant 0 : i32
    %243 = tpu.memref_slice %arg1[%c0_i32_214, %c0_i32_215, %c0_i32_216, %c0_i32_217, %c0_i32_218] : memref<2x2x30x30x128xf32, #tpu.memory_space<vmem>> -> memref<1x1x30x30x128xf32, #tpu.memory_space<vmem>>
    %244 = tpu.memref_squeeze %243 : memref<1x1x30x30x128xf32, #tpu.memory_space<vmem>> -> memref<30x30x128xf32, #tpu.memory_space<vmem>>
    %245 = arith.index_cast %242 : i32 to index
    %c2_219 = arith.constant 2 : index
    %c0_220 = arith.constant 0 : index
    %246 = vector.load %244[%245, %c2_219, %c0_220] : memref<30x30x128xf32, #tpu.memory_space<vmem>>, vector<7x28x128xf32>
    %c24 = arith.constant 24 : index
    %c0_221 = arith.constant 0 : index
    %247 = vector.load %arg2[%c24, %c0_221] : memref<32x128xf32, #tpu.memory_space<vmem>>, vector<1x128xf32>
    %248 = vector.shape_cast %247 : vector<1x128xf32> to vector<1x1x128xf32>
    %249 = vector.broadcast %248 : vector<1x1x128xf32> to vector<7x28x128xf32>
    %250 = arith.mulf %246, %249 : vector<7x28x128xf32>
    %251 = arith.addf %241, %250 : vector<7x28x128xf32>
    %c0_222 = arith.constant 0 : index
    %c0_223 = arith.constant 0 : index
    %c0_224 = arith.constant 0 : index
    %252 = vector.load %arg3[%c0_222, %c0_223, %c0_224] : memref<7x28x128xf32, #tpu.memory_space<vmem>>, vector<7x28x128xf32>
    tpu.vector_store %arg3[%c0_222, %c0_223, %c0_224], %251 {strides = array<i32>} : memref<7x28x128xf32, #tpu.memory_space<vmem>>, vector<7x28x128xf32>,
    %cst_225 = arith.constant dense<0.000000e+00> : vector<128xf32>
    %253 = vector.multi_reduction <add>, %251, %cst_225 [0, 1] : vector<7x28x128xf32> to vector<128xf32>
    %254 = vector.shape_cast %253 : vector<128xf32> to vector<1x1x128xf32>
    %c0_226 = arith.constant 0 : index
    %c0_227 = arith.constant 0 : index
    %c0_228 = arith.constant 0 : index
    %255 = vector.load %arg4[%c0_226, %c0_227, %c0_228] : memref<1x2x128xf32, #tpu.memory_space<vmem>>, vector<1x1x128xf32>
    tpu.vector_store %arg4[%c0_226, %c0_227, %c0_228], %254 {strides = array<i32>} : memref<1x2x128xf32, #tpu.memory_space<vmem>>, vector<1x1x128xf32>,
    %256 = arith.mulf %251, %251 : vector<7x28x128xf32>
    %cst_229 = arith.constant dense<0.000000e+00> : vector<128xf32>
    %257 = vector.multi_reduction <add>, %256, %cst_229 [0, 1] : vector<7x28x128xf32> to vector<128xf32>
    %258 = vector.shape_cast %257 : vector<128xf32> to vector<1x1x128xf32>
    %c0_230 = arith.constant 0 : index
    %c1_231 = arith.constant 1 : index
    %c0_232 = arith.constant 0 : index
    %259 = vector.load %arg4[%c0_230, %c1_231, %c0_232] : memref<1x2x128xf32, #tpu.memory_space<vmem>>, vector<1x1x128xf32>
    tpu.vector_store %arg4[%c0_230, %c1_231, %c0_232], %258 {strides = array<i32>} : memref<1x2x128xf32, #tpu.memory_space<vmem>>, vector<1x1x128xf32>,
    return
  }
  func.func @transform_0(%arg0: i32) -> (i32, i32, i32, i32, i32) {
    %c0_i32 = arith.constant 0 : i32
    %c0_i32_0 = arith.constant 0 : i32
    %c0_i32_1 = arith.constant 0 : i32
    %c0_i32_2 = arith.constant 0 : i32
    %c0_i32_3 = arith.constant 0 : i32
    %c0_i32_4 = arith.constant 0 : i32
    return %c0_i32, %c0_i32_0, %c0_i32_1, %c0_i32_2, %c0_i32_3 : i32, i32, i32, i32, i32
  }
  func.func @transform_1(%arg0: i32) -> (i32, i32) {
    %c0_i32 = arith.constant 0 : i32
    %c0_i32_0 = arith.constant 0 : i32
    %c0_i32_1 = arith.constant 0 : i32
    return %c0_i32, %c0_i32_0 : i32, i32
  }
  func.func @transform_2(%arg0: i32) -> (i32, i32, i32) {
    %c0_i32 = arith.constant 0 : i32
    %c0_i32_0 = arith.constant 0 : i32
    %c0_i32_1 = arith.constant 0 : i32
    return %arg0, %c0_i32, %c0_i32_0 : i32, i32, i32
  }
  func.func @transform_3(%arg0: i32) -> (i32, i32, i32) {
    %c0_i32 = arith.constant 0 : i32
    %c0_i32_0 = arith.constant 0 : i32
    %c0_i32_1 = arith.constant 0 : i32
    return %arg0, %c0_i32, %c0_i32_0 : i32, i32, i32
  }
}

</mosaic_0001>

<llo_original>
// kernel: squeeze.5
$region0: #{squeeze.5}
  %s0 = inlined_call_operand.vmem [shape: f32[72,5,5], index: 0, kind: input, shape index: {}]
  %s1 = inlined_call_operand.vmem [shape: f32[72,25], index: 1, kind: output, shape index: {}]
  %v2 = vld [vmem:[%s0] sm:$0x1f]
  %vm3 = vcmask 588800
  %4 = vst.msk [vmem:[%s1] sm:$0x1f] %vm3, %v2
  %s5 = scalar_lea.vmem %s0, 8
  %v6 = vld [vmem:[%s5] sm:$0x1f]
  %vm7 = vcmask 588800
  %s8 = scalar_lea.vmem %s1, 5
  %9 = vst.msk [vmem:[%s8] sm:$0x1f] %vm7, %v6
  %s10 = scalar_lea.vmem %s0, 16
  %v11 = vld [vmem:[%s10] sm:$0x1f]
  %vm12 = vcmask 588800
  %s13 = scalar_lea.vmem %s1, 10
  %14 = vst.msk [vmem:[%s13] sm:$0x1f] %vm12, %v11
  %s15 = scalar_lea.vmem %s0, 24
  %v16 = vld [vmem:[%s15] sm:$0x1f]
  %vm17 = vcmask 588800
  %s18 = scalar_lea.vmem %s1, 15
  %19 = vst.msk [vmem:[%s18] sm:$0x1f] %vm17, %v16
  %s20 = scalar_lea.vmem %s0, 32
  %v21 = vld [vmem:[%s20] sm:$0x1f]
  %vm22 = vcmask 588800
  %s23 = scalar_lea.vmem %s1, 20
  %24 = vst.msk [vmem:[%s23] sm:$0x1f] %vm22, %v21

// kernel: forward.3
$region0: #{forward.3}
  #allocation0 [shape = 'u32[]', space=smem, size = 0x4, offset = 0x4, fixed_abs, tag = 'smem constant byte address 0x4 - core index']
  #allocation1 [shape = 'u32[144,128]{1,0:T(1,128)}', space=vmem, size = 0x12000, scoped, tag = 'internal scratch']
  %s0 = inlined_call_operand.vmem [shape: f32[28,28,128], index: 0, kind: input, shape index: {}, may-alias: {0,2}]
  %s1 = inlined_call_operand.vmem [shape: f32[8,128], index: 1, kind: input, shape index: {}]
  %s2 = inlined_call_operand.vmem [shape: f32[28,28,128], index: 2, kind: output, shape index: {}, may-alias: {0,2}]
  %s3 = sld [smem:[#allocation0]]
  $region41: #{forward.3} parent=0
    _
  %s5 = ssub.s32 1, %s3
  %s6 = scalar_select 0, %s5, %s3
  loop: start=0, step=1, limit=6
  $region2: #{forward.3} parent=0 // loop_pre_header
    _
  $region3: #{forward.3} parent=0 // loop_header
    %s8 = sphi 0, %s12
    %p9 = scmp.ge.s32.totalorder %s8, 6
    %s18 = sphi 0, %s20
    %s21 = sphi 0, %s18
    %s22 = sphi 0, %s21
    %s38 = sphi 0, %s22
    %s42 = sphi 0, %s42
    %s44 = sphi 0, %s42
    %s45 = sphi 0, %s44
    %s59 = sphi 0, %s45
    %s65 = sphi 0, %s67
    %s68 = sphi 0, %s65
    %s69 = sphi 0, %s68
    %s85 = sphi 0, %s69
  $region4: #{forward.3} parent=0 // loop_header_branch
    %11 = sbr.rel (%p9) target = $region8
  $region5: #{forward.3} parent=0 // loop_body
    %s13 = ssub.s32 %s8, 1
    %s14 = ssub.s32 %s8, 2
    %s15 = sadd.s32 %s8, 1
    %s16 = ssub.s32 %s8, %s15
    %p17 = scmp.eq.s32.totalorder %s16, 0
    %s19 = sadd.s32 %s18, 1
    %s20 = scalar_select %p17, %s18, %s19
    %p23 = pneg %p17
    %p24 = scmp.eq.s32.totalorder %s8, 3
    %p25 = por %p23, %p24
    %p26 = scmp.ne.s32.totalorder %s18, %s21
    %p27 = scmp.eq.s32.totalorder %s8, 0
    %p28 = por %p26, %p27
    %p29 = scmp.ne.s32.totalorder %s18, %s21
    %p30 = scmp.eq.s32.totalorder %s13, 3
    %p31 = por %p29, %p30
    %p32 = scmp.ne.s32.totalorder %s21, %s22
    %p33 = scmp.eq.s32.totalorder %s13, 0
    %p34 = por %p32, %p33
    %p35 = scmp.ne.s32.totalorder %s21, %s22
    %p36 = scmp.eq.s32.totalorder %s14, 3
    %p37 = por %p35, %p36
    %p39 = scmp.ne.s32.totalorder %s22, %s38
    %p40 = scmp.eq.s32.totalorder %s14, 0
    %p41 = por %p39, %p40
    %s43 = sadd.s32 %s42, 1
    %p46 = scmp.eq.s32.totalorder %s8, 3
    %p47 = scmp.ne.s32.totalorder %s42, %s44
    %p48 = scmp.eq.s32.totalorder %s8, 0
    %p49 = por %p47, %p48
    %p50 = scmp.ne.s32.totalorder %s42, %s44
    %p51 = scmp.eq.s32.totalorder %s13, 3
    %p52 = por %p50, %p51
    %p53 = scmp.ne.s32.totalorder %s44, %s45
    %p54 = scmp.eq.s32.totalorder %s13, 0
    %p55 = por %p53, %p54
    %p56 = scmp.ne.s32.totalorder %s44, %s45
    %p57 = scmp.eq.s32.totalorder %s14, 3
    %p58 = por %p56, %p57
    %p60 = scmp.ne.s32.totalorder %s45, %s59
    %p61 = scmp.eq.s32.totalorder %s14, 0
    %p62 = por %p60, %p61
    %s63 = ssub.s32 %s8, %s15
    %p64 = scmp.eq.s32.totalorder %s63, 0
    %s66 = sadd.s32 %s65, 1
    %s67 = scalar_select %p64, %s65, %s66
    %p70 = pneg %p64
    %p71 = scmp.eq.s32.totalorder %s8, 3
    %p72 = por %p70, %p71
    %p73 = scmp.ne.s32.totalorder %s65, %s68
    %p74 = scmp.eq.s32.totalorder %s8, 0
    %p75 = por %p73, %p74
    %p76 = scmp.ne.s32.totalorder %s65, %s68
    %p77 = scmp.eq.s32.totalorder %s13, 3
    %p78 = por %p76, %p77
    %p79 = scmp.ne.s32.totalorder %s68, %s69
    %p80 = scmp.eq.s32.totalorder %s13, 0
    %p81 = por %p79, %p80
    %p82 = scmp.ne.s32.totalorder %s68, %s69
    %p83 = scmp.eq.s32.totalorder %s14, 3
    %p84 = por %p82, %p83
    %p86 = scmp.ne.s32.totalorder %s69, %s85
    %p87 = scmp.eq.s32.totalorder %s14, 0
    %p88 = por %p86, %p87
    %p89 = scmp.le.s32.totalorder 1, %s8
    %p90 = scmp.lt.s32.totalorder %s8, 5
    %p91 = pnand %p89, %p90
    %p92 = pneg %p91
    // Predicated region
    $region9: #{forward.3} parent=5 // pred_check
      _
    $region10: #{forward.3} parent=5 // pred_check_branch
      %94 = sbr.rel (%p91) target = $region12
    $region11: #{forward.3} parent=5 // pred_region
      %s95 = ssub.s32 %s8, 1
      // Predicated region
      $region13: #{forward.3} parent=11 // pred_check
        %p96 = pneg %p55
      $region14: #{forward.3} parent=11 // pred_check_branch
        %98 = sbr.rel (%p96) target = $region16
      $region15: #{forward.3} parent=11 // pred_region
        _
      $region16: #{forward.3} parent=11 // pred_fallthru
        _
    $region12: #{forward.3} parent=5 // pred_fallthru
      _
    %p99 = scmp.lt.s32.totalorder %s8, 4
    // Predicated region
    $region17: #{forward.3} parent=5 // pred_check
      %p100 = pneg %p99
    $region18: #{forward.3} parent=5 // pred_check_branch
      %102 = sbr.rel (%p100) target = $region20
    $region19: #{forward.3} parent=5 // pred_region
      // Predicated region
      $region21: #{forward.3} parent=19 // pred_check
        %p103 = pneg %p28
      $region22: #{forward.3} parent=19 // pred_check_branch
        %105 = sbr.rel (%p103) target = $region24
      $region23: #{forward.3} parent=19 // pred_region
        %s106 = smul.u32 7, %s8
        %p107 = scmp.lt.s32.totalorder %s106, 27
        %s108 = scalar_select %p107, %s106, 27
        %s109 = smul.addr %s108, 4
        %s110 = smul.addr %s109, 8
        %s111 = scalar_lea.vmem %s0, %s110
        %s112 = smul.u32 7, %s8
      $region24: #{forward.3} parent=19 // pred_fallthru
        _
    $region20: #{forward.3} parent=5 // pred_fallthru
      _
    %p113 = scmp.le.s32.totalorder 1, %s8
    %p114 = scmp.lt.s32.totalorder %s8, 5
    %p115 = pnand %p113, %p114
    %p116 = pneg %p115
    // Predicated region
    $region25: #{forward.3} parent=5 // pred_check
      _
    $region26: #{forward.3} parent=5 // pred_check_branch
      %118 = sbr.rel (%p115) target = $region28
    $region27: #{forward.3} parent=5 // pred_region
      %s119 = ssub.s32 %s8, 1
      %s120 = smul.u32 7, %s13
      %p121 = scmp.lt.s32.totalorder %s120, 27
      %s122 = scalar_select %p121, %s120, 27
      %s123 = smul.addr %s122, 4
      %s124 = smul.addr %s123, 8
      %s125 = scalar_lea.vmem %s0, %s124
      %p126 = pneg %p34
      %p127 = pneg %p31
      %p128 = pneg %p55
      %p129 = pneg %p52
      %p130 = pneg %p81
      %p131 = pneg %p78
      %s132 = smul.u32 7, %s13
      %p133 = scmp.lt.s32.totalorder %s132, 27
      %s134 = scalar_select %p133, %s132, 27
      %s135 = smul.addr %s134, 4
      %s136 = smul.addr %s135, 8
      %s137 = scalar_lea.vmem %s2, %s136
      %s138 = smul.u32 7, %s13
      %p139 = scmp.lt.s32.totalorder %s138, 27
      %s140 = scalar_select %p139, %s138, 27
      %s141 = smul.addr %s140, 4
      %s142 = smul.addr %s141, 8
      %s143 = scalar_lea.vmem %s0, %s142
      %s144 = smul.u32 7, %s13
      %s145 = smul.u32 7, %s13
      %p146 = scmp.lt.s32.totalorder %s145, 27
      %s147 = scalar_select %p146, %s145, 27
      %s148 = smul.addr %s147, 4
      %s149 = smul.addr %s148, 8
      %s150 = scalar_lea.vmem %s2, %s149
      %s151 = smul.u32 7, %s13
      %v152 = vld [vmem:[%s1] sm:$0x1]
      %v153 = vld [vmem:[%s1 + $0x1] sm:$0x1]
      %v154 = vld [vmem:[%s143] sm:$0xff]
      %v155 = vld [vmem:[%s143 + $0x8] sm:$0xff]
      %v156 = vld [vmem:[%s143 + $0x10] sm:$0xff]
      %v157 = vld [vmem:[%s143 + $0x18] sm:$0xf]
      %v158 = vld [vmem:[%s143 + $0x20] sm:$0xff]
      %v159 = vld [vmem:[%s143 + $0x28] sm:$0xff]
      %v160 = vld [vmem:[%s143 + $0x30] sm:$0xff]
      %v161 = vld [vmem:[%s143 + $0x38] sm:$0xf]
      %v162 = vld [vmem:[%s143 + $0x40] sm:$0xff]
      %v163 = vld [vmem:[%s143 + $0x48] sm:$0xff]
      %v164 = vld [vmem:[%s143 + $0x50] sm:$0xff]
      %v165 = vld [vmem:[%s143 + $0x58] sm:$0xf]
      %v166 = vld [vmem:[%s143 + $0x60] sm:$0xff]
      %v167 = vld [vmem:[%s143 + $0x68] sm:$0xff]
      %v168 = vld [vmem:[%s143 + $0x70] sm:$0xff]
      %v169 = vld [vmem:[%s143 + $0x78] sm:$0xf]
      %v170 = vld [vmem:[%s143 + $0x80] sm:$0xff]
      %v171 = vld [vmem:[%s143 + $0x88] sm:$0xff]
      %v172 = vld [vmem:[%s143 + $0x90] sm:$0xff]
      %v173 = vld [vmem:[%s143 + $0x98] sm:$0xf]
      %v174 = vld [vmem:[%s143 + $0xa0] sm:$0xff]
      %v175 = vld [vmem:[%s143 + $0xa8] sm:$0xff]
      %v176 = vld [vmem:[%s143 + $0xb0] sm:$0xff]
      %v177 = vld [vmem:[%s143 + $0xb8] sm:$0xf]
      %v178 = vld [vmem:[%s143 + $0xc0] sm:$0xff]
      %v179 = vld [vmem:[%s143 + $0xc8] sm:$0xff]
      %v180 = vld [vmem:[%s143 + $0xd0] sm:$0xff]
      %v181 = vld [vmem:[%s143 + $0xd8] sm:$0xf]
      %v182 = vlaneseq
      %v183 = vshrl.u32 %v182, 7
      %v184 = vsub.s32 0, %v183
      %v185 = vrot.slane %v152, %v184
      %v186 = vmul.f32 %v154, %v185
      %v187 = vmul.f32 %v155, %v185
      %v188 = vmul.f32 %v156, %v185
      %v189 = vmul.f32 %v157, %v185
      %v190 = vmul.f32 %v158, %v185
      %v191 = vmul.f32 %v159, %v185
      %v192 = vmul.f32 %v160, %v185
      %v193 = vmul.f32 %v161, %v185
      %v194 = vmul.f32 %v162, %v185
      %v195 = vmul.f32 %v163, %v185
      %v196 = vmul.f32 %v164, %v185
      %v197 = vmul.f32 %v165, %v185
      %v198 = vmul.f32 %v166, %v185
      %v199 = vmul.f32 %v167, %v185
      %v200 = vmul.f32 %v168, %v185
      %v201 = vmul.f32 %v169, %v185
      %v202 = vmul.f32 %v170, %v185
      %v203 = vmul.f32 %v171, %v185
      %v204 = vmul.f32 %v172, %v185
      %v205 = vmul.f32 %v173, %v185
      %v206 = vmul.f32 %v174, %v185
      %v207 = vmul.f32 %v175, %v185
      %v208 = vmul.f32 %v176, %v185
      %v209 = vmul.f32 %v177, %v185
      %v210 = vmul.f32 %v178, %v185
      %v211 = vmul.f32 %v179, %v185
      %v212 = vmul.f32 %v180, %v185
      %v213 = vmul.f32 %v181, %v185
      %v214 = vlaneseq
      %v215 = vshrl.u32 %v214, 7
      %v216 = vsub.s32 0, %v215
      %v217 = vrot.slane %v153, %v216
      %v218 = vadd.f32 %v186, %v217
      %v219 = vadd.f32 %v187, %v217
      %v220 = vadd.f32 %v188, %v217
      %v221 = vadd.f32 %v189, %v217
      %v222 = vadd.f32 %v190, %v217
      %v223 = vadd.f32 %v191, %v217
      %v224 = vadd.f32 %v192, %v217
      %v225 = vadd.f32 %v193, %v217
      %v226 = vadd.f32 %v194, %v217
      %v227 = vadd.f32 %v195, %v217
      %v228 = vadd.f32 %v196, %v217
      %v229 = vadd.f32 %v197, %v217
      %v230 = vadd.f32 %v198, %v217
      %v231 = vadd.f32 %v199, %v217
      %v232 = vadd.f32 %v200, %v217
      %v233 = vadd.f32 %v201, %v217
      %v234 = vadd.f32 %v202, %v217
      %v235 = vadd.f32 %v203, %v217
      %v236 = vadd.f32 %v204, %v217
      %v237 = vadd.f32 %v205, %v217
      %v238 = vadd.f32 %v206, %v217
      %v239 = vadd.f32 %v207, %v217
      %v240 = vadd.f32 %v208, %v217
      %v241 = vadd.f32 %v209, %v217
      %v242 = vadd.f32 %v210, %v217
      %v243 = vadd.f32 %v211, %v217
      %v244 = vadd.f32 %v212, %v217
      %v245 = vadd.f32 %v213, %v217
      %v246 = vmax.f32 %v218, 0.0
      %v247 = vmax.f32 %v219, 0.0
      %v248 = vmax.f32 %v220, 0.0
      %v249 = vmax.f32 %v221, 0.0
      %v250 = vmax.f32 %v222, 0.0
      %v251 = vmax.f32 %v223, 0.0
      %v252 = vmax.f32 %v224, 0.0
      %v253 = vmax.f32 %v225, 0.0
      %v254 = vmax.f32 %v226, 0.0
      %v255 = vmax.f32 %v227, 0.0
      %v256 = vmax.f32 %v228, 0.0
      %v257 = vmax.f32 %v229, 0.0
      %v258 = vmax.f32 %v230, 0.0
      %v259 = vmax.f32 %v231, 0.0
      %v260 = vmax.f32 %v232, 0.0
      %v261 = vmax.f32 %v233, 0.0
      %v262 = vmax.f32 %v234, 0.0
      %v263 = vmax.f32 %v235, 0.0
      %v264 = vmax.f32 %v236, 0.0
      %v265 = vmax.f32 %v237, 0.0
      %v266 = vmax.f32 %v238, 0.0
      %v267 = vmax.f32 %v239, 0.0
      %v268 = vmax.f32 %v240, 0.0
      %v269 = vmax.f32 %v241, 0.0
      %v270 = vmax.f32 %v242, 0.0
      %v271 = vmax.f32 %v243, 0.0
      %v272 = vmax.f32 %v244, 0.0
      %v273 = vmax.f32 %v245, 0.0
      %274 = vst [vmem:[%s150] sm:$0xff] %v246
      %275 = vst [vmem:[%s150 + $0x8] sm:$0xff] %v247
      %276 = vst [vmem:[%s150 + $0x10] sm:$0xff] %v248
      %277 = vst [vmem:[%s150 + $0x18] sm:$0xf] %v249
      %278 = vst [vmem:[%s150 + $0x20] sm:$0xff] %v250
      %279 = vst [vmem:[%s150 + $0x28] sm:$0xff] %v251
      %280 = vst [vmem:[%s150 + $0x30] sm:$0xff] %v252
      %281 = vst [vmem:[%s150 + $0x38] sm:$0xf] %v253
      %282 = vst [vmem:[%s150 + $0x40] sm:$0xff] %v254
      %283 = vst [vmem:[%s150 + $0x48] sm:$0xff] %v255
      %284 = vst [vmem:[%s150 + $0x50] sm:$0xff] %v256
      %285 = vst [vmem:[%s150 + $0x58] sm:$0xf] %v257
      %286 = vst [vmem:[%s150 + $0x60] sm:$0xff] %v258
      %287 = vst [vmem:[%s150 + $0x68] sm:$0xff] %v259
      %288 = vst [vmem:[%s150 + $0x70] sm:$0xff] %v260
      %289 = vst [vmem:[%s150 + $0x78] sm:$0xf] %v261
      %290 = vst [vmem:[%s150 + $0x80] sm:$0xff] %v262
      %291 = vst [vmem:[%s150 + $0x88] sm:$0xff] %v263
      %292 = vst [vmem:[%s150 + $0x90] sm:$0xff] %v264
      %293 = vst [vmem:[%s150 + $0x98] sm:$0xf] %v265
      %294 = vst [vmem:[%s150 + $0xa0] sm:$0xff] %v266
      %295 = vst [vmem:[%s150 + $0xa8] sm:$0xff] %v267
      %296 = vst [vmem:[%s150 + $0xb0] sm:$0xff] %v268
      %297 = vst [vmem:[%s150 + $0xb8] sm:$0xf] %v269
      %298 = vst [vmem:[%s150 + $0xc0] sm:$0xff] %v270
      %299 = vst [vmem:[%s150 + $0xc8] sm:$0xff] %v271
      %300 = vst [vmem:[%s150 + $0xd0] sm:$0xff] %v272
      %301 = vst [vmem:[%s150 + $0xd8] sm:$0xf] %v273
      %s302 = smul.u32 7, %s13
      %p303 = scmp.lt.s32.totalorder %s302, 27
      %s304 = scalar_select %p303, %s302, 27
      %s305 = smul.addr %s304, 4
      %s306 = smul.addr %s305, 8
      %s307 = scalar_lea.vmem %s2, %s306
      // Predicated region
      $region29: #{forward.3} parent=27 // pred_check
        %p308 = pneg %p78
      $region30: #{forward.3} parent=27 // pred_check_branch
        %310 = sbr.rel (%p308) target = $region32
      $region31: #{forward.3} parent=27 // pred_region
        %s311 = smul.u32 7, %s13
      $region32: #{forward.3} parent=27 // pred_fallthru
        _
    $region28: #{forward.3} parent=5 // pred_fallthru
      _
    %p312 = scmp.le.s32.totalorder 2, %s8
    // Predicated region
    $region33: #{forward.3} parent=5 // pred_check
      %p313 = pneg %p312
    $region34: #{forward.3} parent=5 // pred_check_branch
      %315 = sbr.rel (%p313) target = $region36
    $region35: #{forward.3} parent=5 // pred_region
      %s316 = ssub.s32 %s8, 2
      // Predicated region
      $region37: #{forward.3} parent=35 // pred_check
        %p317 = pneg %p84
      $region38: #{forward.3} parent=35 // pred_check_branch
        %319 = sbr.rel (%p317) target = $region40
      $region39: #{forward.3} parent=35 // pred_region
        %s320 = smul.u32 7, %s14
        %p321 = scmp.lt.s32.totalorder %s320, 27
        %s322 = scalar_select %p321, %s320, 27
        %s323 = smul.addr %s322, 4
        %s324 = smul.addr %s323, 8
        %s325 = scalar_lea.vmem %s2, %s324
      $region40: #{forward.3} parent=35 // pred_fallthru
        _
    $region36: #{forward.3} parent=5 // pred_fallthru
      _
  $region6: #{forward.3} parent=0 // loop_footer
    %s12 = sadd.s32 1, %s8
  $region7: #{forward.3} parent=0 // loop_footer_branch
    %7 = sbr.rel target = $region3
  $region8: #{forward.3} parent=0 // loop_exit
    _

// kernel: forward.2
$region0: #{forward.2}
  #allocation0 [shape = 'u32[]', space=smem, size = 0x4, offset = 0x4, fixed_abs, tag = 'smem constant byte address 0x4 - core index']
  #allocation1 [shape = 'u32[144,128]{1,0:T(1,128)}', space=vmem, size = 0x12000, scoped, tag = 'internal scratch']
  %s0 = inlined_call_operand.vmem [shape: f32[2,2,30,30,128], index: 0, kind: input, shape index: {}]
  %s1 = inlined_call_operand.vmem [shape: f32[32,128], index: 1, kind: input, shape index: {}]
  %s2 = inlined_call_operand.vmem [shape: f32[28,28,128], index: 2, kind: output, shape index: {0}]
  %s3 = inlined_call_operand.vmem [shape: f32[4,2,128], index: 3, kind: output, shape index: {1}]
  %4 = xla_tuple %s2, %s3
  %s5 = sld [smem:[#allocation0]]
  $region49: #{forward.2} parent=0
    _
  %s7 = ssub.s32 1, %s5
  %s8 = scalar_select 0, %s7, %s5
  loop: start=0, step=1, limit=6
  $region2: #{forward.2} parent=0 // loop_pre_header
    _
  $region3: #{forward.2} parent=0 // loop_header
    %s10 = sphi 0, %s14
    %p11 = scmp.ge.s32.totalorder %s10, 6
    %s18 = sphi 0, %s18
    %s20 = sphi 0, %s18
    %s21 = sphi 0, %s20
    %s35 = sphi 0, %s21
    %s39 = sphi 0, %s39
    %s41 = sphi 0, %s39
    %s42 = sphi 0, %s41
    %s56 = sphi 0, %s42
    %s62 = sphi 0, %s64
    %s65 = sphi 0, %s62
    %s66 = sphi 0, %s65
    %s82 = sphi 0, %s66
    %s88 = sphi 0, %s90
    %s91 = sphi 0, %s88
    %s92 = sphi 0, %s91
    %s108 = sphi 0, %s92
  $region4: #{forward.2} parent=0 // loop_header_branch
    %13 = sbr.rel (%p11) target = $region8
  $region5: #{forward.2} parent=0 // loop_body
    %s15 = ssub.s32 %s10, 1
    %s16 = ssub.s32 %s10, 2
    %s17 = sadd.s32 %s10, 1
    %s19 = sadd.s32 %s18, 1
    %p22 = scmp.eq.s32.totalorder %s10, 3
    %p23 = scmp.ne.s32.totalorder %s18, %s20
    %p24 = scmp.eq.s32.totalorder %s10, 0
    %p25 = por %p23, %p24
    %p26 = scmp.ne.s32.totalorder %s18, %s20
    %p27 = scmp.eq.s32.totalorder %s15, 3
    %p28 = por %p26, %p27
    %p29 = scmp.ne.s32.totalorder %s20, %s21
    %p30 = scmp.eq.s32.totalorder %s15, 0
    %p31 = por %p29, %p30
    %p32 = scmp.ne.s32.totalorder %s20, %s21
    %p33 = scmp.eq.s32.totalorder %s16, 3
    %p34 = por %p32, %p33
    %p36 = scmp.ne.s32.totalorder %s21, %s35
    %p37 = scmp.eq.s32.totalorder %s16, 0
    %p38 = por %p36, %p37
    %s40 = sadd.s32 %s39, 1
    %p43 = scmp.eq.s32.totalorder %s10, 3
    %p44 = scmp.ne.s32.totalorder %s39, %s41
    %p45 = scmp.eq.s32.totalorder %s10, 0
    %p46 = por %p44, %p45
    %p47 = scmp.ne.s32.totalorder %s39, %s41
    %p48 = scmp.eq.s32.totalorder %s15, 3
    %p49 = por %p47, %p48
    %p50 = scmp.ne.s32.totalorder %s41, %s42
    %p51 = scmp.eq.s32.totalorder %s15, 0
    %p52 = por %p50, %p51
    %p53 = scmp.ne.s32.totalorder %s41, %s42
    %p54 = scmp.eq.s32.totalorder %s16, 3
    %p55 = por %p53, %p54
    %p57 = scmp.ne.s32.totalorder %s42, %s56
    %p58 = scmp.eq.s32.totalorder %s16, 0
    %p59 = por %p57, %p58
    %s60 = ssub.s32 %s10, %s17
    %p61 = scmp.eq.s32.totalorder %s60, 0
    %s63 = sadd.s32 %s62, 1
    %s64 = scalar_select %p61, %s62, %s63
    %p67 = pneg %p61
    %p68 = scmp.eq.s32.totalorder %s10, 3
    %p69 = por %p67, %p68
    %p70 = scmp.ne.s32.totalorder %s62, %s65
    %p71 = scmp.eq.s32.totalorder %s10, 0
    %p72 = por %p70, %p71
    %p73 = scmp.ne.s32.totalorder %s62, %s65
    %p74 = scmp.eq.s32.totalorder %s15, 3
    %p75 = por %p73, %p74
    %p76 = scmp.ne.s32.totalorder %s65, %s66
    %p77 = scmp.eq.s32.totalorder %s15, 0
    %p78 = por %p76, %p77
    %p79 = scmp.ne.s32.totalorder %s65, %s66
    %p80 = scmp.eq.s32.totalorder %s16, 3
    %p81 = por %p79, %p80
    %p83 = scmp.ne.s32.totalorder %s66, %s82
    %p84 = scmp.eq.s32.totalorder %s16, 0
    %p85 = por %p83, %p84
    %s86 = ssub.s32 %s10, %s17
    %p87 = scmp.eq.s32.totalorder %s86, 0
    %s89 = sadd.s32 %s88, 1
    %s90 = scalar_select %p87, %s88, %s89
    %p93 = pneg %p87
    %p94 = scmp.eq.s32.totalorder %s10, 3
    %p95 = por %p93, %p94
    %p96 = scmp.ne.s32.totalorder %s88, %s91
    %p97 = scmp.eq.s32.totalorder %s10, 0
    %p98 = por %p96, %p97
    %p99 = scmp.ne.s32.totalorder %s88, %s91
    %p100 = scmp.eq.s32.totalorder %s15, 3
    %p101 = por %p99, %p100
    %p102 = scmp.ne.s32.totalorder %s91, %s92
    %p103 = scmp.eq.s32.totalorder %s15, 0
    %p104 = por %p102, %p103
    %p105 = scmp.ne.s32.totalorder %s91, %s92
    %p106 = scmp.eq.s32.totalorder %s16, 3
    %p107 = por %p105, %p106
    %p109 = scmp.ne.s32.totalorder %s92, %s108
    %p110 = scmp.eq.s32.totalorder %s16, 0
    %p111 = por %p109, %p110
    %p112 = scmp.le.s32.totalorder 1, %s10
    %p113 = scmp.lt.s32.totalorder %s10, 5
    %p114 = pnand %p112, %p113
    %p115 = pneg %p114
    // Predicated region
    $region9: #{forward.2} parent=5 // pred_check
      _
    $region10: #{forward.2} parent=5 // pred_check_branch
      %117 = sbr.rel (%p114) target = $region12
    $region11: #{forward.2} parent=5 // pred_region
      %s118 = ssub.s32 %s10, 1
      // Predicated region
      $region13: #{forward.2} parent=11 // pred_check
        %p119 = pneg %p31
      $region14: #{forward.2} parent=11 // pred_check_branch
        %121 = sbr.rel (%p119) target = $region16
      $region15: #{forward.2} parent=11 // pred_region
        _
      $region16: #{forward.2} parent=11 // pred_fallthru
        _
      // Predicated region
      $region17: #{forward.2} parent=11 // pred_check
        %p122 = pneg %p52
      $region18: #{forward.2} parent=11 // pred_check_branch
        %124 = sbr.rel (%p122) target = $region20
      $region19: #{forward.2} parent=11 // pred_region
        _
      $region20: #{forward.2} parent=11 // pred_fallthru
        _
    $region12: #{forward.2} parent=5 // pred_fallthru
      _
    %p125 = scmp.lt.s32.totalorder %s10, 4
    // Predicated region
    $region21: #{forward.2} parent=5 // pred_check
      %p126 = pneg %p125
    $region22: #{forward.2} parent=5 // pred_check_branch
      %128 = sbr.rel (%p126) target = $region24
    $region23: #{forward.2} parent=5 // pred_region
      _
    $region24: #{forward.2} parent=5 // pred_fallthru
      _
    %p129 = scmp.le.s32.totalorder 1, %s10
    %p130 = scmp.lt.s32.totalorder %s10, 5
    %p131 = pnand %p129, %p130
    %p132 = pneg %p131
    // Predicated region
    $region25: #{forward.2} parent=5 // pred_check
      _
    $region26: #{forward.2} parent=5 // pred_check_branch
      %134 = sbr.rel (%p131) target = $region28
    $region27: #{forward.2} parent=5 // pred_region
      %s135 = ssub.s32 %s10, 1
      %p136 = pneg %p31
      %p137 = pneg %p28
      %p138 = pneg %p52
      %p139 = pneg %p49
      %p140 = pneg %p78
      %p141 = pneg %p75
      %s142 = smul.u32 7, %s15
      %p143 = scmp.lt.s32.totalorder %s142, 27
      %s144 = scalar_select %p143, %s142, 27
      %s145 = smul.addr %s144, 4
      %s146 = smul.addr %s145, 8
      %s147 = scalar_lea.vmem %s2, %s146
      %p148 = pneg %p104
      %p149 = pneg %p101
      %p150 = scmp.lt.s32.totalorder %s15, 3
      %s151 = scalar_select %p150, %s15, 3
      %s152 = smul.addr %s151, 2
      %s153 = scalar_lea.vmem %s3, %s152
      %s154 = smul.u32 7, %s15
      %p155 = scmp.lt.s32.totalorder %s154, 27
      %s156 = scalar_select %p155, %s154, 27
      %s157 = smul.addr %s156, 4
      %s158 = smul.addr %s157, 8
      %s159 = scalar_lea.vmem %s2, %s158
      %s160 = smul.u32 7, %s15
      %p161 = scmp.lt.s32.totalorder %s15, 3
      %s162 = scalar_select %p161, %s15, 3
      %s163 = smul.addr %s162, 2
      %s164 = scalar_lea.vmem %s3, %s163
      %s165 = smul.u32 %s15, 7
      %s166 = smul.u32 %s165, 32
      %s167 = scalar_lea.vmem %s0, %s166
      %v168 = vld [vmem:[%s167] sm:$0xff]
      %v169 = vld [vmem:[%s167 + $0x8] sm:$0xff]
      %v170 = vld [vmem:[%s167 + $0x10] sm:$0xff]
      %v171 = vld [vmem:[%s167 + $0x18] sm:$0xf]
      %v172 = vld [vmem:[%s167 + $0x20] sm:$0xff]
      %v173 = vld [vmem:[%s167 + $0x28] sm:$0xff]
      %v174 = vld [vmem:[%s167 + $0x30] sm:$0xff]
      %v175 = vld [vmem:[%s167 + $0x38] sm:$0xf]
      %v176 = vld [vmem:[%s167 + $0x40] sm:$0xff]
      %v177 = vld [vmem:[%s167 + $0x48] sm:$0xff]
      %v178 = vld [vmem:[%s167 + $0x50] sm:$0xff]
      %v179 = vld [vmem:[%s167 + $0x58] sm:$0xf]
      %v180 = vld [vmem:[%s167 + $0x60] sm:$0xff]
      %v181 = vld [vmem:[%s167 + $0x68] sm:$0xff]
      %v182 = vld [vmem:[%s167 + $0x70] sm:$0xff]
      %v183 = vld [vmem:[%s167 + $0x78] sm:$0xf]
      %v184 = vld [vmem:[%s167 + $0x80] sm:$0xff]
      %v185 = vld [vmem:[%s167 + $0x88] sm:$0xff]
      %v186 = vld [vmem:[%s167 + $0x90] sm:$0xff]
      %v187 = vld [vmem:[%s167 + $0x98] sm:$0xf]
      %v188 = vld [vmem:[%s167 + $0xa0] sm:$0xff]
      %v189 = vld [vmem:[%s167 + $0xa8] sm:$0xff]
      %v190 = vld [vmem:[%s167 + $0xb0] sm:$0xff]
      %v191 = vld [vmem:[%s167 + $0xb8] sm:$0xf]
      %v192 = vld [vmem:[%s167 + $0xc0] sm:$0xff]
      %v193 = vld [vmem:[%s167 + $0xc8] sm:$0xff]
      %v194 = vld [vmem:[%s167 + $0xd0] sm:$0xff]
      %v195 = vld [vmem:[%s167 + $0xd8] sm:$0xf]
      %v196 = vld [vmem:[%s1] sm:$0x1]
      %v197 = vlaneseq
      %v198 = vshrl.u32 %v197, 7
      %v199 = vsub.s32 0, %v198
      %v200 = vrot.slane %v196, %v199
      %v201 = vmul.f32 %v168, %v200
      %v202 = vmul.f32 %v169, %v200
      %v203 = vmul.f32 %v170, %v200
      %v204 = vmul.f32 %v171, %v200
      %v205 = vmul.f32 %v172, %v200
      %v206 = vmul.f32 %v173, %v200
      %v207 = vmul.f32 %v174, %v200
      %v208 = vmul.f32 %v175, %v200
      %v209 = vmul.f32 %v176, %v200
      %v210 = vmul.f32 %v177, %v200
      %v211 = vmul.f32 %v178, %v200
      %v212 = vmul.f32 %v179, %v200
      %v213 = vmul.f32 %v180, %v200
      %v214 = vmul.f32 %v181, %v200
      %v215 = vmul.f32 %v182, %v200
      %v216 = vmul.f32 %v183, %v200
      %v217 = vmul.f32 %v184, %v200
      %v218 = vmul.f32 %v185, %v200
      %v219 = vmul.f32 %v186, %v200
      %v220 = vmul.f32 %v187, %v200
      %v221 = vmul.f32 %v188, %v200
      %v222 = vmul.f32 %v189, %v200
      %v223 = vmul.f32 %v190, %v200
      %v224 = vmul.f32 %v191, %v200
      %v225 = vmul.f32 %v192, %v200
      %v226 = vmul.f32 %v193, %v200
      %v227 = vmul.f32 %v194, %v200
      %v228 = vmul.f32 %v195, %v200
      %v229 = vadd.f32 %v201, 0.0
      %v230 = vadd.f32 %v202, 0.0
      %v231 = vadd.f32 %v203, 0.0
      %v232 = vadd.f32 %v204, 0.0
      %v233 = vadd.f32 %v205, 0.0
      %v234 = vadd.f32 %v206, 0.0
      %v235 = vadd.f32 %v207, 0.0
      %v236 = vadd.f32 %v208, 0.0
      %v237 = vadd.f32 %v209, 0.0
      %v238 = vadd.f32 %v210, 0.0
      %v239 = vadd.f32 %v211, 0.0
      %v240 = vadd.f32 %v212, 0.0
      %v241 = vadd.f32 %v213, 0.0
      %v242 = vadd.f32 %v214, 0.0
      %v243 = vadd.f32 %v215, 0.0
      %v244 = vadd.f32 %v216, 0.0
      %v245 = vadd.f32 %v217, 0.0
      %v246 = vadd.f32 %v218, 0.0
      %v247 = vadd.f32 %v219, 0.0
      %v248 = vadd.f32 %v220, 0.0
      %v249 = vadd.f32 %v221, 0.0
      %v250 = vadd.f32 %v222, 0.0
      %v251 = vadd.f32 %v223, 0.0
      %v252 = vadd.f32 %v224, 0.0
      %v253 = vadd.f32 %v225, 0.0
      %v254 = vadd.f32 %v226, 0.0
      %v255 = vadd.f32 %v227, 0.0
      %v256 = vadd.f32 %v228, 0.0
      %s257 = scalar_lea.vmem %s0, 960
      %s258 = scalar_lea.vmem %s257, %s166
      %v259 = vld [vmem:[%s258] sm:$0xff]
      %v260 = vld [vmem:[%s258 + $0x8] sm:$0xff]
      %v261 = vld [vmem:[%s258 + $0x10] sm:$0xff]
      %v262 = vld [vmem:[%s258 + $0x18] sm:$0xf]
      %v263 = vld [vmem:[%s258 + $0x20] sm:$0xff]
      %v264 = vld [vmem:[%s258 + $0x28] sm:$0xff]
      %v265 = vld [vmem:[%s258 + $0x30] sm:$0xff]
      %v266 = vld [vmem:[%s258 + $0x38] sm:$0xf]
      %v267 = vld [vmem:[%s258 + $0x40] sm:$0xff]
      %v268 = vld [vmem:[%s258 + $0x48] sm:$0xff]
      %v269 = vld [vmem:[%s258 + $0x50] sm:$0xff]
      %v270 = vld [vmem:[%s258 + $0x58] sm:$0xf]
      %v271 = vld [vmem:[%s258 + $0x60] sm:$0xff]
      %v272 = vld [vmem:[%s258 + $0x68] sm:$0xff]
      %v273 = vld [vmem:[%s258 + $0x70] sm:$0xff]
      %v274 = vld [vmem:[%s258 + $0x78] sm:$0xf]
      %v275 = vld [vmem:[%s258 + $0x80] sm:$0xff]
      %v276 = vld [vmem:[%s258 + $0x88] sm:$0xff]
      %v277 = vld [vmem:[%s258 + $0x90] sm:$0xff]
      %v278 = vld [vmem:[%s258 + $0x98] sm:$0xf]
      %v279 = vld [vmem:[%s258 + $0xa0] sm:$0xff]
      %v280 = vld [vmem:[%s258 + $0xa8] sm:$0xff]
      %v281 = vld [vmem:[%s258 + $0xb0] sm:$0xff]
      %v282 = vld [vmem:[%s258 + $0xb8] sm:$0xf]
      %v283 = vld [vmem:[%s258 + $0xc0] sm:$0xff]
      %v284 = vld [vmem:[%s258 + $0xc8] sm:$0xff]
      %v285 = vld [vmem:[%s258 + $0xd0] sm:$0xff]
      %v286 = vld [vmem:[%s258 + $0xd8] sm:$0xf]
      %v287 = vld [vmem:[%s1 + $0x1] sm:$0x1]
      %v288 = vlaneseq
      %v289 = vshrl.u32 %v288, 7
      %v290 = vsub.s32 0, %v289
      %v291 = vrot.slane %v287, %v290
      %v292 = vmul.f32 %v259, %v291
      %v293 = vmul.f32 %v260, %v291
      %v294 = vmul.f32 %v261, %v291
      %v295 = vmul.f32 %v262, %v291
      %v296 = vmul.f32 %v263, %v291
      %v297 = vmul.f32 %v264, %v291
      %v298 = vmul.f32 %v265, %v291
      %v299 = vmul.f32 %v266, %v291
      %v300 = vmul.f32 %v267, %v291
      %v301 = vmul.f32 %v268, %v291
      %v302 = vmul.f32 %v269, %v291
      %v303 = vmul.f32 %v270, %v291
      %v304 = vmul.f32 %v271, %v291
      %v305 = vmul.f32 %v272, %v291
      %v306 = vmul.f32 %v273, %v291
      %v307 = vmul.f32 %v274, %v291
      %v308 = vmul.f32 %v275, %v291
      %v309 = vmul.f32 %v276, %v291
      %v310 = vmul.f32 %v277, %v291
      %v311 = vmul.f32 %v278, %v291
      %v312 = vmul.f32 %v279, %v291
      %v313 = vmul.f32 %v280, %v291
      %v314 = vmul.f32 %v281, %v291
      %v315 = vmul.f32 %v282, %v291
      %v316 = vmul.f32 %v283, %v291
      %v317 = vmul.f32 %v284, %v291
      %v318 = vmul.f32 %v285, %v291
      %v319 = vmul.f32 %v286, %v291
      %v320 = vadd.f32 %v229, %v292
      %v321 = vadd.f32 %v230, %v293
      %v322 = vadd.f32 %v231, %v294
      %v323 = vadd.f32 %v232, %v295
      %v324 = vadd.f32 %v233, %v296
      %v325 = vadd.f32 %v234, %v297
      %v326 = vadd.f32 %v235, %v298
      %v327 = vadd.f32 %v236, %v299
      %v328 = vadd.f32 %v237, %v300
      %v329 = vadd.f32 %v238, %v301
      %v330 = vadd.f32 %v239, %v302
      %v331 = vadd.f32 %v240, %v303
      %v332 = vadd.f32 %v241, %v304
      %v333 = vadd.f32 %v242, %v305
      %v334 = vadd.f32 %v243, %v306
      %v335 = vadd.f32 %v244, %v307
      %v336 = vadd.f32 %v245, %v308
      %v337 = vadd.f32 %v246, %v309
      %v338 = vadd.f32 %v247, %v310
      %v339 = vadd.f32 %v248, %v311
      %v340 = vadd.f32 %v249, %v312
      %v341 = vadd.f32 %v250, %v313
      %v342 = vadd.f32 %v251, %v314
      %v343 = vadd.f32 %v252, %v315
      %v344 = vadd.f32 %v253, %v316
      %v345 = vadd.f32 %v254, %v317
      %v346 = vadd.f32 %v255, %v318
      %v347 = vadd.f32 %v256, %v319
      %v348 = vld [vmem:[%s167 + $0x1] sm:$0xff]
      %v349 = vld [vmem:[%s167 + $0x9] sm:$0xff]
      %v350 = vld [vmem:[%s167 + $0x11] sm:$0xff]
      %v351 = vld [vmem:[%s167 + $0x19] sm:$0xf]
      %v352 = vld [vmem:[%s167 + $0x21] sm:$0xff]
      %v353 = vld [vmem:[%s167 + $0x29] sm:$0xff]
      %v354 = vld [vmem:[%s167 + $0x31] sm:$0xff]
      %v355 = vld [vmem:[%s167 + $0x39] sm:$0xf]
      %v356 = vld [vmem:[%s167 + $0x41] sm:$0xff]
      %v357 = vld [vmem:[%s167 + $0x49] sm:$0xff]
      %v358 = vld [vmem:[%s167 + $0x51] sm:$0xff]
      %v359 = vld [vmem:[%s167 + $0x59] sm:$0xf]
      %v360 = vld [vmem:[%s167 + $0x61] sm:$0xff]
      %v361 = vld [vmem:[%s167 + $0x69] sm:$0xff]
      %v362 = vld [vmem:[%s167 + $0x71] sm:$0xff]
      %v363 = vld [vmem:[%s167 + $0x79] sm:$0xf]
      %v364 = vld [vmem:[%s167 + $0x81] sm:$0xff]
      %v365 = vld [vmem:[%s167 + $0x89] sm:$0xff]
      %v366 = vld [vmem:[%s167 + $0x91] sm:$0xff]
      %v367 = vld [vmem:[%s167 + $0x99] sm:$0xf]
      %v368 = vld [vmem:[%s167 + $0xa1] sm:$0xff]
      %v369 = vld [vmem:[%s167 + $0xa9] sm:$0xff]
      %v370 = vld [vmem:[%s167 + $0xb1] sm:$0xff]
      %v371 = vld [vmem:[%s167 + $0xb9] sm:$0xf]
      %v372 = vld [vmem:[%s167 + $0xc1] sm:$0xff]
      %v373 = vld [vmem:[%s167 + $0xc9] sm:$0xff]
      %v374 = vld [vmem:[%s167 + $0xd1] sm:$0xff]
      %v375 = vld [vmem:[%s167 + $0xd9] sm:$0xf]
      %v376 = vld [vmem:[%s1 + $0x2] sm:$0x1]
      %v377 = vlaneseq
      %v378 = vshrl.u32 %v377, 7
      %v379 = vsub.s32 0, %v378
      %v380 = vrot.slane %v376, %v379
      %v381 = vmul.f32 %v348, %v380
      %v382 = vmul.f32 %v349, %v380
      %v383 = vmul.f32 %v350, %v380
      %v384 = vmul.f32 %v351, %v380
      %v385 = vmul.f32 %v352, %v380
      %v386 = vmul.f32 %v353, %v380
      %v387 = vmul.f32 %v354, %v380
      %v388 = vmul.f32 %v355, %v380
      %v389 = vmul.f32 %v356, %v380
      %v390 = vmul.f32 %v357, %v380
      %v391 = vmul.f32 %v358, %v380
      %v392 = vmul.f32 %v359, %v380
      %v393 = vmul.f32 %v360, %v380
      %v394 = vmul.f32 %v361, %v380
      %v395 = vmul.f32 %v362, %v380
      %v396 = vmul.f32 %v363, %v380
      %v397 = vmul.f32 %v364, %v380
      %v398 = vmul.f32 %v365, %v380
      %v399 = vmul.f32 %v366, %v380
      %v400 = vmul.f32 %v367, %v380
      %v401 = vmul.f32 %v368, %v380
      %v402 = vmul.f32 %v369, %v380
      %v403 = vmul.f32 %v370, %v380
      %v404 = vmul.f32 %v371, %v380
      %v405 = vmul.f32 %v372, %v380
      %v406 = vmul.f32 %v373, %v380
      %v407 = vmul.f32 %v374, %v380
      %v408 = vmul.f32 %v375, %v380
      %v409 = vadd.f32 %v320, %v381
      %v410 = vadd.f32 %v321, %v382
      %v411 = vadd.f32 %v322, %v383
      %v412 = vadd.f32 %v323, %v384
      %v413 = vadd.f32 %v324, %v385
      %v414 = vadd.f32 %v325, %v386
      %v415 = vadd.f32 %v326, %v387
      %v416 = vadd.f32 %v327, %v388
      %v417 = vadd.f32 %v328, %v389
      %v418 = vadd.f32 %v329, %v390
      %v419 = vadd.f32 %v330, %v391
      %v420 = vadd.f32 %v331, %v392
      %v421 = vadd.f32 %v332, %v393
      %v422 = vadd.f32 %v333, %v394
      %v423 = vadd.f32 %v334, %v395
      %v424 = vadd.f32 %v335, %v396
      %v425 = vadd.f32 %v336, %v397
      %v426 = vadd.f32 %v337, %v398
      %v427 = vadd.f32 %v338, %v399
      %v428 = vadd.f32 %v339, %v400
      %v429 = vadd.f32 %v340, %v401
      %v430 = vadd.f32 %v341, %v402
      %v431 = vadd.f32 %v342, %v403
      %v432 = vadd.f32 %v343, %v404
      %v433 = vadd.f32 %v344, %v405
      %v434 = vadd.f32 %v345, %v406
      %v435 = vadd.f32 %v346, %v407
      %v436 = vadd.f32 %v347, %v408
      %v437 = vld [vmem:[%s258 + $0x1] sm:$0xff]
      %v438 = vld [vmem:[%s258 + $0x9] sm:$0xff]
      %v439 = vld [vmem:[%s258 + $0x11] sm:$0xff]
      %v440 = vld [vmem:[%s258 + $0x19] sm:$0xf]
      %v441 = vld [vmem:[%s258 + $0x21] sm:$0xff]
      %v442 = vld [vmem:[%s258 + $0x29] sm:$0xff]
      %v443 = vld [vmem:[%s258 + $0x31] sm:$0xff]
      %v444 = vld [vmem:[%s258 + $0x39] sm:$0xf]
      %v445 = vld [vmem:[%s258 + $0x41] sm:$0xff]
      %v446 = vld [vmem:[%s258 + $0x49] sm:$0xff]
      %v447 = vld [vmem:[%s258 + $0x51] sm:$0xff]
      %v448 = vld [vmem:[%s258 + $0x59] sm:$0xf]
      %v449 = vld [vmem:[%s258 + $0x61] sm:$0xff]
      %v450 = vld [vmem:[%s258 + $0x69] sm:$0xff]
      %v451 = vld [vmem:[%s258 + $0x71] sm:$0xff]
      %v452 = vld [vmem:[%s258 + $0x79] sm:$0xf]
      %v453 = vld [vmem:[%s258 + $0x81] sm:$0xff]
      %v454 = vld [vmem:[%s258 + $0x89] sm:$0xff]
      %v455 = vld [vmem:[%s258 + $0x91] sm:$0xff]
      %v456 = vld [vmem:[%s258 + $0x99] sm:$0xf]
      %v457 = vld [vmem:[%s258 + $0xa1] sm:$0xff]
      %v458 = vld [vmem:[%s258 + $0xa9] sm:$0xff]
      %v459 = vld [vmem:[%s258 + $0xb1] sm:$0xff]
      %v460 = vld [vmem:[%s258 + $0xb9] sm:$0xf]
      %v461 = vld [vmem:[%s258 + $0xc1] sm:$0xff]
      %v462 = vld [vmem:[%s258 + $0xc9] sm:$0xff]
      %v463 = vld [vmem:[%s258 + $0xd1] sm:$0xff]
      %v464 = vld [vmem:[%s258 + $0xd9] sm:$0xf]
      %v465 = vld [vmem:[%s1 + $0x3] sm:$0x1]
      %v466 = vlaneseq
      %v467 = vshrl.u32 %v466, 7
      %v468 = vsub.s32 0, %v467
      %v469 = vrot.slane %v465, %v468
      %v470 = vmul.f32 %v437, %v469
      %v471 = vmul.f32 %v438, %v469
      %v472 = vmul.f32 %v439, %v469
      %v473 = vmul.f32 %v440, %v469
      %v474 = vmul.f32 %v441, %v469
      %v475 = vmul.f32 %v442, %v469
      %v476 = vmul.f32 %v443, %v469
      %v477 = vmul.f32 %v444, %v469
      %v478 = vmul.f32 %v445, %v469
      %v479 = vmul.f32 %v446, %v469
      %v480 = vmul.f32 %v447, %v469
      %v481 = vmul.f32 %v448, %v469
      %v482 = vmul.f32 %v449, %v469
      %v483 = vmul.f32 %v450, %v469
      %v484 = vmul.f32 %v451, %v469
      %v485 = vmul.f32 %v452, %v469
      %v486 = vmul.f32 %v453, %v469
      %v487 = vmul.f32 %v454, %v469
      %v488 = vmul.f32 %v455, %v469
      %v489 = vmul.f32 %v456, %v469
      %v490 = vmul.f32 %v457, %v469
      %v491 = vmul.f32 %v458, %v469
      %v492 = vmul.f32 %v459, %v469
      %v493 = vmul.f32 %v460, %v469
      %v494 = vmul.f32 %v461, %v469
      %v495 = vmul.f32 %v462, %v469
      %v496 = vmul.f32 %v463, %v469
      %v497 = vmul.f32 %v464, %v469
      %v498 = vadd.f32 %v409, %v470
      %v499 = vadd.f32 %v410, %v471
      %v500 = vadd.f32 %v411, %v472
      %v501 = vadd.f32 %v412, %v473
      %v502 = vadd.f32 %v413, %v474
      %v503 = vadd.f32 %v414, %v475
      %v504 = vadd.f32 %v415, %v476
      %v505 = vadd.f32 %v416, %v477
      %v506 = vadd.f32 %v417, %v478
      %v507 = vadd.f32 %v418, %v479
      %v508 = vadd.f32 %v419, %v480
      %v509 = vadd.f32 %v420, %v481
      %v510 = vadd.f32 %v421, %v482
      %v511 = vadd.f32 %v422, %v483
      %v512 = vadd.f32 %v423, %v484
      %v513 = vadd.f32 %v424, %v485
      %v514 = vadd.f32 %v425, %v486
      %v515 = vadd.f32 %v426, %v487
      %v516 = vadd.f32 %v427, %v488
      %v517 = vadd.f32 %v428, %v489
      %v518 = vadd.f32 %v429, %v490
      %v519 = vadd.f32 %v430, %v491
      %v520 = vadd.f32 %v431, %v492
      %v521 = vadd.f32 %v432, %v493
      %v522 = vadd.f32 %v433, %v494
      %v523 = vadd.f32 %v434, %v495
      %v524 = vadd.f32 %v435, %v496
      %v525 = vadd.f32 %v436, %v497
      %v526 = vld [vmem:[%s167 + $0x2] sm:$0xff]
      %v527 = vld [vmem:[%s167 + $0xa] sm:$0xff]
      %v528 = vld [vmem:[%s167 + $0x12] sm:$0xff]
      %v529 = vld [vmem:[%s167 + $0x1a] sm:$0xf]
      %v530 = vld [vmem:[%s167 + $0x22] sm:$0xff]
      %v531 = vld [vmem:[%s167 + $0x2a] sm:$0xff]
      %v532 = vld [vmem:[%s167 + $0x32] sm:$0xff]
      %v533 = vld [vmem:[%s167 + $0x3a] sm:$0xf]
      %v534 = vld [vmem:[%s167 + $0x42] sm:$0xff]
      %v535 = vld [vmem:[%s167 + $0x4a] sm:$0xff]
      %v536 = vld [vmem:[%s167 + $0x52] sm:$0xff]
      %v537 = vld [vmem:[%s167 + $0x5a] sm:$0xf]
      %v538 = vld [vmem:[%s167 + $0x62] sm:$0xff]
      %v539 = vld [vmem:[%s167 + $0x6a] sm:$0xff]
      %v540 = vld [vmem:[%s167 + $0x72] sm:$0xff]
      %v541 = vld [vmem:[%s167 + $0x7a] sm:$0xf]
      %v542 = vld [vmem:[%s167 + $0x82] sm:$0xff]
      %v543 = vld [vmem:[%s167 + $0x8a] sm:$0xff]
      %v544 = vld [vmem:[%s167 + $0x92] sm:$0xff]
      %v545 = vld [vmem:[%s167 + $0x9a] sm:$0xf]
      %v546 = vld [vmem:[%s167 + $0xa2] sm:$0xff]
      %v547 = vld [vmem:[%s167 + $0xaa] sm:$0xff]
      %v548 = vld [vmem:[%s167 + $0xb2] sm:$0xff]
      %v549 = vld [vmem:[%s167 + $0xba] sm:$0xf]
      %v550 = vld [vmem:[%s167 + $0xc2] sm:$0xff]
      %v551 = vld [vmem:[%s167 + $0xca] sm:$0xff]
      %v552 = vld [vmem:[%s167 + $0xd2] sm:$0xff]
      %v553 = vld [vmem:[%s167 + $0xda] sm:$0xf]
      %v554 = vld [vmem:[%s1 + $0x4] sm:$0x1]
      %v555 = vlaneseq
      %v556 = vshrl.u32 %v555, 7
      %v557 = vsub.s32 0, %v556
      %v558 = vrot.slane %v554, %v557
      %v559 = vmul.f32 %v526, %v558
      %v560 = vmul.f32 %v527, %v558
      %v561 = vmul.f32 %v528, %v558
      %v562 = vmul.f32 %v529, %v558
      %v563 = vmul.f32 %v530, %v558
      %v564 = vmul.f32 %v531, %v558
      %v565 = vmul.f32 %v532, %v558
      %v566 = vmul.f32 %v533, %v558
      %v567 = vmul.f32 %v534, %v558
      %v568 = vmul.f32 %v535, %v558
      %v569 = vmul.f32 %v536, %v558
      %v570 = vmul.f32 %v537, %v558
      %v571 = vmul.f32 %v538, %v558
      %v572 = vmul.f32 %v539, %v558
      %v573 = vmul.f32 %v540, %v558
      %v574 = vmul.f32 %v541, %v558
      %v575 = vmul.f32 %v542, %v558
      %v576 = vmul.f32 %v543, %v558
      %v577 = vmul.f32 %v544, %v558
      %v578 = vmul.f32 %v545, %v558
      %v579 = vmul.f32 %v546, %v558
      %v580 = vmul.f32 %v547, %v558
      %v581 = vmul.f32 %v548, %v558
      %v582 = vmul.f32 %v549, %v558
      %v583 = vmul.f32 %v550, %v558
      %v584 = vmul.f32 %v551, %v558
      %v585 = vmul.f32 %v552, %v558
      %v586 = vmul.f32 %v553, %v558
      %v587 = vadd.f32 %v498, %v559
      %v588 = vadd.f32 %v499, %v560
      %v589 = vadd.f32 %v500, %v561
      %v590 = vadd.f32 %v501, %v562
      %v591 = vadd.f32 %v502, %v563
      %v592 = vadd.f32 %v503, %v564
      %v593 = vadd.f32 %v504, %v565
      %v594 = vadd.f32 %v505, %v566
      %v595 = vadd.f32 %v506, %v567
      %v596 = vadd.f32 %v507, %v568
      %v597 = vadd.f32 %v508, %v569
      %v598 = vadd.f32 %v509, %v570
      %v599 = vadd.f32 %v510, %v571
      %v600 = vadd.f32 %v511, %v572
      %v601 = vadd.f32 %v512, %v573
      %v602 = vadd.f32 %v513, %v574
      %v603 = vadd.f32 %v514, %v575
      %v604 = vadd.f32 %v515, %v576
      %v605 = vadd.f32 %v516, %v577
      %v606 = vadd.f32 %v517, %v578
      %v607 = vadd.f32 %v518, %v579
      %v608 = vadd.f32 %v519, %v580
      %v609 = vadd.f32 %v520, %v581
      %v610 = vadd.f32 %v521, %v582
      %v611 = vadd.f32 %v522, %v583
      %v612 = vadd.f32 %v523, %v584
      %v613 = vadd.f32 %v524, %v585
      %v614 = vadd.f32 %v525, %v586
      %s615 = scalar_lea.vmem %s0, 1920
      %s616 = scalar_lea.vmem %s615, %s166
      %v617 = vld [vmem:[%s616] sm:$0xff]
      %v618 = vld [vmem:[%s616 + $0x8] sm:$0xff]
      %v619 = vld [vmem:[%s616 + $0x10] sm:$0xff]
      %v620 = vld [vmem:[%s616 + $0x18] sm:$0xf]
      %v621 = vld [vmem:[%s616 + $0x20] sm:$0xff]
      %v622 = vld [vmem:[%s616 + $0x28] sm:$0xff]
      %v623 = vld [vmem:[%s616 + $0x30] sm:$0xff]
      %v624 = vld [vmem:[%s616 + $0x38] sm:$0xf]
      %v625 = vld [vmem:[%s616 + $0x40] sm:$0xff]
      %v626 = vld [vmem:[%s616 + $0x48] sm:$0xff]
      %v627 = vld [vmem:[%s616 + $0x50] sm:$0xff]
      %v628 = vld [vmem:[%s616 + $0x58] sm:$0xf]
      %v629 = vld [vmem:[%s616 + $0x60] sm:$0xff]
      %v630 = vld [vmem:[%s616 + $0x68] sm:$0xff]
      %v631 = vld [vmem:[%s616 + $0x70] sm:$0xff]
      %v632 = vld [vmem:[%s616 + $0x78] sm:$0xf]
      %v633 = vld [vmem:[%s616 + $0x80] sm:$0xff]
      %v634 = vld [vmem:[%s616 + $0x88] sm:$0xff]
      %v635 = vld [vmem:[%s616 + $0x90] sm:$0xff]
      %v636 = vld [vmem:[%s616 + $0x98] sm:$0xf]
      %v637 = vld [vmem:[%s616 + $0xa0] sm:$0xff]
      %v638 = vld [vmem:[%s616 + $0xa8] sm:$0xff]
      %v639 = vld [vmem:[%s616 + $0xb0] sm:$0xff]
      %v640 = vld [vmem:[%s616 + $0xb8] sm:$0xf]
      %v641 = vld [vmem:[%s616 + $0xc0] sm:$0xff]
      %v642 = vld [vmem:[%s616 + $0xc8] sm:$0xff]
      %v643 = vld [vmem:[%s616 + $0xd0] sm:$0xff]
      %v644 = vld [vmem:[%s616 + $0xd8] sm:$0xf]
      %v645 = vld [vmem:[%s1 + $0x5] sm:$0x1]
      %v646 = vlaneseq
      %v647 = vshrl.u32 %v646, 7
      %v648 = vsub.s32 0, %v647
      %v649 = vrot.slane %v645, %v648
      %v650 = vmul.f32 %v617, %v649
      %v651 = vmul.f32 %v618, %v649
      %v652 = vmul.f32 %v619, %v649
      %v653 = vmul.f32 %v620, %v649
      %v654 = vmul.f32 %v621, %v649
      %v655 = vmul.f32 %v622, %v649
      %v656 = vmul.f32 %v623, %v649
      %v657 = vmul.f32 %v624, %v649
      %v658 = vmul.f32 %v625, %v649
      %v659 = vmul.f32 %v626, %v649
      %v660 = vmul.f32 %v627, %v649
      %v661 = vmul.f32 %v628, %v649
      %v662 = vmul.f32 %v629, %v649
      %v663 = vmul.f32 %v630, %v649
      %v664 = vmul.f32 %v631, %v649
      %v665 = vmul.f32 %v632, %v649
      %v666 = vmul.f32 %v633, %v649
      %v667 = vmul.f32 %v634, %v649
      %v668 = vmul.f32 %v635, %v649
      %v669 = vmul.f32 %v636, %v649
      %v670 = vmul.f32 %v637, %v649
      %v671 = vmul.f32 %v638, %v649
      %v672 = vmul.f32 %v639, %v649
      %v673 = vmul.f32 %v640, %v649
      %v674 = vmul.f32 %v641, %v649
      %v675 = vmul.f32 %v642, %v649
      %v676 = vmul.f32 %v643, %v649
      %v677 = vmul.f32 %v644, %v649
      %v678 = vadd.f32 %v587, %v650
      %v679 = vadd.f32 %v588, %v651
      %v680 = vadd.f32 %v589, %v652
      %v681 = vadd.f32 %v590, %v653
      %v682 = vadd.f32 %v591, %v654
      %v683 = vadd.f32 %v592, %v655
      %v684 = vadd.f32 %v593, %v656
      %v685 = vadd.f32 %v594, %v657
      %v686 = vadd.f32 %v595, %v658
      %v687 = vadd.f32 %v596, %v659
      %v688 = vadd.f32 %v597, %v660
      %v689 = vadd.f32 %v598, %v661
      %v690 = vadd.f32 %v599, %v662
      %v691 = vadd.f32 %v600, %v663
      %v692 = vadd.f32 %v601, %v664
      %v693 = vadd.f32 %v602, %v665
      %v694 = vadd.f32 %v603, %v666
      %v695 = vadd.f32 %v604, %v667
      %v696 = vadd.f32 %v605, %v668
      %v697 = vadd.f32 %v606, %v669
      %v698 = vadd.f32 %v607, %v670
      %v699 = vadd.f32 %v608, %v671
      %v700 = vadd.f32 %v609, %v672
      %v701 = vadd.f32 %v610, %v673
      %v702 = vadd.f32 %v611, %v674
      %v703 = vadd.f32 %v612, %v675
      %v704 = vadd.f32 %v613, %v676
      %v705 = vadd.f32 %v614, %v677
      %s706 = scalar_lea.vmem %s0, 2880
      %s707 = scalar_lea.vmem %s706, %s166
      %v708 = vld [vmem:[%s707] sm:$0xff]
      %v709 = vld [vmem:[%s707 + $0x8] sm:$0xff]
      %v710 = vld [vmem:[%s707 + $0x10] sm:$0xff]
      %v711 = vld [vmem:[%s707 + $0x18] sm:$0xf]
      %v712 = vld [vmem:[%s707 + $0x20] sm:$0xff]
      %v713 = vld [vmem:[%s707 + $0x28] sm:$0xff]
      %v714 = vld [vmem:[%s707 + $0x30] sm:$0xff]
      %v715 = vld [vmem:[%s707 + $0x38] sm:$0xf]
      %v716 = vld [vmem:[%s707 + $0x40] sm:$0xff]
      %v717 = vld [vmem:[%s707 + $0x48] sm:$0xff]
      %v718 = vld [vmem:[%s707 + $0x50] sm:$0xff]
      %v719 = vld [vmem:[%s707 + $0x58] sm:$0xf]
      %v720 = vld [vmem:[%s707 + $0x60] sm:$0xff]
      %v721 = vld [vmem:[%s707 + $0x68] sm:$0xff]
      %v722 = vld [vmem:[%s707 + $0x70] sm:$0xff]
      %v723 = vld [vmem:[%s707 + $0x78] sm:$0xf]
      %v724 = vld [vmem:[%s707 + $0x80] sm:$0xff]
      %v725 = vld [vmem:[%s707 + $0x88] sm:$0xff]
      %v726 = vld [vmem:[%s707 + $0x90] sm:$0xff]
      %v727 = vld [vmem:[%s707 + $0x98] sm:$0xf]
      %v728 = vld [vmem:[%s707 + $0xa0] sm:$0xff]
      %v729 = vld [vmem:[%s707 + $0xa8] sm:$0xff]
      %v730 = vld [vmem:[%s707 + $0xb0] sm:$0xff]
      %v731 = vld [vmem:[%s707 + $0xb8] sm:$0xf]
      %v732 = vld [vmem:[%s707 + $0xc0] sm:$0xff]
      %v733 = vld [vmem:[%s707 + $0xc8] sm:$0xff]
      %v734 = vld [vmem:[%s707 + $0xd0] sm:$0xff]
      %v735 = vld [vmem:[%s707 + $0xd8] sm:$0xf]
      %v736 = vld [vmem:[%s1 + $0x6] sm:$0x1]
      %v737 = vlaneseq
      %v738 = vshrl.u32 %v737, 7
      %v739 = vsub.s32 0, %v738
      %v740 = vrot.slane %v736, %v739
      %v741 = vmul.f32 %v708, %v740
      %v742 = vmul.f32 %v709, %v740
      %v743 = vmul.f32 %v710, %v740
      %v744 = vmul.f32 %v711, %v740
      %v745 = vmul.f32 %v712, %v740
      %v746 = vmul.f32 %v713, %v740
      %v747 = vmul.f32 %v714, %v740
      %v748 = vmul.f32 %v715, %v740
      %v749 = vmul.f32 %v716, %v740
      %v750 = vmul.f32 %v717, %v740
      %v751 = vmul.f32 %v718, %v740
      %v752 = vmul.f32 %v719, %v740
      %v753 = vmul.f32 %v720, %v740
      %v754 = vmul.f32 %v721, %v740
      %v755 = vmul.f32 %v722, %v740
      %v756 = vmul.f32 %v723, %v740
      %v757 = vmul.f32 %v724, %v740
      %v758 = vmul.f32 %v725, %v740
      %v759 = vmul.f32 %v726, %v740
      %v760 = vmul.f32 %v727, %v740
      %v761 = vmul.f32 %v728, %v740
      %v762 = vmul.f32 %v729, %v740
      %v763 = vmul.f32 %v730, %v740
      %v764 = vmul.f32 %v731, %v740
      %v765 = vmul.f32 %v732, %v740
      %v766 = vmul.f32 %v733, %v740
      %v767 = vmul.f32 %v734, %v740
      %v768 = vmul.f32 %v735, %v740
      %v769 = vadd.f32 %v678, %v741
      %v770 = vadd.f32 %v679, %v742
      %v771 = vadd.f32 %v680, %v743
      %v772 = vadd.f32 %v681, %v744
      %v773 = vadd.f32 %v682, %v745
      %v774 = vadd.f32 %v683, %v746
      %v775 = vadd.f32 %v684, %v747
      %v776 = vadd.f32 %v685, %v748
      %v777 = vadd.f32 %v686, %v749
      %v778 = vadd.f32 %v687, %v750
      %v779 = vadd.f32 %v688, %v751
      %v780 = vadd.f32 %v689, %v752
      %v781 = vadd.f32 %v690, %v753
      %v782 = vadd.f32 %v691, %v754
      %v783 = vadd.f32 %v692, %v755
      %v784 = vadd.f32 %v693, %v756
      %v785 = vadd.f32 %v694, %v757
      %v786 = vadd.f32 %v695, %v758
      %v787 = vadd.f32 %v696, %v759
      %v788 = vadd.f32 %v697, %v760
      %v789 = vadd.f32 %v698, %v761
      %v790 = vadd.f32 %v699, %v762
      %v791 = vadd.f32 %v700, %v763
      %v792 = vadd.f32 %v701, %v764
      %v793 = vadd.f32 %v702, %v765
      %v794 = vadd.f32 %v703, %v766
      %v795 = vadd.f32 %v704, %v767
      %v796 = vadd.f32 %v705, %v768
      %v797 = vld [vmem:[%s616 + $0x1] sm:$0xff]
      %v798 = vld [vmem:[%s616 + $0x9] sm:$0xff]
      %v799 = vld [vmem:[%s616 + $0x11] sm:$0xff]
      %v800 = vld [vmem:[%s616 + $0x19] sm:$0xf]
      %v801 = vld [vmem:[%s616 + $0x21] sm:$0xff]
      %v802 = vld [vmem:[%s616 + $0x29] sm:$0xff]
      %v803 = vld [vmem:[%s616 + $0x31] sm:$0xff]
      %v804 = vld [vmem:[%s616 + $0x39] sm:$0xf]
      %v805 = vld [vmem:[%s616 + $0x41] sm:$0xff]
      %v806 = vld [vmem:[%s616 + $0x49] sm:$0xff]
      %v807 = vld [vmem:[%s616 + $0x51] sm:$0xff]
      %v808 = vld [vmem:[%s616 + $0x59] sm:$0xf]
      %v809 = vld [vmem:[%s616 + $0x61] sm:$0xff]
      %v810 = vld [vmem:[%s616 + $0x69] sm:$0xff]
      %v811 = vld [vmem:[%s616 + $0x71] sm:$0xff]
      %v812 = vld [vmem:[%s616 + $0x79] sm:$0xf]
      %v813 = vld [vmem:[%s616 + $0x81] sm:$0xff]
      %v814 = vld [vmem:[%s616 + $0x89] sm:$0xff]
      %v815 = vld [vmem:[%s616 + $0x91] sm:$0xff]
      %v816 = vld [vmem:[%s616 + $0x99] sm:$0xf]
      %v817 = vld [vmem:[%s616 + $0xa1] sm:$0xff]
      %v818 = vld [vmem:[%s616 + $0xa9] sm:$0xff]
      %v819 = vld [vmem:[%s616 + $0xb1] sm:$0xff]
      %v820 = vld [vmem:[%s616 + $0xb9] sm:$0xf]
      %v821 = vld [vmem:[%s616 + $0xc1] sm:$0xff]
      %v822 = vld [vmem:[%s616 + $0xc9] sm:$0xff]
      %v823 = vld [vmem:[%s616 + $0xd1] sm:$0xff]
      %v824 = vld [vmem:[%s616 + $0xd9] sm:$0xf]
      %v825 = vld [vmem:[%s1 + $0x7] sm:$0x1]
      %v826 = vlaneseq
      %v827 = vshrl.u32 %v826, 7
      %v828 = vsub.s32 0, %v827
      %v829 = vrot.slane %v825, %v828
      %v830 = vmul.f32 %v797, %v829
      %v831 = vmul.f32 %v798, %v829
      %v832 = vmul.f32 %v799, %v829
      %v833 = vmul.f32 %v800, %v829
      %v834 = vmul.f32 %v801, %v829
      %v835 = vmul.f32 %v802, %v829
      %v836 = vmul.f32 %v803, %v829
      %v837 = vmul.f32 %v804, %v829
      %v838 = vmul.f32 %v805, %v829
      %v839 = vmul.f32 %v806, %v829
      %v840 = vmul.f32 %v807, %v829
      %v841 = vmul.f32 %v808, %v829
      %v842 = vmul.f32 %v809, %v829
      %v843 = vmul.f32 %v810, %v829
      %v844 = vmul.f32 %v811, %v829
      %v845 = vmul.f32 %v812, %v829
      %v846 = vmul.f32 %v813, %v829
      %v847 = vmul.f32 %v814, %v829
      %v848 = vmul.f32 %v815, %v829
      %v849 = vmul.f32 %v816, %v829
      %v850 = vmul.f32 %v817, %v829
      %v851 = vmul.f32 %v818, %v829
      %v852 = vmul.f32 %v819, %v829
      %v853 = vmul.f32 %v820, %v829
      %v854 = vmul.f32 %v821, %v829
      %v855 = vmul.f32 %v822, %v829
      %v856 = vmul.f32 %v823, %v829
      %v857 = vmul.f32 %v824, %v829
      %v858 = vadd.f32 %v769, %v830
      %v859 = vadd.f32 %v770, %v831
      %v860 = vadd.f32 %v771, %v832
      %v861 = vadd.f32 %v772, %v833
      %v862 = vadd.f32 %v773, %v834
      %v863 = vadd.f32 %v774, %v835
      %v864 = vadd.f32 %v775, %v836
      %v865 = vadd.f32 %v776, %v837
      %v866 = vadd.f32 %v777, %v838
      %v867 = vadd.f32 %v778, %v839
      %v868 = vadd.f32 %v779, %v840
      %v869 = vadd.f32 %v780, %v841
      %v870 = vadd.f32 %v781, %v842
      %v871 = vadd.f32 %v782, %v843
      %v872 = vadd.f32 %v783, %v844
      %v873 = vadd.f32 %v784, %v845
      %v874 = vadd.f32 %v785, %v846
      %v875 = vadd.f32 %v786, %v847
      %v876 = vadd.f32 %v787, %v848
      %v877 = vadd.f32 %v788, %v849
      %v878 = vadd.f32 %v789, %v850
      %v879 = vadd.f32 %v790, %v851
      %v880 = vadd.f32 %v791, %v852
      %v881 = vadd.f32 %v792, %v853
      %v882 = vadd.f32 %v793, %v854
      %v883 = vadd.f32 %v794, %v855
      %v884 = vadd.f32 %v795, %v856
      %v885 = vadd.f32 %v796, %v857
      %v886 = vld [vmem:[%s707 + $0x1] sm:$0xff]
      %v887 = vld [vmem:[%s707 + $0x9] sm:$0xff]
      %v888 = vld [vmem:[%s707 + $0x11] sm:$0xff]
      %v889 = vld [vmem:[%s707 + $0x19] sm:$0xf]
      %v890 = vld [vmem:[%s707 + $0x21] sm:$0xff]
      %v891 = vld [vmem:[%s707 + $0x29] sm:$0xff]
      %v892 = vld [vmem:[%s707 + $0x31] sm:$0xff]
      %v893 = vld [vmem:[%s707 + $0x39] sm:$0xf]
      %v894 = vld [vmem:[%s707 + $0x41] sm:$0xff]
      %v895 = vld [vmem:[%s707 + $0x49] sm:$0xff]
      %v896 = vld [vmem:[%s707 + $0x51] sm:$0xff]
      %v897 = vld [vmem:[%s707 + $0x59] sm:$0xf]
      %v898 = vld [vmem:[%s707 + $0x61] sm:$0xff]
      %v899 = vld [vmem:[%s707 + $0x69] sm:$0xff]
      %v900 = vld [vmem:[%s707 + $0x71] sm:$0xff]
      %v901 = vld [vmem:[%s707 + $0x79] sm:$0xf]
      %v902 = vld [vmem:[%s707 + $0x81] sm:$0xff]
      %v903 = vld [vmem:[%s707 + $0x89] sm:$0xff]
      %v904 = vld [vmem:[%s707 + $0x91] sm:$0xff]
      %v905 = vld [vmem:[%s707 + $0x99] sm:$0xf]
      %v906 = vld [vmem:[%s707 + $0xa1] sm:$0xff]
      %v907 = vld [vmem:[%s707 + $0xa9] sm:$0xff]
      %v908 = vld [vmem:[%s707 + $0xb1] sm:$0xff]
      %v909 = vld [vmem:[%s707 + $0xb9] sm:$0xf]
      %v910 = vld [vmem:[%s707 + $0xc1] sm:$0xff]
      %v911 = vld [vmem:[%s707 + $0xc9] sm:$0xff]
      %v912 = vld [vmem:[%s707 + $0xd1] sm:$0xff]
      %v913 = vld [vmem:[%s707 + $0xd9] sm:$0xf]
      %v914 = vld [vmem:[%s1 + $0x8] sm:$0x1]
      %v915 = vlaneseq
      %v916 = vshrl.u32 %v915, 7
      %v917 = vsub.s32 0, %v916
      %v918 = vrot.slane %v914, %v917
      %v919 = vmul.f32 %v886, %v918
      %v920 = vmul.f32 %v887, %v918
      %v921 = vmul.f32 %v888, %v918
      %v922 = vmul.f32 %v889, %v918
      %v923 = vmul.f32 %v890, %v918
      %v924 = vmul.f32 %v891, %v918
      %v925 = vmul.f32 %v892, %v918
      %v926 = vmul.f32 %v893, %v918
      %v927 = vmul.f32 %v894, %v918
      %v928 = vmul.f32 %v895, %v918
      %v929 = vmul.f32 %v896, %v918
      %v930 = vmul.f32 %v897, %v918
      %v931 = vmul.f32 %v898, %v918
      %v932 = vmul.f32 %v899, %v918
      %v933 = vmul.f32 %v900, %v918
      %v934 = vmul.f32 %v901, %v918
      %v935 = vmul.f32 %v902, %v918
      %v936 = vmul.f32 %v903, %v918
      %v937 = vmul.f32 %v904, %v918
      %v938 = vmul.f32 %v905, %v918
      %v939 = vmul.f32 %v906, %v918
      %v940 = vmul.f32 %v907, %v918
      %v941 = vmul.f32 %v908, %v918
      %v942 = vmul.f32 %v909, %v918
      %v943 = vmul.f32 %v910, %v918
      %v944 = vmul.f32 %v911, %v918
      %v945 = vmul.f32 %v912, %v918
      %v946 = vmul.f32 %v913, %v918
      %v947 = vadd.f32 %v858, %v919
      %v948 = vadd.f32 %v859, %v920
      %v949 = vadd.f32 %v860, %v921
      %v950 = vadd.f32 %v861, %v922
      %v951 = vadd.f32 %v862, %v923
      %v952 = vadd.f32 %v863, %v924
      %v953 = vadd.f32 %v864, %v925
      %v954 = vadd.f32 %v865, %v926
      %v955 = vadd.f32 %v866, %v927
      %v956 = vadd.f32 %v867, %v928
      %v957 = vadd.f32 %v868, %v929
      %v958 = vadd.f32 %v869, %v930
      %v959 = vadd.f32 %v870, %v931
      %v960 = vadd.f32 %v871, %v932
      %v961 = vadd.f32 %v872, %v933
      %v962 = vadd.f32 %v873, %v934
      %v963 = vadd.f32 %v874, %v935
      %v964 = vadd.f32 %v875, %v936
      %v965 = vadd.f32 %v876, %v937
      %v966 = vadd.f32 %v877, %v938
      %v967 = vadd.f32 %v878, %v939
      %v968 = vadd.f32 %v879, %v940
      %v969 = vadd.f32 %v880, %v941
      %v970 = vadd.f32 %v881, %v942
      %v971 = vadd.f32 %v882, %v943
      %v972 = vadd.f32 %v883, %v944
      %v973 = vadd.f32 %v884, %v945
      %v974 = vadd.f32 %v885, %v946
      %v975 = vld [vmem:[%s616 + $0x2] sm:$0xff]
      %v976 = vld [vmem:[%s616 + $0xa] sm:$0xff]
      %v977 = vld [vmem:[%s616 + $0x12] sm:$0xff]
      %v978 = vld [vmem:[%s616 + $0x1a] sm:$0xf]
      %v979 = vld [vmem:[%s616 + $0x22] sm:$0xff]
      %v980 = vld [vmem:[%s616 + $0x2a] sm:$0xff]
      %v981 = vld [vmem:[%s616 + $0x32] sm:$0xff]
      %v982 = vld [vmem:[%s616 + $0x3a] sm:$0xf]
      %v983 = vld [vmem:[%s616 + $0x42] sm:$0xff]
      %v984 = vld [vmem:[%s616 + $0x4a] sm:$0xff]
      %v985 = vld [vmem:[%s616 + $0x52] sm:$0xff]
      %v986 = vld [vmem:[%s616 + $0x5a] sm:$0xf]
      %v987 = vld [vmem:[%s616 + $0x62] sm:$0xff]
      %v988 = vld [vmem:[%s616 + $0x6a] sm:$0xff]
      %v989 = vld [vmem:[%s616 + $0x72] sm:$0xff]
      %v990 = vld [vmem:[%s616 + $0x7a] sm:$0xf]
      %v991 = vld [vmem:[%s616 + $0x82] sm:$0xff]
      %v992 = vld [vmem:[%s616 + $0x8a] sm:$0xff]
      %v993 = vld [vmem:[%s616 + $0x92] sm:$0xff]
      %v994 = vld [vmem:[%s616 + $0x9a] sm:$0xf]
      %v995 = vld [vmem:[%s616 + $0xa2] sm:$0xff]
      %v996 = vld [vmem:[%s616 + $0xaa] sm:$0xff]
      %v997 = vld [vmem:[%s616 + $0xb2] sm:$0xff]
      %v998 = vld [vmem:[%s616 + $0xba] sm:$0xf]
      %v999 = vld [vmem:[%s616 + $0xc2] sm:$0xff]
      %v1000 = vld [vmem:[%s616 + $0xca] sm:$0xff]
      %v1001 = vld [vmem:[%s616 + $0xd2] sm:$0xff]
      %v1002 = vld [vmem:[%s616 + $0xda] sm:$0xf]
      %v1003 = vld [vmem:[%s1 + $0x9] sm:$0x1]
      %v1004 = vlaneseq
      %v1005 = vshrl.u32 %v1004, 7
      %v1006 = vsub.s32 0, %v1005
      %v1007 = vrot.slane %v1003, %v1006
      %v1008 = vmul.f32 %v975, %v1007
      %v1009 = vmul.f32 %v976, %v1007
      %v1010 = vmul.f32 %v977, %v1007
      %v1011 = vmul.f32 %v978, %v1007
      %v1012 = vmul.f32 %v979, %v1007
      %v1013 = vmul.f32 %v980, %v1007
      %v1014 = vmul.f32 %v981, %v1007
      %v1015 = vmul.f32 %v982, %v1007
      %v1016 = vmul.f32 %v983, %v1007
      %v1017 = vmul.f32 %v984, %v1007
      %v1018 = vmul.f32 %v985, %v1007
      %v1019 = vmul.f32 %v986, %v1007
      %v1020 = vmul.f32 %v987, %v1007
      %v1021 = vmul.f32 %v988, %v1007
      %v1022 = vmul.f32 %v989, %v1007
      %v1023 = vmul.f32 %v990, %v1007
      %v1024 = vmul.f32 %v991, %v1007
      %v1025 = vmul.f32 %v992, %v1007
      %v1026 = vmul.f32 %v993, %v1007
      %v1027 = vmul.f32 %v994, %v1007
      %v1028 = vmul.f32 %v995, %v1007
      %v1029 = vmul.f32 %v996, %v1007
      %v1030 = vmul.f32 %v997, %v1007
      %v1031 = vmul.f32 %v998, %v1007
      %v1032 = vmul.f32 %v999, %v1007
      %v1033 = vmul.f32 %v1000, %v1007
      %v1034 = vmul.f32 %v1001, %v1007
      %v1035 = vmul.f32 %v1002, %v1007
      %v1036 = vadd.f32 %v947, %v1008
      %v1037 = vadd.f32 %v948, %v1009
      %v1038 = vadd.f32 %v949, %v1010
      %v1039 = vadd.f32 %v950, %v1011
      %v1040 = vadd.f32 %v951, %v1012
      %v1041 = vadd.f32 %v952, %v1013
      %v1042 = vadd.f32 %v953, %v1014
      %v1043 = vadd.f32 %v954, %v1015
      %v1044 = vadd.f32 %v955, %v1016
      %v1045 = vadd.f32 %v956, %v1017
      %v1046 = vadd.f32 %v957, %v1018
      %v1047 = vadd.f32 %v958, %v1019
      %v1048 = vadd.f32 %v959, %v1020
      %v1049 = vadd.f32 %v960, %v1021
      %v1050 = vadd.f32 %v961, %v1022
      %v1051 = vadd.f32 %v962, %v1023
      %v1052 = vadd.f32 %v963, %v1024
      %v1053 = vadd.f32 %v964, %v1025
      %v1054 = vadd.f32 %v965, %v1026
      %v1055 = vadd.f32 %v966, %v1027
      %v1056 = vadd.f32 %v967, %v1028
      %v1057 = vadd.f32 %v968, %v1029
      %v1058 = vadd.f32 %v969, %v1030
      %v1059 = vadd.f32 %v970, %v1031
      %v1060 = vadd.f32 %v971, %v1032
      %v1061 = vadd.f32 %v972, %v1033
      %v1062 = vadd.f32 %v973, %v1034
      %v1063 = vadd.f32 %v974, %v1035
      %s1064 = sadd.s32 %s165, 1
      %s1065 = smul.u32 %s1064, 32
      %s1066 = scalar_lea.vmem %s0, %s1065
      %v1067 = vld [vmem:[%s1066] sm:$0xff]
      %v1068 = vld [vmem:[%s1066 + $0x8] sm:$0xff]
      %v1069 = vld [vmem:[%s1066 + $0x10] sm:$0xff]
      %v1070 = vld [vmem:[%s1066 + $0x18] sm:$0xf]
      %v1071 = vld [vmem:[%s1066 + $0x20] sm:$0xff]
      %v1072 = vld [vmem:[%s1066 + $0x28] sm:$0xff]
      %v1073 = vld [vmem:[%s1066 + $0x30] sm:$0xff]
      %v1074 = vld [vmem:[%s1066 + $0x38] sm:$0xf]
      %v1075 = vld [vmem:[%s1066 + $0x40] sm:$0xff]
      %v1076 = vld [vmem:[%s1066 + $0x48] sm:$0xff]
      %v1077 = vld [vmem:[%s1066 + $0x50] sm:$0xff]
      %v1078 = vld [vmem:[%s1066 + $0x58] sm:$0xf]
      %v1079 = vld [vmem:[%s1066 + $0x60] sm:$0xff]
      %v1080 = vld [vmem:[%s1066 + $0x68] sm:$0xff]
      %v1081 = vld [vmem:[%s1066 + $0x70] sm:$0xff]
      %v1082 = vld [vmem:[%s1066 + $0x78] sm:$0xf]
      %v1083 = vld [vmem:[%s1066 + $0x80] sm:$0xff]
      %v1084 = vld [vmem:[%s1066 + $0x88] sm:$0xff]
      %v1085 = vld [vmem:[%s1066 + $0x90] sm:$0xff]
      %v1086 = vld [vmem:[%s1066 + $0x98] sm:$0xf]
      %v1087 = vld [vmem:[%s1066 + $0xa0] sm:$0xff]
      %v1088 = vld [vmem:[%s1066 + $0xa8] sm:$0xff]
      %v1089 = vld [vmem:[%s1066 + $0xb0] sm:$0xff]
      %v1090 = vld [vmem:[%s1066 + $0xb8] sm:$0xf]
      %v1091 = vld [vmem:[%s1066 + $0xc0] sm:$0xff]
      %v1092 = vld [vmem:[%s1066 + $0xc8] sm:$0xff]
      %v1093 = vld [vmem:[%s1066 + $0xd0] sm:$0xff]
      %v1094 = vld [vmem:[%s1066 + $0xd8] sm:$0xf]
      %v1095 = vld [vmem:[%s1 + $0xa] sm:$0x1]
      %v1096 = vlaneseq
      %v1097 = vshrl.u32 %v1096, 7
      %v1098 = vsub.s32 0, %v1097
      %v1099 = vrot.slane %v1095, %v1098
      %v1100 = vmul.f32 %v1067, %v1099
      %v1101 = vmul.f32 %v1068, %v1099
      %v1102 = vmul.f32 %v1069, %v1099
      %v1103 = vmul.f32 %v1070, %v1099
      %v1104 = vmul.f32 %v1071, %v1099
      %v1105 = vmul.f32 %v1072, %v1099
      %v1106 = vmul.f32 %v1073, %v1099
      %v1107 = vmul.f32 %v1074, %v1099
      %v1108 = vmul.f32 %v1075, %v1099
      %v1109 = vmul.f32 %v1076, %v1099
      %v1110 = vmul.f32 %v1077, %v1099
      %v1111 = vmul.f32 %v1078, %v1099
      %v1112 = vmul.f32 %v1079, %v1099
      %v1113 = vmul.f32 %v1080, %v1099
      %v1114 = vmul.f32 %v1081, %v1099
      %v1115 = vmul.f32 %v1082, %v1099
      %v1116 = vmul.f32 %v1083, %v1099
      %v1117 = vmul.f32 %v1084, %v1099
      %v1118 = vmul.f32 %v1085, %v1099
      %v1119 = vmul.f32 %v1086, %v1099
      %v1120 = vmul.f32 %v1087, %v1099
      %v1121 = vmul.f32 %v1088, %v1099
      %v1122 = vmul.f32 %v1089, %v1099
      %v1123 = vmul.f32 %v1090, %v1099
      %v1124 = vmul.f32 %v1091, %v1099
      %v1125 = vmul.f32 %v1092, %v1099
      %v1126 = vmul.f32 %v1093, %v1099
      %v1127 = vmul.f32 %v1094, %v1099
      %v1128 = vadd.f32 %v1036, %v1100
      %v1129 = vadd.f32 %v1037, %v1101
      %v1130 = vadd.f32 %v1038, %v1102
      %v1131 = vadd.f32 %v1039, %v1103
      %v1132 = vadd.f32 %v1040, %v1104
      %v1133 = vadd.f32 %v1041, %v1105
      %v1134 = vadd.f32 %v1042, %v1106
      %v1135 = vadd.f32 %v1043, %v1107
      %v1136 = vadd.f32 %v1044, %v1108
      %v1137 = vadd.f32 %v1045, %v1109
      %v1138 = vadd.f32 %v1046, %v1110
      %v1139 = vadd.f32 %v1047, %v1111
      %v1140 = vadd.f32 %v1048, %v1112
      %v1141 = vadd.f32 %v1049, %v1113
      %v1142 = vadd.f32 %v1050, %v1114
      %v1143 = vadd.f32 %v1051, %v1115
      %v1144 = vadd.f32 %v1052, %v1116
      %v1145 = vadd.f32 %v1053, %v1117
      %v1146 = vadd.f32 %v1054, %v1118
      %v1147 = vadd.f32 %v1055, %v1119
      %v1148 = vadd.f32 %v1056, %v1120
      %v1149 = vadd.f32 %v1057, %v1121
      %v1150 = vadd.f32 %v1058, %v1122
      %v1151 = vadd.f32 %v1059, %v1123
      %v1152 = vadd.f32 %v1060, %v1124
      %v1153 = vadd.f32 %v1061, %v1125
      %v1154 = vadd.f32 %v1062, %v1126
      %v1155 = vadd.f32 %v1063, %v1127
      %s1156 = scalar_lea.vmem %s257, %s1065
      %v1157 = vld [vmem:[%s1156] sm:$0xff]
      %v1158 = vld [vmem:[%s1156 + $0x8] sm:$0xff]
      %v1159 = vld [vmem:[%s1156 + $0x10] sm:$0xff]
      %v1160 = vld [vmem:[%s1156 + $0x18] sm:$0xf]
      %v1161 = vld [vmem:[%s1156 + $0x20] sm:$0xff]
      %v1162 = vld [vmem:[%s1156 + $0x28] sm:$0xff]
      %v1163 = vld [vmem:[%s1156 + $0x30] sm:$0xff]
      %v1164 = vld [vmem:[%s1156 + $0x38] sm:$0xf]
      %v1165 = vld [vmem:[%s1156 + $0x40] sm:$0xff]
      %v1166 = vld [vmem:[%s1156 + $0x48] sm:$0xff]
      %v1167 = vld [vmem:[%s1156 + $0x50] sm:$0xff]
      %v1168 = vld [vmem:[%s1156 + $0x58] sm:$0xf]
      %v1169 = vld [vmem:[%s1156 + $0x60] sm:$0xff]
      %v1170 = vld [vmem:[%s1156 + $0x68] sm:$0xff]
      %v1171 = vld [vmem:[%s1156 + $0x70] sm:$0xff]
      %v1172 = vld [vmem:[%s1156 + $0x78] sm:$0xf]
      %v1173 = vld [vmem:[%s1156 + $0x80] sm:$0xff]
      %v1174 = vld [vmem:[%s1156 + $0x88] sm:$0xff]
      %v1175 = vld [vmem:[%s1156 + $0x90] sm:$0xff]
      %v1176 = vld [vmem:[%s1156 + $0x98] sm:$0xf]
      %v1177 = vld [vmem:[%s1156 + $0xa0] sm:$0xff]
      %v1178 = vld [vmem:[%s1156 + $0xa8] sm:$0xff]
      %v1179 = vld [vmem:[%s1156 + $0xb0] sm:$0xff]
      %v1180 = vld [vmem:[%s1156 + $0xb8] sm:$0xf]
      %v1181 = vld [vmem:[%s1156 + $0xc0] sm:$0xff]
      %v1182 = vld [vmem:[%s1156 + $0xc8] sm:$0xff]
      %v1183 = vld [vmem:[%s1156 + $0xd0] sm:$0xff]
      %v1184 = vld [vmem:[%s1156 + $0xd8] sm:$0xf]
      %v1185 = vld [vmem:[%s1 + $0xb] sm:$0x1]
      %v1186 = vlaneseq
      %v1187 = vshrl.u32 %v1186, 7
      %v1188 = vsub.s32 0, %v1187
      %v1189 = vrot.slane %v1185, %v1188
      %v1190 = vmul.f32 %v1157, %v1189
      %v1191 = vmul.f32 %v1158, %v1189
      %v1192 = vmul.f32 %v1159, %v1189
      %v1193 = vmul.f32 %v1160, %v1189
      %v1194 = vmul.f32 %v1161, %v1189
      %v1195 = vmul.f32 %v1162, %v1189
      %v1196 = vmul.f32 %v1163, %v1189
      %v1197 = vmul.f32 %v1164, %v1189
      %v1198 = vmul.f32 %v1165, %v1189
      %v1199 = vmul.f32 %v1166, %v1189
      %v1200 = vmul.f32 %v1167, %v1189
      %v1201 = vmul.f32 %v1168, %v1189
      %v1202 = vmul.f32 %v1169, %v1189
      %v1203 = vmul.f32 %v1170, %v1189
      %v1204 = vmul.f32 %v1171, %v1189
      %v1205 = vmul.f32 %v1172, %v1189
      %v1206 = vmul.f32 %v1173, %v1189
      %v1207 = vmul.f32 %v1174, %v1189
      %v1208 = vmul.f32 %v1175, %v1189
      %v1209 = vmul.f32 %v1176, %v1189
      %v1210 = vmul.f32 %v1177, %v1189
      %v1211 = vmul.f32 %v1178, %v1189
      %v1212 = vmul.f32 %v1179, %v1189
      %v1213 = vmul.f32 %v1180, %v1189
      %v1214 = vmul.f32 %v1181, %v1189
      %v1215 = vmul.f32 %v1182, %v1189
      %v1216 = vmul.f32 %v1183, %v1189
      %v1217 = vmul.f32 %v1184, %v1189
      %v1218 = vadd.f32 %v1128, %v1190
      %v1219 = vadd.f32 %v1129, %v1191
      %v1220 = vadd.f32 %v1130, %v1192
      %v1221 = vadd.f32 %v1131, %v1193
      %v1222 = vadd.f32 %v1132, %v1194
      %v1223 = vadd.f32 %v1133, %v1195
      %v1224 = vadd.f32 %v1134, %v1196
      %v1225 = vadd.f32 %v1135, %v1197
      %v1226 = vadd.f32 %v1136, %v1198
      %v1227 = vadd.f32 %v1137, %v1199
      %v1228 = vadd.f32 %v1138, %v1200
      %v1229 = vadd.f32 %v1139, %v1201
      %v1230 = vadd.f32 %v1140, %v1202
      %v1231 = vadd.f32 %v1141, %v1203
      %v1232 = vadd.f32 %v1142, %v1204
      %v1233 = vadd.f32 %v1143, %v1205
      %v1234 = vadd.f32 %v1144, %v1206
      %v1235 = vadd.f32 %v1145, %v1207
      %v1236 = vadd.f32 %v1146, %v1208
      %v1237 = vadd.f32 %v1147, %v1209
      %v1238 = vadd.f32 %v1148, %v1210
      %v1239 = vadd.f32 %v1149, %v1211
      %v1240 = vadd.f32 %v1150, %v1212
      %v1241 = vadd.f32 %v1151, %v1213
      %v1242 = vadd.f32 %v1152, %v1214
      %v1243 = vadd.f32 %v1153, %v1215
      %v1244 = vadd.f32 %v1154, %v1216
      %v1245 = vadd.f32 %v1155, %v1217
      %v1246 = vld [vmem:[%s1066 + $0x1] sm:$0xff]
      %v1247 = vld [vmem:[%s1066 + $0x9] sm:$0xff]
      %v1248 = vld [vmem:[%s1066 + $0x11] sm:$0xff]
      %v1249 = vld [vmem:[%s1066 + $0x19] sm:$0xf]
      %v1250 = vld [vmem:[%s1066 + $0x21] sm:$0xff]
      %v1251 = vld [vmem:[%s1066 + $0x29] sm:$0xff]
      %v1252 = vld [vmem:[%s1066 + $0x31] sm:$0xff]
      %v1253 = vld [vmem:[%s1066 + $0x39] sm:$0xf]
      %v1254 = vld [vmem:[%s1066 + $0x41] sm:$0xff]
      %v1255 = vld [vmem:[%s1066 + $0x49] sm:$0xff]
      %v1256 = vld [vmem:[%s1066 + $0x51] sm:$0xff]
      %v1257 = vld [vmem:[%s1066 + $0x59] sm:$0xf]
      %v1258 = vld [vmem:[%s1066 + $0x61] sm:$0xff]
      %v1259 = vld [vmem:[%s1066 + $0x69] sm:$0xff]
      %v1260 = vld [vmem:[%s1066 + $0x71] sm:$0xff]
      %v1261 = vld [vmem:[%s1066 + $0x79] sm:$0xf]
      %v1262 = vld [vmem:[%s1066 + $0x81] sm:$0xff]
      %v1263 = vld [vmem:[%s1066 + $0x89] sm:$0xff]
      %v1264 = vld [vmem:[%s1066 + $0x91] sm:$0xff]
      %v1265 = vld [vmem:[%s1066 + $0x99] sm:$0xf]
      %v1266 = vld [vmem:[%s1066 + $0xa1] sm:$0xff]
      %v1267 = vld [vmem:[%s1066 + $0xa9] sm:$0xff]
      %v1268 = vld [vmem:[%s1066 + $0xb1] sm:$0xff]
      %v1269 = vld [vmem:[%s1066 + $0xb9] sm:$0xf]
      %v1270 = vld [vmem:[%s1066 + $0xc1] sm:$0xff]
      %v1271 = vld [vmem:[%s1066 + $0xc9] sm:$0xff]
      %v1272 = vld [vmem:[%s1066 + $0xd1] sm:$0xff]
      %v1273 = vld [vmem:[%s1066 + $0xd9] sm:$0xf]
      %v1274 = vld [vmem:[%s1 + $0xc] sm:$0x1]
      %v1275 = vlaneseq
      %v1276 = vshrl.u32 %v1275, 7
      %v1277 = vsub.s32 0, %v1276
      %v1278 = vrot.slane %v1274, %v1277
      %v1279 = vmul.f32 %v1246, %v1278
      %v1280 = vmul.f32 %v1247, %v1278
      %v1281 = vmul.f32 %v1248, %v1278
      %v1282 = vmul.f32 %v1249, %v1278
      %v1283 = vmul.f32 %v1250, %v1278
      %v1284 = vmul.f32 %v1251, %v1278
      %v1285 = vmul.f32 %v1252, %v1278
      %v1286 = vmul.f32 %v1253, %v1278
      %v1287 = vmul.f32 %v1254, %v1278
      %v1288 = vmul.f32 %v1255, %v1278
      %v1289 = vmul.f32 %v1256, %v1278
      %v1290 = vmul.f32 %v1257, %v1278
      %v1291 = vmul.f32 %v1258, %v1278
      %v1292 = vmul.f32 %v1259, %v1278
      %v1293 = vmul.f32 %v1260, %v1278
      %v1294 = vmul.f32 %v1261, %v1278
      %v1295 = vmul.f32 %v1262, %v1278
      %v1296 = vmul.f32 %v1263, %v1278
      %v1297 = vmul.f32 %v1264, %v1278
      %v1298 = vmul.f32 %v1265, %v1278
      %v1299 = vmul.f32 %v1266, %v1278
      %v1300 = vmul.f32 %v1267, %v1278
      %v1301 = vmul.f32 %v1268, %v1278
      %v1302 = vmul.f32 %v1269, %v1278
      %v1303 = vmul.f32 %v1270, %v1278
      %v1304 = vmul.f32 %v1271, %v1278
      %v1305 = vmul.f32 %v1272, %v1278
      %v1306 = vmul.f32 %v1273, %v1278
      %v1307 = vadd.f32 %v1218, %v1279
      %v1308 = vadd.f32 %v1219, %v1280
      %v1309 = vadd.f32 %v1220, %v1281
      %v1310 = vadd.f32 %v1221, %v1282
      %v1311 = vadd.f32 %v1222, %v1283
      %v1312 = vadd.f32 %v1223, %v1284
      %v1313 = vadd.f32 %v1224, %v1285
      %v1314 = vadd.f32 %v1225, %v1286
      %v1315 = vadd.f32 %v1226, %v1287
      %v1316 = vadd.f32 %v1227, %v1288
      %v1317 = vadd.f32 %v1228, %v1289
      %v1318 = vadd.f32 %v1229, %v1290
      %v1319 = vadd.f32 %v1230, %v1291
      %v1320 = vadd.f32 %v1231, %v1292
      %v1321 = vadd.f32 %v1232, %v1293
      %v1322 = vadd.f32 %v1233, %v1294
      %v1323 = vadd.f32 %v1234, %v1295
      %v1324 = vadd.f32 %v1235, %v1296
      %v1325 = vadd.f32 %v1236, %v1297
      %v1326 = vadd.f32 %v1237, %v1298
      %v1327 = vadd.f32 %v1238, %v1299
      %v1328 = vadd.f32 %v1239, %v1300
      %v1329 = vadd.f32 %v1240, %v1301
      %v1330 = vadd.f32 %v1241, %v1302
      %v1331 = vadd.f32 %v1242, %v1303
      %v1332 = vadd.f32 %v1243, %v1304
      %v1333 = vadd.f32 %v1244, %v1305
      %v1334 = vadd.f32 %v1245, %v1306
      %v1335 = vld [vmem:[%s1156 + $0x1] sm:$0xff]
      %v1336 = vld [vmem:[%s1156 + $0x9] sm:$0xff]
      %v1337 = vld [vmem:[%s1156 + $0x11] sm:$0xff]
      %v1338 = vld [vmem:[%s1156 + $0x19] sm:$0xf]
      %v1339 = vld [vmem:[%s1156 + $0x21] sm:$0xff]
      %v1340 = vld [vmem:[%s1156 + $0x29] sm:$0xff]
      %v1341 = vld [vmem:[%s1156 + $0x31] sm:$0xff]
      %v1342 = vld [vmem:[%s1156 + $0x39] sm:$0xf]
      %v1343 = vld [vmem:[%s1156 + $0x41] sm:$0xff]
      %v1344 = vld [vmem:[%s1156 + $0x49] sm:$0xff]
      %v1345 = vld [vmem:[%s1156 + $0x51] sm:$0xff]
      %v1346 = vld [vmem:[%s1156 + $0x59] sm:$0xf]
      %v1347 = vld [vmem:[%s1156 + $0x61] sm:$0xff]
      %v1348 = vld [vmem:[%s1156 + $0x69] sm:$0xff]
      %v1349 = vld [vmem:[%s1156 + $0x71] sm:$0xff]
      %v1350 = vld [vmem:[%s1156 + $0x79] sm:$0xf]
      %v1351 = vld [vmem:[%s1156 + $0x81] sm:$0xff]
      %v1352 = vld [vmem:[%s1156 + $0x89] sm:$0xff]
      %v1353 = vld [vmem:[%s1156 + $0x91] sm:$0xff]
      %v1354 = vld [vmem:[%s1156 + $0x99] sm:$0xf]
      %v1355 = vld [vmem:[%s1156 + $0xa1] sm:$0xff]
      %v1356 = vld [vmem:[%s1156 + $0xa9] sm:$0xff]
      %v1357 = vld [vmem:[%s1156 + $0xb1] sm:$0xff]
      %v1358 = vld [vmem:[%s1156 + $0xb9] sm:$0xf]
      %v1359 = vld [vmem:[%s1156 + $0xc1] sm:$0xff]
      %v1360 = vld [vmem:[%s1156 + $0xc9] sm:$0xff]
      %v1361 = vld [vmem:[%s1156 + $0xd1] sm:$0xff]
      %v1362 = vld [vmem:[%s1156 + $0xd9] sm:$0xf]
      %v1363 = vld [vmem:[%s1 + $0xd] sm:$0x1]
      %v1364 = vlaneseq
      %v1365 = vshrl.u32 %v1364, 7
      %v1366 = vsub.s32 0, %v1365
      %v1367 = vrot.slane %v1363, %v1366
      %v1368 = vmul.f32 %v1335, %v1367
      %v1369 = vmul.f32 %v1336, %v1367
      %v1370 = vmul.f32 %v1337, %v1367
      %v1371 = vmul.f32 %v1338, %v1367
      %v1372 = vmul.f32 %v1339, %v1367
      %v1373 = vmul.f32 %v1340, %v1367
      %v1374 = vmul.f32 %v1341, %v1367
      %v1375 = vmul.f32 %v1342, %v1367
      %v1376 = vmul.f32 %v1343, %v1367
      %v1377 = vmul.f32 %v1344, %v1367
      %v1378 = vmul.f32 %v1345, %v1367
      %v1379 = vmul.f32 %v1346, %v1367
      %v1380 = vmul.f32 %v1347, %v1367
      %v1381 = vmul.f32 %v1348, %v1367
      %v1382 = vmul.f32 %v1349, %v1367
      %v1383 = vmul.f32 %v1350, %v1367
      %v1384 = vmul.f32 %v1351, %v1367
      %v1385 = vmul.f32 %v1352, %v1367
      %v1386 = vmul.f32 %v1353, %v1367
      %v1387 = vmul.f32 %v1354, %v1367
      %v1388 = vmul.f32 %v1355, %v1367
      %v1389 = vmul.f32 %v1356, %v1367
      %v1390 = vmul.f32 %v1357, %v1367
      %v1391 = vmul.f32 %v1358, %v1367
      %v1392 = vmul.f32 %v1359, %v1367
      %v1393 = vmul.f32 %v1360, %v1367
      %v1394 = vmul.f32 %v1361, %v1367
      %v1395 = vmul.f32 %v1362, %v1367
      %v1396 = vadd.f32 %v1307, %v1368
      %v1397 = vadd.f32 %v1308, %v1369
      %v1398 = vadd.f32 %v1309, %v1370
      %v1399 = vadd.f32 %v1310, %v1371
      %v1400 = vadd.f32 %v1311, %v1372
      %v1401 = vadd.f32 %v1312, %v1373
      %v1402 = vadd.f32 %v1313, %v1374
      %v1403 = vadd.f32 %v1314, %v1375
      %v1404 = vadd.f32 %v1315, %v1376
      %v1405 = vadd.f32 %v1316, %v1377
      %v1406 = vadd.f32 %v1317, %v1378
      %v1407 = vadd.f32 %v1318, %v1379
      %v1408 = vadd.f32 %v1319, %v1380
      %v1409 = vadd.f32 %v1320, %v1381
      %v1410 = vadd.f32 %v1321, %v1382
      %v1411 = vadd.f32 %v1322, %v1383
      %v1412 = vadd.f32 %v1323, %v1384
      %v1413 = vadd.f32 %v1324, %v1385
      %v1414 = vadd.f32 %v1325, %v1386
      %v1415 = vadd.f32 %v1326, %v1387
      %v1416 = vadd.f32 %v1327, %v1388
      %v1417 = vadd.f32 %v1328, %v1389
      %v1418 = vadd.f32 %v1329, %v1390
      %v1419 = vadd.f32 %v1330, %v1391
      %v1420 = vadd.f32 %v1331, %v1392
      %v1421 = vadd.f32 %v1332, %v1393
      %v1422 = vadd.f32 %v1333, %v1394
      %v1423 = vadd.f32 %v1334, %v1395
      %v1424 = vld [vmem:[%s1066 + $0x2] sm:$0xff]
      %v1425 = vld [vmem:[%s1066 + $0xa] sm:$0xff]
      %v1426 = vld [vmem:[%s1066 + $0x12] sm:$0xff]
      %v1427 = vld [vmem:[%s1066 + $0x1a] sm:$0xf]
      %v1428 = vld [vmem:[%s1066 + $0x22] sm:$0xff]
      %v1429 = vld [vmem:[%s1066 + $0x2a] sm:$0xff]
      %v1430 = vld [vmem:[%s1066 + $0x32] sm:$0xff]
      %v1431 = vld [vmem:[%s1066 + $0x3a] sm:$0xf]
      %v1432 = vld [vmem:[%s1066 + $0x42] sm:$0xff]
      %v1433 = vld [vmem:[%s1066 + $0x4a] sm:$0xff]
      %v1434 = vld [vmem:[%s1066 + $0x52] sm:$0xff]
      %v1435 = vld [vmem:[%s1066 + $0x5a] sm:$0xf]
      %v1436 = vld [vmem:[%s1066 + $0x62] sm:$0xff]
      %v1437 = vld [vmem:[%s1066 + $0x6a] sm:$0xff]
      %v1438 = vld [vmem:[%s1066 + $0x72] sm:$0xff]
      %v1439 = vld [vmem:[%s1066 + $0x7a] sm:$0xf]
      %v1440 = vld [vmem:[%s1066 + $0x82] sm:$0xff]
      %v1441 = vld [vmem:[%s1066 + $0x8a] sm:$0xff]
      %v1442 = vld [vmem:[%s1066 + $0x92] sm:$0xff]
      %v1443 = vld [vmem:[%s1066 + $0x9a] sm:$0xf]
      %v1444 = vld [vmem:[%s1066 + $0xa2] sm:$0xff]
      %v1445 = vld [vmem:[%s1066 + $0xaa] sm:$0xff]
      %v1446 = vld [vmem:[%s1066 + $0xb2] sm:$0xff]
      %v1447 = vld [vmem:[%s1066 + $0xba] sm:$0xf]
      %v1448 = vld [vmem:[%s1066 + $0xc2] sm:$0xff]
      %v1449 = vld [vmem:[%s1066 + $0xca] sm:$0xff]
      %v1450 = vld [vmem:[%s1066 + $0xd2] sm:$0xff]
      %v1451 = vld [vmem:[%s1066 + $0xda] sm:$0xf]
      %v1452 = vld [vmem:[%s1 + $0xe] sm:$0x1]
      %v1453 = vlaneseq
      %v1454 = vshrl.u32 %v1453, 7
      %v1455 = vsub.s32 0, %v1454
      %v1456 = vrot.slane %v1452, %v1455
      %v1457 = vmul.f32 %v1424, %v1456
      %v1458 = vmul.f32 %v1425, %v1456
      %v1459 = vmul.f32 %v1426, %v1456
      %v1460 = vmul.f32 %v1427, %v1456
      %v1461 = vmul.f32 %v1428, %v1456
      %v1462 = vmul.f32 %v1429, %v1456
      %v1463 = vmul.f32 %v1430, %v1456
      %v1464 = vmul.f32 %v1431, %v1456
      %v1465 = vmul.f32 %v1432, %v1456
      %v1466 = vmul.f32 %v1433, %v1456
      %v1467 = vmul.f32 %v1434, %v1456
      %v1468 = vmul.f32 %v1435, %v1456
      %v1469 = vmul.f32 %v1436, %v1456
      %v1470 = vmul.f32 %v1437, %v1456
      %v1471 = vmul.f32 %v1438, %v1456
      %v1472 = vmul.f32 %v1439, %v1456
      %v1473 = vmul.f32 %v1440, %v1456
      %v1474 = vmul.f32 %v1441, %v1456
      %v1475 = vmul.f32 %v1442, %v1456
      %v1476 = vmul.f32 %v1443, %v1456
      %v1477 = vmul.f32 %v1444, %v1456
      %v1478 = vmul.f32 %v1445, %v1456
      %v1479 = vmul.f32 %v1446, %v1456
      %v1480 = vmul.f32 %v1447, %v1456
      %v1481 = vmul.f32 %v1448, %v1456
      %v1482 = vmul.f32 %v1449, %v1456
      %v1483 = vmul.f32 %v1450, %v1456
      %v1484 = vmul.f32 %v1451, %v1456
      %v1485 = vadd.f32 %v1396, %v1457
      %v1486 = vadd.f32 %v1397, %v1458
      %v1487 = vadd.f32 %v1398, %v1459
      %v1488 = vadd.f32 %v1399, %v1460
      %v1489 = vadd.f32 %v1400, %v1461
      %v1490 = vadd.f32 %v1401, %v1462
      %v1491 = vadd.f32 %v1402, %v1463
      %v1492 = vadd.f32 %v1403, %v1464
      %v1493 = vadd.f32 %v1404, %v1465
      %v1494 = vadd.f32 %v1405, %v1466
      %v1495 = vadd.f32 %v1406, %v1467
      %v1496 = vadd.f32 %v1407, %v1468
      %v1497 = vadd.f32 %v1408, %v1469
      %v1498 = vadd.f32 %v1409, %v1470
      %v1499 = vadd.f32 %v1410, %v1471
      %v1500 = vadd.f32 %v1411, %v1472
      %v1501 = vadd.f32 %v1412, %v1473
      %v1502 = vadd.f32 %v1413, %v1474
      %v1503 = vadd.f32 %v1414, %v1475
      %v1504 = vadd.f32 %v1415, %v1476
      %v1505 = vadd.f32 %v1416, %v1477
      %v1506 = vadd.f32 %v1417, %v1478
      %v1507 = vadd.f32 %v1418, %v1479
      %v1508 = vadd.f32 %v1419, %v1480
      %v1509 = vadd.f32 %v1420, %v1481
      %v1510 = vadd.f32 %v1421, %v1482
      %v1511 = vadd.f32 %v1422, %v1483
      %v1512 = vadd.f32 %v1423, %v1484
      %s1513 = scalar_lea.vmem %s615, %s1065
      %v1514 = vld [vmem:[%s1513] sm:$0xff]
      %v1515 = vld [vmem:[%s1513 + $0x8] sm:$0xff]
      %v1516 = vld [vmem:[%s1513 + $0x10] sm:$0xff]
      %v1517 = vld [vmem:[%s1513 + $0x18] sm:$0xf]
      %v1518 = vld [vmem:[%s1513 + $0x20] sm:$0xff]
      %v1519 = vld [vmem:[%s1513 + $0x28] sm:$0xff]
      %v1520 = vld [vmem:[%s1513 + $0x30] sm:$0xff]
      %v1521 = vld [vmem:[%s1513 + $0x38] sm:$0xf]
      %v1522 = vld [vmem:[%s1513 + $0x40] sm:$0xff]
      %v1523 = vld [vmem:[%s1513 + $0x48] sm:$0xff]
      %v1524 = vld [vmem:[%s1513 + $0x50] sm:$0xff]
      %v1525 = vld [vmem:[%s1513 + $0x58] sm:$0xf]
      %v1526 = vld [vmem:[%s1513 + $0x60] sm:$0xff]
      %v1527 = vld [vmem:[%s1513 + $0x68] sm:$0xff]
      %v1528 = vld [vmem:[%s1513 + $0x70] sm:$0xff]
      %v1529 = vld [vmem:[%s1513 + $0x78] sm:$0xf]
      %v1530 = vld [vmem:[%s1513 + $0x80] sm:$0xff]
      %v1531 = vld [vmem:[%s1513 + $0x88] sm:$0xff]
      %v1532 = vld [vmem:[%s1513 + $0x90] sm:$0xff]
      %v1533 = vld [vmem:[%s1513 + $0x98] sm:$0xf]
      %v1534 = vld [vmem:[%s1513 + $0xa0] sm:$0xff]
      %v1535 = vld [vmem:[%s1513 + $0xa8] sm:$0xff]
      %v1536 = vld [vmem:[%s1513 + $0xb0] sm:$0xff]
      %v1537 = vld [vmem:[%s1513 + $0xb8] sm:$0xf]
      %v1538 = vld [vmem:[%s1513 + $0xc0] sm:$0xff]
      %v1539 = vld [vmem:[%s1513 + $0xc8] sm:$0xff]
      %v1540 = vld [vmem:[%s1513 + $0xd0] sm:$0xff]
      %v1541 = vld [vmem:[%s1513 + $0xd8] sm:$0xf]
      %v1542 = vld [vmem:[%s1 + $0xf] sm:$0x1]
      %v1543 = vlaneseq
      %v1544 = vshrl.u32 %v1543, 7
      %v1545 = vsub.s32 0, %v1544
      %v1546 = vrot.slane %v1542, %v1545
      %v1547 = vmul.f32 %v1514, %v1546
      %v1548 = vmul.f32 %v1515, %v1546
      %v1549 = vmul.f32 %v1516, %v1546
      %v1550 = vmul.f32 %v1517, %v1546
      %v1551 = vmul.f32 %v1518, %v1546
      %v1552 = vmul.f32 %v1519, %v1546
      %v1553 = vmul.f32 %v1520, %v1546
      %v1554 = vmul.f32 %v1521, %v1546
      %v1555 = vmul.f32 %v1522, %v1546
      %v1556 = vmul.f32 %v1523, %v1546
      %v1557 = vmul.f32 %v1524, %v1546
      %v1558 = vmul.f32 %v1525, %v1546
      %v1559 = vmul.f32 %v1526, %v1546
      %v1560 = vmul.f32 %v1527, %v1546
      %v1561 = vmul.f32 %v1528, %v1546
      %v1562 = vmul.f32 %v1529, %v1546
      %v1563 = vmul.f32 %v1530, %v1546
      %v1564 = vmul.f32 %v1531, %v1546
      %v1565 = vmul.f32 %v1532, %v1546
      %v1566 = vmul.f32 %v1533, %v1546
      %v1567 = vmul.f32 %v1534, %v1546
      %v1568 = vmul.f32 %v1535, %v1546
      %v1569 = vmul.f32 %v1536, %v1546
      %v1570 = vmul.f32 %v1537, %v1546
      %v1571 = vmul.f32 %v1538, %v1546
      %v1572 = vmul.f32 %v1539, %v1546
      %v1573 = vmul.f32 %v1540, %v1546
      %v1574 = vmul.f32 %v1541, %v1546
      %v1575 = vadd.f32 %v1485, %v1547
      %v1576 = vadd.f32 %v1486, %v1548
      %v1577 = vadd.f32 %v1487, %v1549
      %v1578 = vadd.f32 %v1488, %v1550
      %v1579 = vadd.f32 %v1489, %v1551
      %v1580 = vadd.f32 %v1490, %v1552
      %v1581 = vadd.f32 %v1491, %v1553
      %v1582 = vadd.f32 %v1492, %v1554
      %v1583 = vadd.f32 %v1493, %v1555
      %v1584 = vadd.f32 %v1494, %v1556
      %v1585 = vadd.f32 %v1495, %v1557
      %v1586 = vadd.f32 %v1496, %v1558
      %v1587 = vadd.f32 %v1497, %v1559
      %v1588 = vadd.f32 %v1498, %v1560
      %v1589 = vadd.f32 %v1499, %v1561
      %v1590 = vadd.f32 %v1500, %v1562
      %v1591 = vadd.f32 %v1501, %v1563
      %v1592 = vadd.f32 %v1502, %v1564
      %v1593 = vadd.f32 %v1503, %v1565
      %v1594 = vadd.f32 %v1504, %v1566
      %v1595 = vadd.f32 %v1505, %v1567
      %v1596 = vadd.f32 %v1506, %v1568
      %v1597 = vadd.f32 %v1507, %v1569
      %v1598 = vadd.f32 %v1508, %v1570
      %v1599 = vadd.f32 %v1509, %v1571
      %v1600 = vadd.f32 %v1510, %v1572
      %v1601 = vadd.f32 %v1511, %v1573
      %v1602 = vadd.f32 %v1512, %v1574
      %s1603 = scalar_lea.vmem %s706, %s1065
      %v1604 = vld [vmem:[%s1603] sm:$0xff]
      %v1605 = vld [vmem:[%s1603 + $0x8] sm:$0xff]
      %v1606 = vld [vmem:[%s1603 + $0x10] sm:$0xff]
      %v1607 = vld [vmem:[%s1603 + $0x18] sm:$0xf]
      %v1608 = vld [vmem:[%s1603 + $0x20] sm:$0xff]
      %v1609 = vld [vmem:[%s1603 + $0x28] sm:$0xff]
      %v1610 = vld [vmem:[%s1603 + $0x30] sm:$0xff]
      %v1611 = vld [vmem:[%s1603 + $0x38] sm:$0xf]
      %v1612 = vld [vmem:[%s1603 + $0x40] sm:$0xff]
      %v1613 = vld [vmem:[%s1603 + $0x48] sm:$0xff]
      %v1614 = vld [vmem:[%s1603 + $0x50] sm:$0xff]
      %v1615 = vld [vmem:[%s1603 + $0x58] sm:$0xf]
      %v1616 = vld [vmem:[%s1603 + $0x60] sm:$0xff]
      %v1617 = vld [vmem:[%s1603 + $0x68] sm:$0xff]
      %v1618 = vld [vmem:[%s1603 + $0x70] sm:$0xff]
      %v1619 = vld [vmem:[%s1603 + $0x78] sm:$0xf]
      %v1620 = vld [vmem:[%s1603 + $0x80] sm:$0xff]
      %v1621 = vld [vmem:[%s1603 + $0x88] sm:$0xff]
      %v1622 = vld [vmem:[%s1603 + $0x90] sm:$0xff]
      %v1623 = vld [vmem:[%s1603 + $0x98] sm:$0xf]
      %v1624 = vld [vmem:[%s1603 + $0xa0] sm:$0xff]
      %v1625 = vld [vmem:[%s1603 + $0xa8] sm:$0xff]
      %v1626 = vld [vmem:[%s1603 + $0xb0] sm:$0xff]
      %v1627 = vld [vmem:[%s1603 + $0xb8] sm:$0xf]
      %v1628 = vld [vmem:[%s1603 + $0xc0] sm:$0xff]
      %v1629 = vld [vmem:[%s1603 + $0xc8] sm:$0xff]
      %v1630 = vld [vmem:[%s1603 + $0xd0] sm:$0xff]
      %v1631 = vld [vmem:[%s1603 + $0xd8] sm:$0xf]
      %v1632 = vld [vmem:[%s1 + $0x10] sm:$0x1]
      %v1633 = vlaneseq
      %v1634 = vshrl.u32 %v1633, 7
      %v1635 = vsub.s32 0, %v1634
      %v1636 = vrot.slane %v1632, %v1635
      %v1637 = vmul.f32 %v1604, %v1636
      %v1638 = vmul.f32 %v1605, %v1636
      %v1639 = vmul.f32 %v1606, %v1636
      %v1640 = vmul.f32 %v1607, %v1636
      %v1641 = vmul.f32 %v1608, %v1636
      %v1642 = vmul.f32 %v1609, %v1636
      %v1643 = vmul.f32 %v1610, %v1636
      %v1644 = vmul.f32 %v1611, %v1636
      %v1645 = vmul.f32 %v1612, %v1636
      %v1646 = vmul.f32 %v1613, %v1636
      %v1647 = vmul.f32 %v1614, %v1636
      %v1648 = vmul.f32 %v1615, %v1636
      %v1649 = vmul.f32 %v1616, %v1636
      %v1650 = vmul.f32 %v1617, %v1636
      %v1651 = vmul.f32 %v1618, %v1636
      %v1652 = vmul.f32 %v1619, %v1636
      %v1653 = vmul.f32 %v1620, %v1636
      %v1654 = vmul.f32 %v1621, %v1636
      %v1655 = vmul.f32 %v1622, %v1636
      %v1656 = vmul.f32 %v1623, %v1636
      %v1657 = vmul.f32 %v1624, %v1636
      %v1658 = vmul.f32 %v1625, %v1636
      %v1659 = vmul.f32 %v1626, %v1636
      %v1660 = vmul.f32 %v1627, %v1636
      %v1661 = vmul.f32 %v1628, %v1636
      %v1662 = vmul.f32 %v1629, %v1636
      %v1663 = vmul.f32 %v1630, %v1636
      %v1664 = vmul.f32 %v1631, %v1636
      %v1665 = vadd.f32 %v1575, %v1637
      %v1666 = vadd.f32 %v1576, %v1638
      %v1667 = vadd.f32 %v1577, %v1639
      %v1668 = vadd.f32 %v1578, %v1640
      %v1669 = vadd.f32 %v1579, %v1641
      %v1670 = vadd.f32 %v1580, %v1642
      %v1671 = vadd.f32 %v1581, %v1643
      %v1672 = vadd.f32 %v1582, %v1644
      %v1673 = vadd.f32 %v1583, %v1645
      %v1674 = vadd.f32 %v1584, %v1646
      %v1675 = vadd.f32 %v1585, %v1647
      %v1676 = vadd.f32 %v1586, %v1648
      %v1677 = vadd.f32 %v1587, %v1649
      %v1678 = vadd.f32 %v1588, %v1650
      %v1679 = vadd.f32 %v1589, %v1651
      %v1680 = vadd.f32 %v1590, %v1652
      %v1681 = vadd.f32 %v1591, %v1653
      %v1682 = vadd.f32 %v1592, %v1654
      %v1683 = vadd.f32 %v1593, %v1655
      %v1684 = vadd.f32 %v1594, %v1656
      %v1685 = vadd.f32 %v1595, %v1657
      %v1686 = vadd.f32 %v1596, %v1658
      %v1687 = vadd.f32 %v1597, %v1659
      %v1688 = vadd.f32 %v1598, %v1660
      %v1689 = vadd.f32 %v1599, %v1661
      %v1690 = vadd.f32 %v1600, %v1662
      %v1691 = vadd.f32 %v1601, %v1663
      %v1692 = vadd.f32 %v1602, %v1664
      %v1693 = vld [vmem:[%s1513 + $0x1] sm:$0xff]
      %v1694 = vld [vmem:[%s1513 + $0x9] sm:$0xff]
      %v1695 = vld [vmem:[%s1513 + $0x11] sm:$0xff]
      %v1696 = vld [vmem:[%s1513 + $0x19] sm:$0xf]
      %v1697 = vld [vmem:[%s1513 + $0x21] sm:$0xff]
      %v1698 = vld [vmem:[%s1513 + $0x29] sm:$0xff]
      %v1699 = vld [vmem:[%s1513 + $0x31] sm:$0xff]
      %v1700 = vld [vmem:[%s1513 + $0x39] sm:$0xf]
      %v1701 = vld [vmem:[%s1513 + $0x41] sm:$0xff]
      %v1702 = vld [vmem:[%s1513 + $0x49] sm:$0xff]
      %v1703 = vld [vmem:[%s1513 + $0x51] sm:$0xff]
      %v1704 = vld [vmem:[%s1513 + $0x59] sm:$0xf]
      %v1705 = vld [vmem:[%s1513 + $0x61] sm:$0xff]
      %v1706 = vld [vmem:[%s1513 + $0x69] sm:$0xff]
      %v1707 = vld [vmem:[%s1513 + $0x71] sm:$0xff]
      %v1708 = vld [vmem:[%s1513 + $0x79] sm:$0xf]
      %v1709 = vld [vmem:[%s1513 + $0x81] sm:$0xff]
      %v1710 = vld [vmem:[%s1513 + $0x89] sm:$0xff]
      %v1711 = vld [vmem:[%s1513 + $0x91] sm:$0xff]
      %v1712 = vld [vmem:[%s1513 + $0x99] sm:$0xf]
      %v1713 = vld [vmem:[%s1513 + $0xa1] sm:$0xff]
      %v1714 = vld [vmem:[%s1513 + $0xa9] sm:$0xff]
      %v1715 = vld [vmem:[%s1513 + $0xb1] sm:$0xff]
      %v1716 = vld [vmem:[%s1513 + $0xb9] sm:$0xf]
      %v1717 = vld [vmem:[%s1513 + $0xc1] sm:$0xff]
      %v1718 = vld [vmem:[%s1513 + $0xc9] sm:$0xff]
      %v1719 = vld [vmem:[%s1513 + $0xd1] sm:$0xff]
      %v1720 = vld [vmem:[%s1513 + $0xd9] sm:$0xf]
      %v1721 = vld [vmem:[%s1 + $0x11] sm:$0x1]
      %v1722 = vlaneseq
      %v1723 = vshrl.u32 %v1722, 7
      %v1724 = vsub.s32 0, %v1723
      %v1725 = vrot.slane %v1721, %v1724
      %v1726 = vmul.f32 %v1693, %v1725
      %v1727 = vmul.f32 %v1694, %v1725
      %v1728 = vmul.f32 %v1695, %v1725
      %v1729 = vmul.f32 %v1696, %v1725
      %v1730 = vmul.f32 %v1697, %v1725
      %v1731 = vmul.f32 %v1698, %v1725
      %v1732 = vmul.f32 %v1699, %v1725
      %v1733 = vmul.f32 %v1700, %v1725
      %v1734 = vmul.f32 %v1701, %v1725
      %v1735 = vmul.f32 %v1702, %v1725
      %v1736 = vmul.f32 %v1703, %v1725
      %v1737 = vmul.f32 %v1704, %v1725
      %v1738 = vmul.f32 %v1705, %v1725
      %v1739 = vmul.f32 %v1706, %v1725
      %v1740 = vmul.f32 %v1707, %v1725
      %v1741 = vmul.f32 %v1708, %v1725
      %v1742 = vmul.f32 %v1709, %v1725
      %v1743 = vmul.f32 %v1710, %v1725
      %v1744 = vmul.f32 %v1711, %v1725
      %v1745 = vmul.f32 %v1712, %v1725
      %v1746 = vmul.f32 %v1713, %v1725
      %v1747 = vmul.f32 %v1714, %v1725
      %v1748 = vmul.f32 %v1715, %v1725
      %v1749 = vmul.f32 %v1716, %v1725
      %v1750 = vmul.f32 %v1717, %v1725
      %v1751 = vmul.f32 %v1718, %v1725
      %v1752 = vmul.f32 %v1719, %v1725
      %v1753 = vmul.f32 %v1720, %v1725
      %v1754 = vadd.f32 %v1665, %v1726
      %v1755 = vadd.f32 %v1666, %v1727
      %v1756 = vadd.f32 %v1667, %v1728
      %v1757 = vadd.f32 %v1668, %v1729
      %v1758 = vadd.f32 %v1669, %v1730
      %v1759 = vadd.f32 %v1670, %v1731
      %v1760 = vadd.f32 %v1671, %v1732
      %v1761 = vadd.f32 %v1672, %v1733
      %v1762 = vadd.f32 %v1673, %v1734
      %v1763 = vadd.f32 %v1674, %v1735
      %v1764 = vadd.f32 %v1675, %v1736
      %v1765 = vadd.f32 %v1676, %v1737
      %v1766 = vadd.f32 %v1677, %v1738
      %v1767 = vadd.f32 %v1678, %v1739
      %v1768 = vadd.f32 %v1679, %v1740
      %v1769 = vadd.f32 %v1680, %v1741
      %v1770 = vadd.f32 %v1681, %v1742
      %v1771 = vadd.f32 %v1682, %v1743
      %v1772 = vadd.f32 %v1683, %v1744
      %v1773 = vadd.f32 %v1684, %v1745
      %v1774 = vadd.f32 %v1685, %v1746
      %v1775 = vadd.f32 %v1686, %v1747
      %v1776 = vadd.f32 %v1687, %v1748
      %v1777 = vadd.f32 %v1688, %v1749
      %v1778 = vadd.f32 %v1689, %v1750
      %v1779 = vadd.f32 %v1690, %v1751
      %v1780 = vadd.f32 %v1691, %v1752
      %v1781 = vadd.f32 %v1692, %v1753
      %v1782 = vld [vmem:[%s1603 + $0x1] sm:$0xff]
      %v1783 = vld [vmem:[%s1603 + $0x9] sm:$0xff]
      %v1784 = vld [vmem:[%s1603 + $0x11] sm:$0xff]
      %v1785 = vld [vmem:[%s1603 + $0x19] sm:$0xf]
      %v1786 = vld [vmem:[%s1603 + $0x21] sm:$0xff]
      %v1787 = vld [vmem:[%s1603 + $0x29] sm:$0xff]
      %v1788 = vld [vmem:[%s1603 + $0x31] sm:$0xff]
      %v1789 = vld [vmem:[%s1603 + $0x39] sm:$0xf]
      %v1790 = vld [vmem:[%s1603 + $0x41] sm:$0xff]
      %v1791 = vld [vmem:[%s1603 + $0x49] sm:$0xff]
      %v1792 = vld [vmem:[%s1603 + $0x51] sm:$0xff]
      %v1793 = vld [vmem:[%s1603 + $0x59] sm:$0xf]
      %v1794 = vld [vmem:[%s1603 + $0x61] sm:$0xff]
      %v1795 = vld [vmem:[%s1603 + $0x69] sm:$0xff]
      %v1796 = vld [vmem:[%s1603 + $0x71] sm:$0xff]
      %v1797 = vld [vmem:[%s1603 + $0x79] sm:$0xf]
      %v1798 = vld [vmem:[%s1603 + $0x81] sm:$0xff]
      %v1799 = vld [vmem:[%s1603 + $0x89] sm:$0xff]
      %v1800 = vld [vmem:[%s1603 + $0x91] sm:$0xff]
      %v1801 = vld [vmem:[%s1603 + $0x99] sm:$0xf]
      %v1802 = vld [vmem:[%s1603 + $0xa1] sm:$0xff]
      %v1803 = vld [vmem:[%s1603 + $0xa9] sm:$0xff]
      %v1804 = vld [vmem:[%s1603 + $0xb1] sm:$0xff]
      %v1805 = vld [vmem:[%s1603 + $0xb9] sm:$0xf]
      %v1806 = vld [vmem:[%s1603 + $0xc1] sm:$0xff]
      %v1807 = vld [vmem:[%s1603 + $0xc9] sm:$0xff]
      %v1808 = vld [vmem:[%s1603 + $0xd1] sm:$0xff]
      %v1809 = vld [vmem:[%s1603 + $0xd9] sm:$0xf]
      %v1810 = vld [vmem:[%s1 + $0x12] sm:$0x1]
      %v1811 = vlaneseq
      %v1812 = vshrl.u32 %v1811, 7
      %v1813 = vsub.s32 0, %v1812
      %v1814 = vrot.slane %v1810, %v1813
      %v1815 = vmul.f32 %v1782, %v1814
      %v1816 = vmul.f32 %v1783, %v1814
      %v1817 = vmul.f32 %v1784, %v1814
      %v1818 = vmul.f32 %v1785, %v1814
      %v1819 = vmul.f32 %v1786, %v1814
      %v1820 = vmul.f32 %v1787, %v1814
      %v1821 = vmul.f32 %v1788, %v1814
      %v1822 = vmul.f32 %v1789, %v1814
      %v1823 = vmul.f32 %v1790, %v1814
      %v1824 = vmul.f32 %v1791, %v1814
      %v1825 = vmul.f32 %v1792, %v1814
      %v1826 = vmul.f32 %v1793, %v1814
      %v1827 = vmul.f32 %v1794, %v1814
      %v1828 = vmul.f32 %v1795, %v1814
      %v1829 = vmul.f32 %v1796, %v1814
      %v1830 = vmul.f32 %v1797, %v1814
      %v1831 = vmul.f32 %v1798, %v1814
      %v1832 = vmul.f32 %v1799, %v1814
      %v1833 = vmul.f32 %v1800, %v1814
      %v1834 = vmul.f32 %v1801, %v1814
      %v1835 = vmul.f32 %v1802, %v1814
      %v1836 = vmul.f32 %v1803, %v1814
      %v1837 = vmul.f32 %v1804, %v1814
      %v1838 = vmul.f32 %v1805, %v1814
      %v1839 = vmul.f32 %v1806, %v1814
      %v1840 = vmul.f32 %v1807, %v1814
      %v1841 = vmul.f32 %v1808, %v1814
      %v1842 = vmul.f32 %v1809, %v1814
      %v1843 = vadd.f32 %v1754, %v1815
      %v1844 = vadd.f32 %v1755, %v1816
      %v1845 = vadd.f32 %v1756, %v1817
      %v1846 = vadd.f32 %v1757, %v1818
      %v1847 = vadd.f32 %v1758, %v1819
      %v1848 = vadd.f32 %v1759, %v1820
      %v1849 = vadd.f32 %v1760, %v1821
      %v1850 = vadd.f32 %v1761, %v1822
      %v1851 = vadd.f32 %v1762, %v1823
      %v1852 = vadd.f32 %v1763, %v1824
      %v1853 = vadd.f32 %v1764, %v1825
      %v1854 = vadd.f32 %v1765, %v1826
      %v1855 = vadd.f32 %v1766, %v1827
      %v1856 = vadd.f32 %v1767, %v1828
      %v1857 = vadd.f32 %v1768, %v1829
      %v1858 = vadd.f32 %v1769, %v1830
      %v1859 = vadd.f32 %v1770, %v1831
      %v1860 = vadd.f32 %v1771, %v1832
      %v1861 = vadd.f32 %v1772, %v1833
      %v1862 = vadd.f32 %v1773, %v1834
      %v1863 = vadd.f32 %v1774, %v1835
      %v1864 = vadd.f32 %v1775, %v1836
      %v1865 = vadd.f32 %v1776, %v1837
      %v1866 = vadd.f32 %v1777, %v1838
      %v1867 = vadd.f32 %v1778, %v1839
      %v1868 = vadd.f32 %v1779, %v1840
      %v1869 = vadd.f32 %v1780, %v1841
      %v1870 = vadd.f32 %v1781, %v1842
      %v1871 = vld [vmem:[%s1513 + $0x2] sm:$0xff]
      %v1872 = vld [vmem:[%s1513 + $0xa] sm:$0xff]
      %v1873 = vld [vmem:[%s1513 + $0x12] sm:$0xff]
      %v1874 = vld [vmem:[%s1513 + $0x1a] sm:$0xf]
      %v1875 = vld [vmem:[%s1513 + $0x22] sm:$0xff]
      %v1876 = vld [vmem:[%s1513 + $0x2a] sm:$0xff]
      %v1877 = vld [vmem:[%s1513 + $0x32] sm:$0xff]
      %v1878 = vld [vmem:[%s1513 + $0x3a] sm:$0xf]
      %v1879 = vld [vmem:[%s1513 + $0x42] sm:$0xff]
      %v1880 = vld [vmem:[%s1513 + $0x4a] sm:$0xff]
      %v1881 = vld [vmem:[%s1513 + $0x52] sm:$0xff]
      %v1882 = vld [vmem:[%s1513 + $0x5a] sm:$0xf]
      %v1883 = vld [vmem:[%s1513 + $0x62] sm:$0xff]
      %v1884 = vld [vmem:[%s1513 + $0x6a] sm:$0xff]
      %v1885 = vld [vmem:[%s1513 + $0x72] sm:$0xff]
      %v1886 = vld [vmem:[%s1513 + $0x7a] sm:$0xf]
      %v1887 = vld [vmem:[%s1513 + $0x82] sm:$0xff]
      %v1888 = vld [vmem:[%s1513 + $0x8a] sm:$0xff]
      %v1889 = vld [vmem:[%s1513 + $0x92] sm:$0xff]
      %v1890 = vld [vmem:[%s1513 + $0x9a] sm:$0xf]
      %v1891 = vld [vmem:[%s1513 + $0xa2] sm:$0xff]
      %v1892 = vld [vmem:[%s1513 + $0xaa] sm:$0xff]
      %v1893 = vld [vmem:[%s1513 + $0xb2] sm:$0xff]
      %v1894 = vld [vmem:[%s1513 + $0xba] sm:$0xf]
      %v1895 = vld [vmem:[%s1513 + $0xc2] sm:$0xff]
      %v1896 = vld [vmem:[%s1513 + $0xca] sm:$0xff]
      %v1897 = vld [vmem:[%s1513 + $0xd2] sm:$0xff]
      %v1898 = vld [vmem:[%s1513 + $0xda] sm:$0xf]
      %v1899 = vld [vmem:[%s1 + $0x13] sm:$0x1]
      %v1900 = vlaneseq
      %v1901 = vshrl.u32 %v1900, 7
      %v1902 = vsub.s32 0, %v1901
      %v1903 = vrot.slane %v1899, %v1902
      %v1904 = vmul.f32 %v1871, %v1903
      %v1905 = vmul.f32 %v1872, %v1903
      %v1906 = vmul.f32 %v1873, %v1903
      %v1907 = vmul.f32 %v1874, %v1903
      %v1908 = vmul.f32 %v1875, %v1903
      %v1909 = vmul.f32 %v1876, %v1903
      %v1910 = vmul.f32 %v1877, %v1903
      %v1911 = vmul.f32 %v1878, %v1903
      %v1912 = vmul.f32 %v1879, %v1903
      %v1913 = vmul.f32 %v1880, %v1903
      %v1914 = vmul.f32 %v1881, %v1903
      %v1915 = vmul.f32 %v1882, %v1903
      %v1916 = vmul.f32 %v1883, %v1903
      %v1917 = vmul.f32 %v1884, %v1903
      %v1918 = vmul.f32 %v1885, %v1903
      %v1919 = vmul.f32 %v1886, %v1903
      %v1920 = vmul.f32 %v1887, %v1903
      %v1921 = vmul.f32 %v1888, %v1903
      %v1922 = vmul.f32 %v1889, %v1903
      %v1923 = vmul.f32 %v1890, %v1903
      %v1924 = vmul.f32 %v1891, %v1903
      %v1925 = vmul.f32 %v1892, %v1903
      %v1926 = vmul.f32 %v1893, %v1903
      %v1927 = vmul.f32 %v1894, %v1903
      %v1928 = vmul.f32 %v1895, %v1903
      %v1929 = vmul.f32 %v1896, %v1903
      %v1930 = vmul.f32 %v1897, %v1903
      %v1931 = vmul.f32 %v1898, %v1903
      %v1932 = vadd.f32 %v1843, %v1904
      %v1933 = vadd.f32 %v1844, %v1905
      %v1934 = vadd.f32 %v1845, %v1906
      %v1935 = vadd.f32 %v1846, %v1907
      %v1936 = vadd.f32 %v1847, %v1908
      %v1937 = vadd.f32 %v1848, %v1909
      %v1938 = vadd.f32 %v1849, %v1910
      %v1939 = vadd.f32 %v1850, %v1911
      %v1940 = vadd.f32 %v1851, %v1912
      %v1941 = vadd.f32 %v1852, %v1913
      %v1942 = vadd.f32 %v1853, %v1914
      %v1943 = vadd.f32 %v1854, %v1915
      %v1944 = vadd.f32 %v1855, %v1916
      %v1945 = vadd.f32 %v1856, %v1917
      %v1946 = vadd.f32 %v1857, %v1918
      %v1947 = vadd.f32 %v1858, %v1919
      %v1948 = vadd.f32 %v1859, %v1920
      %v1949 = vadd.f32 %v1860, %v1921
      %v1950 = vadd.f32 %v1861, %v1922
      %v1951 = vadd.f32 %v1862, %v1923
      %v1952 = vadd.f32 %v1863, %v1924
      %v1953 = vadd.f32 %v1864, %v1925
      %v1954 = vadd.f32 %v1865, %v1926
      %v1955 = vadd.f32 %v1866, %v1927
      %v1956 = vadd.f32 %v1867, %v1928
      %v1957 = vadd.f32 %v1868, %v1929
      %v1958 = vadd.f32 %v1869, %v1930
      %v1959 = vadd.f32 %v1870, %v1931
      %s1960 = sadd.s32 %s165, 2
      %s1961 = smul.u32 %s1960, 32
      %s1962 = scalar_lea.vmem %s0, %s1961
      %v1963 = vld [vmem:[%s1962] sm:$0xff]
      %v1964 = vld [vmem:[%s1962 + $0x8] sm:$0xff]
      %v1965 = vld [vmem:[%s1962 + $0x10] sm:$0xff]
      %v1966 = vld [vmem:[%s1962 + $0x18] sm:$0xf]
      %v1967 = vld [vmem:[%s1962 + $0x20] sm:$0xff]
      %v1968 = vld [vmem:[%s1962 + $0x28] sm:$0xff]
      %v1969 = vld [vmem:[%s1962 + $0x30] sm:$0xff]
      %v1970 = vld [vmem:[%s1962 + $0x38] sm:$0xf]
      %v1971 = vld [vmem:[%s1962 + $0x40] sm:$0xff]
      %v1972 = vld [vmem:[%s1962 + $0x48] sm:$0xff]
      %v1973 = vld [vmem:[%s1962 + $0x50] sm:$0xff]
      %v1974 = vld [vmem:[%s1962 + $0x58] sm:$0xf]
      %v1975 = vld [vmem:[%s1962 + $0x60] sm:$0xff]
      %v1976 = vld [vmem:[%s1962 + $0x68] sm:$0xff]
      %v1977 = vld [vmem:[%s1962 + $0x70] sm:$0xff]
      %v1978 = vld [vmem:[%s1962 + $0x78] sm:$0xf]
      %v1979 = vld [vmem:[%s1962 + $0x80] sm:$0xff]
      %v1980 = vld [vmem:[%s1962 + $0x88] sm:$0xff]
      %v1981 = vld [vmem:[%s1962 + $0x90] sm:$0xff]
      %v1982 = vld [vmem:[%s1962 + $0x98] sm:$0xf]
      %v1983 = vld [vmem:[%s1962 + $0xa0] sm:$0xff]
      %v1984 = vld [vmem:[%s1962 + $0xa8] sm:$0xff]
      %v1985 = vld [vmem:[%s1962 + $0xb0] sm:$0xff]
      %v1986 = vld [vmem:[%s1962 + $0xb8] sm:$0xf]
      %v1987 = vld [vmem:[%s1962 + $0xc0] sm:$0xff]
      %v1988 = vld [vmem:[%s1962 + $0xc8] sm:$0xff]
      %v1989 = vld [vmem:[%s1962 + $0xd0] sm:$0xff]
      %v1990 = vld [vmem:[%s1962 + $0xd8] sm:$0xf]
      %v1991 = vld [vmem:[%s1 + $0x14] sm:$0x1]
      %v1992 = vlaneseq
      %v1993 = vshrl.u32 %v1992, 7
      %v1994 = vsub.s32 0, %v1993
      %v1995 = vrot.slane %v1991, %v1994
      %v1996 = vmul.f32 %v1963, %v1995
      %v1997 = vmul.f32 %v1964, %v1995
      %v1998 = vmul.f32 %v1965, %v1995
      %v1999 = vmul.f32 %v1966, %v1995
      %v2000 = vmul.f32 %v1967, %v1995
      %v2001 = vmul.f32 %v1968, %v1995
      %v2002 = vmul.f32 %v1969, %v1995
      %v2003 = vmul.f32 %v1970, %v1995
      %v2004 = vmul.f32 %v1971, %v1995
      %v2005 = vmul.f32 %v1972, %v1995
      %v2006 = vmul.f32 %v1973, %v1995
      %v2007 = vmul.f32 %v1974, %v1995
      %v2008 = vmul.f32 %v1975, %v1995
      %v2009 = vmul.f32 %v1976, %v1995
      %v2010 = vmul.f32 %v1977, %v1995
      %v2011 = vmul.f32 %v1978, %v1995
      %v2012 = vmul.f32 %v1979, %v1995
      %v2013 = vmul.f32 %v1980, %v1995
      %v2014 = vmul.f32 %v1981, %v1995
      %v2015 = vmul.f32 %v1982, %v1995
      %v2016 = vmul.f32 %v1983, %v1995
      %v2017 = vmul.f32 %v1984, %v1995
      %v2018 = vmul.f32 %v1985, %v1995
      %v2019 = vmul.f32 %v1986, %v1995
      %v2020 = vmul.f32 %v1987, %v1995
      %v2021 = vmul.f32 %v1988, %v1995
      %v2022 = vmul.f32 %v1989, %v1995
      %v2023 = vmul.f32 %v1990, %v1995
      %v2024 = vadd.f32 %v1932, %v1996
      %v2025 = vadd.f32 %v1933, %v1997
      %v2026 = vadd.f32 %v1934, %v1998
      %v2027 = vadd.f32 %v1935, %v1999
      %v2028 = vadd.f32 %v1936, %v2000
      %v2029 = vadd.f32 %v1937, %v2001
      %v2030 = vadd.f32 %v1938, %v2002
      %v2031 = vadd.f32 %v1939, %v2003
      %v2032 = vadd.f32 %v1940, %v2004
      %v2033 = vadd.f32 %v1941, %v2005
      %v2034 = vadd.f32 %v1942, %v2006
      %v2035 = vadd.f32 %v1943, %v2007
      %v2036 = vadd.f32 %v1944, %v2008
      %v2037 = vadd.f32 %v1945, %v2009
      %v2038 = vadd.f32 %v1946, %v2010
      %v2039 = vadd.f32 %v1947, %v2011
      %v2040 = vadd.f32 %v1948, %v2012
      %v2041 = vadd.f32 %v1949, %v2013
      %v2042 = vadd.f32 %v1950, %v2014
      %v2043 = vadd.f32 %v1951, %v2015
      %v2044 = vadd.f32 %v1952, %v2016
      %v2045 = vadd.f32 %v1953, %v2017
      %v2046 = vadd.f32 %v1954, %v2018
      %v2047 = vadd.f32 %v1955, %v2019
      %v2048 = vadd.f32 %v1956, %v2020
      %v2049 = vadd.f32 %v1957, %v2021
      %v2050 = vadd.f32 %v1958, %v2022
      %v2051 = vadd.f32 %v1959, %v2023
      %s2052 = scalar_lea.vmem %s257, %s1961
      %v2053 = vld [vmem:[%s2052] sm:$0xff]
      %v2054 = vld [vmem:[%s2052 + $0x8] sm:$0xff]
      %v2055 = vld [vmem:[%s2052 + $0x10] sm:$0xff]
      %v2056 = vld [vmem:[%s2052 + $0x18] sm:$0xf]
      %v2057 = vld [vmem:[%s2052 + $0x20] sm:$0xff]
      %v2058 = vld [vmem:[%s2052 + $0x28] sm:$0xff]
      %v2059 = vld [vmem:[%s2052 + $0x30] sm:$0xff]
      %v2060 = vld [vmem:[%s2052 + $0x38] sm:$0xf]
      %v2061 = vld [vmem:[%s2052 + $0x40] sm:$0xff]
      %v2062 = vld [vmem:[%s2052 + $0x48] sm:$0xff]
      %v2063 = vld [vmem:[%s2052 + $0x50] sm:$0xff]
      %v2064 = vld [vmem:[%s2052 + $0x58] sm:$0xf]
      %v2065 = vld [vmem:[%s2052 + $0x60] sm:$0xff]
      %v2066 = vld [vmem:[%s2052 + $0x68] sm:$0xff]
      %v2067 = vld [vmem:[%s2052 + $0x70] sm:$0xff]
      %v2068 = vld [vmem:[%s2052 + $0x78] sm:$0xf]
      %v2069 = vld [vmem:[%s2052 + $0x80] sm:$0xff]
      %v2070 = vld [vmem:[%s2052 + $0x88] sm:$0xff]
      %v2071 = vld [vmem:[%s2052 + $0x90] sm:$0xff]
      %v2072 = vld [vmem:[%s2052 + $0x98] sm:$0xf]
      %v2073 = vld [vmem:[%s2052 + $0xa0] sm:$0xff]
      %v2074 = vld [vmem:[%s2052 + $0xa8] sm:$0xff]
      %v2075 = vld [vmem:[%s2052 + $0xb0] sm:$0xff]
      %v2076 = vld [vmem:[%s2052 + $0xb8] sm:$0xf]
      %v2077 = vld [vmem:[%s2052 + $0xc0] sm:$0xff]
      %v2078 = vld [vmem:[%s2052 + $0xc8] sm:$0xff]
      %v2079 = vld [vmem:[%s2052 + $0xd0] sm:$0xff]
      %v2080 = vld [vmem:[%s2052 + $0xd8] sm:$0xf]
      %v2081 = vld [vmem:[%s1 + $0x15] sm:$0x1]
      %v2082 = vlaneseq
      %v2083 = vshrl.u32 %v2082, 7
      %v2084 = vsub.s32 0, %v2083
      %v2085 = vrot.slane %v2081, %v2084
      %v2086 = vmul.f32 %v2053, %v2085
      %v2087 = vmul.f32 %v2054, %v2085
      %v2088 = vmul.f32 %v2055, %v2085
      %v2089 = vmul.f32 %v2056, %v2085
      %v2090 = vmul.f32 %v2057, %v2085
      %v2091 = vmul.f32 %v2058, %v2085
      %v2092 = vmul.f32 %v2059, %v2085
      %v2093 = vmul.f32 %v2060, %v2085
      %v2094 = vmul.f32 %v2061, %v2085
      %v2095 = vmul.f32 %v2062, %v2085
      %v2096 = vmul.f32 %v2063, %v2085
      %v2097 = vmul.f32 %v2064, %v2085
      %v2098 = vmul.f32 %v2065, %v2085
      %v2099 = vmul.f32 %v2066, %v2085
      %v2100 = vmul.f32 %v2067, %v2085
      %v2101 = vmul.f32 %v2068, %v2085
      %v2102 = vmul.f32 %v2069, %v2085
      %v2103 = vmul.f32 %v2070, %v2085
      %v2104 = vmul.f32 %v2071, %v2085
      %v2105 = vmul.f32 %v2072, %v2085
      %v2106 = vmul.f32 %v2073, %v2085
      %v2107 = vmul.f32 %v2074, %v2085
      %v2108 = vmul.f32 %v2075, %v2085
      %v2109 = vmul.f32 %v2076, %v2085
      %v2110 = vmul.f32 %v2077, %v2085
      %v2111 = vmul.f32 %v2078, %v2085
      %v2112 = vmul.f32 %v2079, %v2085
      %v2113 = vmul.f32 %v2080, %v2085
      %v2114 = vadd.f32 %v2024, %v2086
      %v2115 = vadd.f32 %v2025, %v2087
      %v2116 = vadd.f32 %v2026, %v2088
      %v2117 = vadd.f32 %v2027, %v2089
      %v2118 = vadd.f32 %v2028, %v2090
      %v2119 = vadd.f32 %v2029, %v2091
      %v2120 = vadd.f32 %v2030, %v2092
      %v2121 = vadd.f32 %v2031, %v2093
      %v2122 = vadd.f32 %v2032, %v2094
      %v2123 = vadd.f32 %v2033, %v2095
      %v2124 = vadd.f32 %v2034, %v2096
      %v2125 = vadd.f32 %v2035, %v2097
      %v2126 = vadd.f32 %v2036, %v2098
      %v2127 = vadd.f32 %v2037, %v2099
      %v2128 = vadd.f32 %v2038, %v2100
      %v2129 = vadd.f32 %v2039, %v2101
      %v2130 = vadd.f32 %v2040, %v2102
      %v2131 = vadd.f32 %v2041, %v2103
      %v2132 = vadd.f32 %v2042, %v2104
      %v2133 = vadd.f32 %v2043, %v2105
      %v2134 = vadd.f32 %v2044, %v2106
      %v2135 = vadd.f32 %v2045, %v2107
      %v2136 = vadd.f32 %v2046, %v2108
      %v2137 = vadd.f32 %v2047, %v2109
      %v2138 = vadd.f32 %v2048, %v2110
      %v2139 = vadd.f32 %v2049, %v2111
      %v2140 = vadd.f32 %v2050, %v2112
      %v2141 = vadd.f32 %v2051, %v2113
      %v2142 = vld [vmem:[%s1962 + $0x1] sm:$0xff]
      %v2143 = vld [vmem:[%s1962 + $0x9] sm:$0xff]
      %v2144 = vld [vmem:[%s1962 + $0x11] sm:$0xff]
      %v2145 = vld [vmem:[%s1962 + $0x19] sm:$0xf]
      %v2146 = vld [vmem:[%s1962 + $0x21] sm:$0xff]
      %v2147 = vld [vmem:[%s1962 + $0x29] sm:$0xff]
      %v2148 = vld [vmem:[%s1962 + $0x31] sm:$0xff]
      %v2149 = vld [vmem:[%s1962 + $0x39] sm:$0xf]
      %v2150 = vld [vmem:[%s1962 + $0x41] sm:$0xff]
      %v2151 = vld [vmem:[%s1962 + $0x49] sm:$0xff]
      %v2152 = vld [vmem:[%s1962 + $0x51] sm:$0xff]
      %v2153 = vld [vmem:[%s1962 + $0x59] sm:$0xf]
      %v2154 = vld [vmem:[%s1962 + $0x61] sm:$0xff]
      %v2155 = vld [vmem:[%s1962 + $0x69] sm:$0xff]
      %v2156 = vld [vmem:[%s1962 + $0x71] sm:$0xff]
      %v2157 = vld [vmem:[%s1962 + $0x79] sm:$0xf]
      %v2158 = vld [vmem:[%s1962 + $0x81] sm:$0xff]
      %v2159 = vld [vmem:[%s1962 + $0x89] sm:$0xff]
      %v2160 = vld [vmem:[%s1962 + $0x91] sm:$0xff]
      %v2161 = vld [vmem:[%s1962 + $0x99] sm:$0xf]
      %v2162 = vld [vmem:[%s1962 + $0xa1] sm:$0xff]
      %v2163 = vld [vmem:[%s1962 + $0xa9] sm:$0xff]
      %v2164 = vld [vmem:[%s1962 + $0xb1] sm:$0xff]
      %v2165 = vld [vmem:[%s1962 + $0xb9] sm:$0xf]
      %v2166 = vld [vmem:[%s1962 + $0xc1] sm:$0xff]
      %v2167 = vld [vmem:[%s1962 + $0xc9] sm:$0xff]
      %v2168 = vld [vmem:[%s1962 + $0xd1] sm:$0xff]
      %v2169 = vld [vmem:[%s1962 + $0xd9] sm:$0xf]
      %v2170 = vld [vmem:[%s1 + $0x16] sm:$0x1]
      %v2171 = vlaneseq
      %v2172 = vshrl.u32 %v2171, 7
      %v2173 = vsub.s32 0, %v2172
      %v2174 = vrot.slane %v2170, %v2173
      %v2175 = vmul.f32 %v2142, %v2174
      %v2176 = vmul.f32 %v2143, %v2174
      %v2177 = vmul.f32 %v2144, %v2174
      %v2178 = vmul.f32 %v2145, %v2174
      %v2179 = vmul.f32 %v2146, %v2174
      %v2180 = vmul.f32 %v2147, %v2174
      %v2181 = vmul.f32 %v2148, %v2174
      %v2182 = vmul.f32 %v2149, %v2174
      %v2183 = vmul.f32 %v2150, %v2174
      %v2184 = vmul.f32 %v2151, %v2174
      %v2185 = vmul.f32 %v2152, %v2174
      %v2186 = vmul.f32 %v2153, %v2174
      %v2187 = vmul.f32 %v2154, %v2174
      %v2188 = vmul.f32 %v2155, %v2174
      %v2189 = vmul.f32 %v2156, %v2174
      %v2190 = vmul.f32 %v2157, %v2174
      %v2191 = vmul.f32 %v2158, %v2174
      %v2192 = vmul.f32 %v2159, %v2174
      %v2193 = vmul.f32 %v2160, %v2174
      %v2194 = vmul.f32 %v2161, %v2174
      %v2195 = vmul.f32 %v2162, %v2174
      %v2196 = vmul.f32 %v2163, %v2174
      %v2197 = vmul.f32 %v2164, %v2174
      %v2198 = vmul.f32 %v2165, %v2174
      %v2199 = vmul.f32 %v2166, %v2174
      %v2200 = vmul.f32 %v2167, %v2174
      %v2201 = vmul.f32 %v2168, %v2174
      %v2202 = vmul.f32 %v2169, %v2174
      %v2203 = vadd.f32 %v2114, %v2175
      %v2204 = vadd.f32 %v2115, %v2176
      %v2205 = vadd.f32 %v2116, %v2177
      %v2206 = vadd.f32 %v2117, %v2178
      %v2207 = vadd.f32 %v2118, %v2179
      %v2208 = vadd.f32 %v2119, %v2180
      %v2209 = vadd.f32 %v2120, %v2181
      %v2210 = vadd.f32 %v2121, %v2182
      %v2211 = vadd.f32 %v2122, %v2183
      %v2212 = vadd.f32 %v2123, %v2184
      %v2213 = vadd.f32 %v2124, %v2185
      %v2214 = vadd.f32 %v2125, %v2186
      %v2215 = vadd.f32 %v2126, %v2187
      %v2216 = vadd.f32 %v2127, %v2188
      %v2217 = vadd.f32 %v2128, %v2189
      %v2218 = vadd.f32 %v2129, %v2190
      %v2219 = vadd.f32 %v2130, %v2191
      %v2220 = vadd.f32 %v2131, %v2192
      %v2221 = vadd.f32 %v2132, %v2193
      %v2222 = vadd.f32 %v2133, %v2194
      %v2223 = vadd.f32 %v2134, %v2195
      %v2224 = vadd.f32 %v2135, %v2196
      %v2225 = vadd.f32 %v2136, %v2197
      %v2226 = vadd.f32 %v2137, %v2198
      %v2227 = vadd.f32 %v2138, %v2199
      %v2228 = vadd.f32 %v2139, %v2200
      %v2229 = vadd.f32 %v2140, %v2201
      %v2230 = vadd.f32 %v2141, %v2202
      %v2231 = vld [vmem:[%s2052 + $0x1] sm:$0xff]
      %v2232 = vld [vmem:[%s2052 + $0x9] sm:$0xff]
      %v2233 = vld [vmem:[%s2052 + $0x11] sm:$0xff]
      %v2234 = vld [vmem:[%s2052 + $0x19] sm:$0xf]
      %v2235 = vld [vmem:[%s2052 + $0x21] sm:$0xff]
      %v2236 = vld [vmem:[%s2052 + $0x29] sm:$0xff]
      %v2237 = vld [vmem:[%s2052 + $0x31] sm:$0xff]
      %v2238 = vld [vmem:[%s2052 + $0x39] sm:$0xf]
      %v2239 = vld [vmem:[%s2052 + $0x41] sm:$0xff]
      %v2240 = vld [vmem:[%s2052 + $0x49] sm:$0xff]
      %v2241 = vld [vmem:[%s2052 + $0x51] sm:$0xff]
      %v2242 = vld [vmem:[%s2052 + $0x59] sm:$0xf]
      %v2243 = vld [vmem:[%s2052 + $0x61] sm:$0xff]
      %v2244 = vld [vmem:[%s2052 + $0x69] sm:$0xff]
      %v2245 = vld [vmem:[%s2052 + $0x71] sm:$0xff]
      %v2246 = vld [vmem:[%s2052 + $0x79] sm:$0xf]
      %v2247 = vld [vmem:[%s2052 + $0x81] sm:$0xff]
      %v2248 = vld [vmem:[%s2052 + $0x89] sm:$0xff]
      %v2249 = vld [vmem:[%s2052 + $0x91] sm:$0xff]
      %v2250 = vld [vmem:[%s2052 + $0x99] sm:$0xf]
      %v2251 = vld [vmem:[%s2052 + $0xa1] sm:$0xff]
      %v2252 = vld [vmem:[%s2052 + $0xa9] sm:$0xff]
      %v2253 = vld [vmem:[%s2052 + $0xb1] sm:$0xff]
      %v2254 = vld [vmem:[%s2052 + $0xb9] sm:$0xf]
      %v2255 = vld [vmem:[%s2052 + $0xc1] sm:$0xff]
      %v2256 = vld [vmem:[%s2052 + $0xc9] sm:$0xff]
      %v2257 = vld [vmem:[%s2052 + $0xd1] sm:$0xff]
      %v2258 = vld [vmem:[%s2052 + $0xd9] sm:$0xf]
      %v2259 = vld [vmem:[%s1 + $0x17] sm:$0x1]
      %v2260 = vlaneseq
      %v2261 = vshrl.u32 %v2260, 7
      %v2262 = vsub.s32 0, %v2261
      %v2263 = vrot.slane %v2259, %v2262
      %v2264 = vmul.f32 %v2231, %v2263
      %v2265 = vmul.f32 %v2232, %v2263
      %v2266 = vmul.f32 %v2233, %v2263
      %v2267 = vmul.f32 %v2234, %v2263
      %v2268 = vmul.f32 %v2235, %v2263
      %v2269 = vmul.f32 %v2236, %v2263
      %v2270 = vmul.f32 %v2237, %v2263
      %v2271 = vmul.f32 %v2238, %v2263
      %v2272 = vmul.f32 %v2239, %v2263
      %v2273 = vmul.f32 %v2240, %v2263
      %v2274 = vmul.f32 %v2241, %v2263
      %v2275 = vmul.f32 %v2242, %v2263
      %v2276 = vmul.f32 %v2243, %v2263
      %v2277 = vmul.f32 %v2244, %v2263
      %v2278 = vmul.f32 %v2245, %v2263
      %v2279 = vmul.f32 %v2246, %v2263
      %v2280 = vmul.f32 %v2247, %v2263
      %v2281 = vmul.f32 %v2248, %v2263
      %v2282 = vmul.f32 %v2249, %v2263
      %v2283 = vmul.f32 %v2250, %v2263
      %v2284 = vmul.f32 %v2251, %v2263
      %v2285 = vmul.f32 %v2252, %v2263
      %v2286 = vmul.f32 %v2253, %v2263
      %v2287 = vmul.f32 %v2254, %v2263
      %v2288 = vmul.f32 %v2255, %v2263
      %v2289 = vmul.f32 %v2256, %v2263
      %v2290 = vmul.f32 %v2257, %v2263
      %v2291 = vmul.f32 %v2258, %v2263
      %v2292 = vadd.f32 %v2203, %v2264
      %v2293 = vadd.f32 %v2204, %v2265
      %v2294 = vadd.f32 %v2205, %v2266
      %v2295 = vadd.f32 %v2206, %v2267
      %v2296 = vadd.f32 %v2207, %v2268
      %v2297 = vadd.f32 %v2208, %v2269
      %v2298 = vadd.f32 %v2209, %v2270
      %v2299 = vadd.f32 %v2210, %v2271
      %v2300 = vadd.f32 %v2211, %v2272
      %v2301 = vadd.f32 %v2212, %v2273
      %v2302 = vadd.f32 %v2213, %v2274
      %v2303 = vadd.f32 %v2214, %v2275
      %v2304 = vadd.f32 %v2215, %v2276
      %v2305 = vadd.f32 %v2216, %v2277
      %v2306 = vadd.f32 %v2217, %v2278
      %v2307 = vadd.f32 %v2218, %v2279
      %v2308 = vadd.f32 %v2219, %v2280
      %v2309 = vadd.f32 %v2220, %v2281
      %v2310 = vadd.f32 %v2221, %v2282
      %v2311 = vadd.f32 %v2222, %v2283
      %v2312 = vadd.f32 %v2223, %v2284
      %v2313 = vadd.f32 %v2224, %v2285
      %v2314 = vadd.f32 %v2225, %v2286
      %v2315 = vadd.f32 %v2226, %v2287
      %v2316 = vadd.f32 %v2227, %v2288
      %v2317 = vadd.f32 %v2228, %v2289
      %v2318 = vadd.f32 %v2229, %v2290
      %v2319 = vadd.f32 %v2230, %v2291
      %v2320 = vld [vmem:[%s1962 + $0x2] sm:$0xff]
      %v2321 = vld [vmem:[%s1962 + $0xa] sm:$0xff]
      %v2322 = vld [vmem:[%s1962 + $0x12] sm:$0xff]
      %v2323 = vld [vmem:[%s1962 + $0x1a] sm:$0xf]
      %v2324 = vld [vmem:[%s1962 + $0x22] sm:$0xff]
      %v2325 = vld [vmem:[%s1962 + $0x2a] sm:$0xff]
      %v2326 = vld [vmem:[%s1962 + $0x32] sm:$0xff]
      %v2327 = vld [vmem:[%s1962 + $0x3a] sm:$0xf]
      %v2328 = vld [vmem:[%s1962 + $0x42] sm:$0xff]
      %v2329 = vld [vmem:[%s1962 + $0x4a] sm:$0xff]
      %v2330 = vld [vmem:[%s1962 + $0x52] sm:$0xff]
      %v2331 = vld [vmem:[%s1962 + $0x5a] sm:$0xf]
      %v2332 = vld [vmem:[%s1962 + $0x62] sm:$0xff]
      %v2333 = vld [vmem:[%s1962 + $0x6a] sm:$0xff]
      %v2334 = vld [vmem:[%s1962 + $0x72] sm:$0xff]
      %v2335 = vld [vmem:[%s1962 + $0x7a] sm:$0xf]
      %v2336 = vld [vmem:[%s1962 + $0x82] sm:$0xff]
      %v2337 = vld [vmem:[%s1962 + $0x8a] sm:$0xff]
      %v2338 = vld [vmem:[%s1962 + $0x92] sm:$0xff]
      %v2339 = vld [vmem:[%s1962 + $0x9a] sm:$0xf]
      %v2340 = vld [vmem:[%s1962 + $0xa2] sm:$0xff]
      %v2341 = vld [vmem:[%s1962 + $0xaa] sm:$0xff]
      %v2342 = vld [vmem:[%s1962 + $0xb2] sm:$0xff]
      %v2343 = vld [vmem:[%s1962 + $0xba] sm:$0xf]
      %v2344 = vld [vmem:[%s1962 + $0xc2] sm:$0xff]
      %v2345 = vld [vmem:[%s1962 + $0xca] sm:$0xff]
      %v2346 = vld [vmem:[%s1962 + $0xd2] sm:$0xff]
      %v2347 = vld [vmem:[%s1962 + $0xda] sm:$0xf]
      %v2348 = vld [vmem:[%s1 + $0x18] sm:$0x1]
      %v2349 = vlaneseq
      %v2350 = vshrl.u32 %v2349, 7
      %v2351 = vsub.s32 0, %v2350
      %v2352 = vrot.slane %v2348, %v2351
      %v2353 = vmul.f32 %v2320, %v2352
      %v2354 = vmul.f32 %v2321, %v2352
      %v2355 = vmul.f32 %v2322, %v2352
      %v2356 = vmul.f32 %v2323, %v2352
      %v2357 = vmul.f32 %v2324, %v2352
      %v2358 = vmul.f32 %v2325, %v2352
      %v2359 = vmul.f32 %v2326, %v2352
      %v2360 = vmul.f32 %v2327, %v2352
      %v2361 = vmul.f32 %v2328, %v2352
      %v2362 = vmul.f32 %v2329, %v2352
      %v2363 = vmul.f32 %v2330, %v2352
      %v2364 = vmul.f32 %v2331, %v2352
      %v2365 = vmul.f32 %v2332, %v2352
      %v2366 = vmul.f32 %v2333, %v2352
      %v2367 = vmul.f32 %v2334, %v2352
      %v2368 = vmul.f32 %v2335, %v2352
      %v2369 = vmul.f32 %v2336, %v2352
      %v2370 = vmul.f32 %v2337, %v2352
      %v2371 = vmul.f32 %v2338, %v2352
      %v2372 = vmul.f32 %v2339, %v2352
      %v2373 = vmul.f32 %v2340, %v2352
      %v2374 = vmul.f32 %v2341, %v2352
      %v2375 = vmul.f32 %v2342, %v2352
      %v2376 = vmul.f32 %v2343, %v2352
      %v2377 = vmul.f32 %v2344, %v2352
      %v2378 = vmul.f32 %v2345, %v2352
      %v2379 = vmul.f32 %v2346, %v2352
      %v2380 = vmul.f32 %v2347, %v2352
      %v2381 = vadd.f32 %v2292, %v2353
      %v2382 = vadd.f32 %v2293, %v2354
      %v2383 = vadd.f32 %v2294, %v2355
      %v2384 = vadd.f32 %v2295, %v2356
      %v2385 = vadd.f32 %v2296, %v2357
      %v2386 = vadd.f32 %v2297, %v2358
      %v2387 = vadd.f32 %v2298, %v2359
      %v2388 = vadd.f32 %v2299, %v2360
      %v2389 = vadd.f32 %v2300, %v2361
      %v2390 = vadd.f32 %v2301, %v2362
      %v2391 = vadd.f32 %v2302, %v2363
      %v2392 = vadd.f32 %v2303, %v2364
      %v2393 = vadd.f32 %v2304, %v2365
      %v2394 = vadd.f32 %v2305, %v2366
      %v2395 = vadd.f32 %v2306, %v2367
      %v2396 = vadd.f32 %v2307, %v2368
      %v2397 = vadd.f32 %v2308, %v2369
      %v2398 = vadd.f32 %v2309, %v2370
      %v2399 = vadd.f32 %v2310, %v2371
      %v2400 = vadd.f32 %v2311, %v2372
      %v2401 = vadd.f32 %v2312, %v2373
      %v2402 = vadd.f32 %v2313, %v2374
      %v2403 = vadd.f32 %v2314, %v2375
      %v2404 = vadd.f32 %v2315, %v2376
      %v2405 = vadd.f32 %v2316, %v2377
      %v2406 = vadd.f32 %v2317, %v2378
      %v2407 = vadd.f32 %v2318, %v2379
      %v2408 = vadd.f32 %v2319, %v2380
      %2409 = vst [vmem:[%s159] sm:$0xff] %v2381
      %2410 = vst [vmem:[%s159 + $0x8] sm:$0xff] %v2382
      %2411 = vst [vmem:[%s159 + $0x10] sm:$0xff] %v2383
      %2412 = vst [vmem:[%s159 + $0x18] sm:$0xf] %v2384
      %2413 = vst [vmem:[%s159 + $0x20] sm:$0xff] %v2385
      %2414 = vst [vmem:[%s159 + $0x28] sm:$0xff] %v2386
      %2415 = vst [vmem:[%s159 + $0x30] sm:$0xff] %v2387
      %2416 = vst [vmem:[%s159 + $0x38] sm:$0xf] %v2388
      %2417 = vst [vmem:[%s159 + $0x40] sm:$0xff] %v2389
      %2418 = vst [vmem:[%s159 + $0x48] sm:$0xff] %v2390
      %2419 = vst [vmem:[%s159 + $0x50] sm:$0xff] %v2391
      %2420 = vst [vmem:[%s159 + $0x58] sm:$0xf] %v2392
      %2421 = vst [vmem:[%s159 + $0x60] sm:$0xff] %v2393
      %2422 = vst [vmem:[%s159 + $0x68] sm:$0xff] %v2394
      %2423 = vst [vmem:[%s159 + $0x70] sm:$0xff] %v2395
      %2424 = vst [vmem:[%s159 + $0x78] sm:$0xf] %v2396
      %2425 = vst [vmem:[%s159 + $0x80] sm:$0xff] %v2397
      %2426 = vst [vmem:[%s159 + $0x88] sm:$0xff] %v2398
      %2427 = vst [vmem:[%s159 + $0x90] sm:$0xff] %v2399
      %2428 = vst [vmem:[%s159 + $0x98] sm:$0xf] %v2400
      %2429 = vst [vmem:[%s159 + $0xa0] sm:$0xff] %v2401
      %2430 = vst [vmem:[%s159 + $0xa8] sm:$0xff] %v2402
      %2431 = vst [vmem:[%s159 + $0xb0] sm:$0xff] %v2403
      %2432 = vst [vmem:[%s159 + $0xb8] sm:$0xf] %v2404
      %2433 = vst [vmem:[%s159 + $0xc0] sm:$0xff] %v2405
      %2434 = vst [vmem:[%s159 + $0xc8] sm:$0xff] %v2406
      %2435 = vst [vmem:[%s159 + $0xd0] sm:$0xff] %v2407
      %2436 = vst [vmem:[%s159 + $0xd8] sm:$0xf] %v2408
      %v2437 = vadd.f32 %v2381, %v2382
      %v2438 = vadd.f32 %v2437, %v2383
      %vm2439 = vcmask 1043456
      %v2440 = vsel %vm2439, %v2384, 0.0
      %v2441 = vadd.f32 %v2438, %v2440
      %v2442 = vadd.f32 %v2441, %v2385
      %v2443 = vadd.f32 %v2442, %v2386
      %v2444 = vadd.f32 %v2443, %v2387
      %v2445 = vsel %vm2439, %v2388, 0.0
      %v2446 = vadd.f32 %v2444, %v2445
      %v2447 = vadd.f32 %v2446, %v2389
      %v2448 = vadd.f32 %v2447, %v2390
      %v2449 = vadd.f32 %v2448, %v2391
      %v2450 = vsel %vm2439, %v2392, 0.0
      %v2451 = vadd.f32 %v2449, %v2450
      %v2452 = vadd.f32 %v2451, %v2393
      %v2453 = vadd.f32 %v2452, %v2394
      %v2454 = vadd.f32 %v2453, %v2395
      %v2455 = vsel %vm2439, %v2396, 0.0
      %v2456 = vadd.f32 %v2454, %v2455
      %v2457 = vadd.f32 %v2456, %v2397
      %v2458 = vadd.f32 %v2457, %v2398
      %v2459 = vadd.f32 %v2458, %v2399
      %v2460 = vsel %vm2439, %v2400, 0.0
      %v2461 = vadd.f32 %v2459, %v2460
      %v2462 = vadd.f32 %v2461, %v2401
      %v2463 = vadd.f32 %v2462, %v2402
      %v2464 = vadd.f32 %v2463, %v2403
      %v2465 = vsel %vm2439, %v2404, 0.0
      %v2466 = vadd.f32 %v2464, %v2465
      %v2467 = vadd.f32 %v2466, %v2405
      %v2468 = vadd.f32 %v2467, %v2406
      %v2469 = vadd.f32 %v2468, %v2407
      %v2470 = vsel %vm2439, %v2408, 0.0
      %v2471 = vadd.f32 %v2469, %v2470
      %v2472 = vrot.slane %v2471, 4
      %v2473 = vadd.f32 %v2471, %v2472
      %v2474 = vrot.slane %v2473, 2
      %v2475 = vadd.f32 %v2473, %v2474
      %v2476 = vrot.slane %v2475, 1
      %v2477 = vadd.f32 %v2475, %v2476
      %2478 = vst [vmem:[%s164] sm:$0x1] %v2477
      %v2479 = vmul.f32 %v2381, %v2381
      %v2480 = vmul.f32 %v2382, %v2382
      %v2481 = vmul.f32 %v2383, %v2383
      %v2482 = vmul.f32 %v2384, %v2384
      %v2483 = vmul.f32 %v2385, %v2385
      %v2484 = vmul.f32 %v2386, %v2386
      %v2485 = vmul.f32 %v2387, %v2387
      %v2486 = vmul.f32 %v2388, %v2388
      %v2487 = vmul.f32 %v2389, %v2389
      %v2488 = vmul.f32 %v2390, %v2390
      %v2489 = vmul.f32 %v2391, %v2391
      %v2490 = vmul.f32 %v2392, %v2392
      %v2491 = vmul.f32 %v2393, %v2393
      %v2492 = vmul.f32 %v2394, %v2394
      %v2493 = vmul.f32 %v2395, %v2395
      %v2494 = vmul.f32 %v2396, %v2396
      %v2495 = vmul.f32 %v2397, %v2397
      %v2496 = vmul.f32 %v2398, %v2398
      %v2497 = vmul.f32 %v2399, %v2399
      %v2498 = vmul.f32 %v2400, %v2400
      %v2499 = vmul.f32 %v2401, %v2401
      %v2500 = vmul.f32 %v2402, %v2402
      %v2501 = vmul.f32 %v2403, %v2403
      %v2502 = vmul.f32 %v2404, %v2404
      %v2503 = vmul.f32 %v2405, %v2405
      %v2504 = vmul.f32 %v2406, %v2406
      %v2505 = vmul.f32 %v2407, %v2407
      %v2506 = vmul.f32 %v2408, %v2408
      %v2507 = vadd.f32 %v2479, %v2480
      %v2508 = vadd.f32 %v2507, %v2481
      %v2509 = vsel %vm2439, %v2482, 0.0
      %v2510 = vadd.f32 %v2508, %v2509
      %v2511 = vadd.f32 %v2510, %v2483
      %v2512 = vadd.f32 %v2511, %v2484
      %v2513 = vadd.f32 %v2512, %v2485
      %v2514 = vsel %vm2439, %v2486, 0.0
      %v2515 = vadd.f32 %v2513, %v2514
      %v2516 = vadd.f32 %v2515, %v2487
      %v2517 = vadd.f32 %v2516, %v2488
      %v2518 = vadd.f32 %v2517, %v2489
      %v2519 = vsel %vm2439, %v2490, 0.0
      %v2520 = vadd.f32 %v2518, %v2519
      %v2521 = vadd.f32 %v2520, %v2491
      %v2522 = vadd.f32 %v2521, %v2492
      %v2523 = vadd.f32 %v2522, %v2493
      %v2524 = vsel %vm2439, %v2494, 0.0
      %v2525 = vadd.f32 %v2523, %v2524
      %v2526 = vadd.f32 %v2525, %v2495
      %v2527 = vadd.f32 %v2526, %v2496
      %v2528 = vadd.f32 %v2527, %v2497
      %v2529 = vsel %vm2439, %v2498, 0.0
      %v2530 = vadd.f32 %v2528, %v2529
      %v2531 = vadd.f32 %v2530, %v2499
      %v2532 = vadd.f32 %v2531, %v2500
      %v2533 = vadd.f32 %v2532, %v2501
      %v2534 = vsel %vm2439, %v2502, 0.0
      %v2535 = vadd.f32 %v2533, %v2534
      %v2536 = vadd.f32 %v2535, %v2503
      %v2537 = vadd.f32 %v2536, %v2504
      %v2538 = vadd.f32 %v2537, %v2505
      %v2539 = vsel %vm2439, %v2506, 0.0
      %v2540 = vadd.f32 %v2538, %v2539
      %v2541 = vrot.slane %v2540, 4
      %v2542 = vadd.f32 %v2540, %v2541
      %v2543 = vrot.slane %v2542, 2
      %v2544 = vadd.f32 %v2542, %v2543
      %v2545 = vrot.slane %v2544, 1
      %v2546 = vadd.f32 %v2544, %v2545
      %2547 = vst [vmem:[%s164 + $0x1] sm:$0x1] %v2546
      %s2548 = smul.u32 7, %s15
      %p2549 = scmp.lt.s32.totalorder %s2548, 27
      %s2550 = scalar_select %p2549, %s2548, 27
      %s2551 = smul.addr %s2550, 4
      %s2552 = smul.addr %s2551, 8
      %s2553 = scalar_lea.vmem %s2, %s2552
      %p2554 = scmp.lt.s32.totalorder %s15, 3
      %s2555 = scalar_select %p2554, %s15, 3
      %s2556 = smul.addr %s2555, 2
      %s2557 = scalar_lea.vmem %s3, %s2556
      // Predicated region
      $region29: #{forward.2} parent=27 // pred_check
        %p2558 = pneg %p75
      $region30: #{forward.2} parent=27 // pred_check_branch
        %2560 = sbr.rel (%p2558) target = $region32
      $region31: #{forward.2} parent=27 // pred_region
        %s2561 = smul.u32 7, %s15
      $region32: #{forward.2} parent=27 // pred_fallthru
        _
      // Predicated region
      $region33: #{forward.2} parent=27 // pred_check
        %p2562 = pneg %p101
      $region34: #{forward.2} parent=27 // pred_check_branch
        %2564 = sbr.rel (%p2562) target = $region36
      $region35: #{forward.2} parent=27 // pred_region
        _
      $region36: #{forward.2} parent=27 // pred_fallthru
        _
    $region28: #{forward.2} parent=5 // pred_fallthru
      _
    %p2565 = scmp.le.s32.totalorder 2, %s10
    // Predicated region
    $region37: #{forward.2} parent=5 // pred_check
      %p2566 = pneg %p2565
    $region38: #{forward.2} parent=5 // pred_check_branch
      %2568 = sbr.rel (%p2566) target = $region40
    $region39: #{forward.2} parent=5 // pred_region
      %s2569 = ssub.s32 %s10, 2
      // Predicated region
      $region41: #{forward.2} parent=39 // pred_check
        %p2570 = pneg %p81
      $region42: #{forward.2} parent=39 // pred_check_branch
        %2572 = sbr.rel (%p2570) target = $region44
      $region43: #{forward.2} parent=39 // pred_region
        %s2573 = smul.u32 7, %s16
        %p2574 = scmp.lt.s32.totalorder %s2573, 27
        %s2575 = scalar_select %p2574, %s2573, 27
        %s2576 = smul.addr %s2575, 4
        %s2577 = smul.addr %s2576, 8
        %s2578 = scalar_lea.vmem %s2, %s2577
      $region44: #{forward.2} parent=39 // pred_fallthru
        _
      // Predicated region
      $region45: #{forward.2} parent=39 // pred_check
        %p2579 = pneg %p107
      $region46: #{forward.2} parent=39 // pred_check_branch
        %2581 = sbr.rel (%p2579) target = $region48
      $region47: #{forward.2} parent=39 // pred_region
        %p2582 = scmp.lt.s32.totalorder %s16, 3
        %s2583 = scalar_select %p2582, %s16, 3
        %s2584 = smul.addr %s2583, 2
        %s2585 = scalar_lea.vmem %s3, %s2584
      $region48: #{forward.2} parent=39 // pred_fallthru
        _
    $region40: #{forward.2} parent=5 // pred_fallthru
      _
  $region6: #{forward.2} parent=0 // loop_footer
    %s14 = sadd.s32 1, %s10
  $region7: #{forward.2} parent=0 // loop_footer_branch
    %9 = sbr.rel target = $region3
  $region8: #{forward.2} parent=0 // loop_exit
    _

</llo_original>
